<compile_context>
chip_gen: v7x
topology: tpu7x:2x2x1
jax: 0.10.0
libtpu: 0.0.40
codegen_flags: <defaults>
</compile_context>

<pallas_src>
import math
import functools

import jax
import jax.numpy as jnp
from jax.experimental import pallas as pl
from jax.experimental.pallas import tpu as pltpu

# ---------------- model hyper-parameters (small, shape-consistent) ----------------
N_NODES = 16          # number of graph nodes
IN_X    = 54          # raw node-feature width  (nn.Linear(54, 256))
IN_SEQ  = 1024        # sequence-embedding width (nn.Linear(1024, 256))
PROJ    = 256         # lin1 / lin2 output width
NFEAT   = 2 * PROJ    # 512 = input width of fcs[0]
HIDDEN  = 128         # nhidden (lane-dense)
NCLASS  = 8
HEADS   = 2
NLAYERS = 2
LAMDA   = 0.5
ALPHA   = 0.1
LN_EPS  = 1e-5

VMEM = pl.BlockSpec(memory_space=pltpu.MemorySpace.VMEM)


# ---------------------------------------------------------------------------------
# The one fused kernel: input stage -> NLAYERS x (GCN_GAT + LayerNorm + ReLU) -> classifier
# ---------------------------------------------------------------------------------
def _deep_gcn_fused_kernel(x_ref, seq_ref, adj_ref,
                           w1_ref, b1_ref, w2_ref, b2_ref, wf_ref, bf_ref,
                           gat_w_ref, a1_ref, a2_ref,
                           wo_ref, a1o_ref, a2o_ref,
                           wg_ref, wl_ref, bl_ref,
                           g_ref, beta_ref,
                           wc_ref, bc_ref,
                           out_ref,
                           *, nlayers, heads, hdim, lamda, alpha):
    f32 = jnp.float32
    adj = adj_ref[...]                                              # (N, N)
    # additive mask bias computed ONCE, reused by every masked softmax
    mask_bias = jnp.where(adj > 0, 0.0, -9e15).astype(f32)

    def masked_softmax(e):
        # torch: softmax(where(adj > 0, e, -9e15), dim=1); e >= 0 so e - 9e15 == -9e15 in f32
        logits = e + mask_bias
        m = jnp.max(logits, axis=1, keepdims=True)
        p = jnp.exp(logits - m)
        denom = jnp.sum(p, axis=1, keepdims=True)
        return p * pl.reciprocal(denom, approx=True)

    def elu(v):
        # F.elu(alpha=1); clamp before exp so the unselected branch never overflows
        return jnp.where(v > 0, v, jnp.exp(jnp.minimum(v, 0.0)) - 1.0)

    # ---- input stage: relu(fcs[0](cat(lin1(x), lin2(seq)))), concat as half matmuls ----
    u1 = jnp.dot(x_ref[...], w1_ref[...], preferred_element_type=f32) + b1_ref[...]
    u2 = jnp.dot(seq_ref[...], w2_ref[...].astype(f32),
                 preferred_element_type=f32) + b2_ref[...]
    wf = wf_ref[...].astype(f32)                                    # (2*PROJ, H)
    h0 = jnp.maximum(
        jnp.dot(u1, wf[0:PROJ, :], preferred_element_type=f32)
        + jnp.dot(u2, wf[PROJ:2 * PROJ, :], preferred_element_type=f32)
        + bf_ref[...], 0.0)                                         # (N, H)

    h = h0
    for l in range(nlayers):                                        # statically unrolled
        theta = math.log(lamda / (l + 1) + 1.0)

        # ---- GAT heads: one batched Wh matmul, batched score projections ----
        wgat = gat_w_ref[l].astype(f32)                             # (H, H*heads)
        wh_all = jnp.dot(h, wgat, preferred_element_type=f32)       # (N, H*heads)
        # block-diagonal a1 / a2 packing -> all heads' scores in two matmuls
        wh1_all = jnp.dot(wh_all, a1_ref[l], preferred_element_type=f32)   # (N, heads)
        wh2_all = jax.lax.dot_general(a2_ref[l], wh_all,
                                      dimension_numbers=(((1,), (1,)), ((), ())),
                                      preferred_element_type=f32)          # (heads, N)

        wo = wo_ref[l].astype(f32)                                  # (H*heads, H)
        wh_o = jnp.zeros((h.shape[0], hdim), f32)                   # output-head projection acc
        for hd in range(heads):                                     # statically unrolled
            # "leakyrelu" is nn.ReLU() in this module
            e = jnp.maximum(wh1_all[:, hd:hd + 1] + wh2_all[hd:hd + 1, :], 0.0)
            att = masked_softmax(e)                                 # (N, N)
            hp = elu(jnp.dot(att, wh_all[:, hd * hdim:(hd + 1) * hdim],
                             preferred_element_type=f32))           # (N, H), stays in vregs
            # concat + output-head matmul fused as per-head half matmuls (no scratch)
            wh_o = wh_o + jnp.dot(hp, wo[hd * hdim:(hd + 1) * hdim, :],
                                  preferred_element_type=f32)

        # ---- output attention head (concat=False) + outer F.elu ----
        wh1_o = jnp.dot(wh_o, a1o_ref[l], preferred_element_type=f32)        # (N, 1)
        wh2_o = jax.lax.dot_general(a2o_ref[l], wh_o,
                                    dimension_numbers=(((1,), (1,)), ((), ())),
                                    preferred_element_type=f32)              # (1, N)
        e_o = jnp.maximum(wh1_o + wh2_o, 0.0)
        att_o = masked_softmax(e_o)
        x1 = elu(jnp.dot(att_o, wh_o, preferred_element_type=f32))           # (N, H)

        # ---- GCNII-style GraphConvolution (variant=False, residual=False) ----
        hi = jnp.dot(adj, h, preferred_element_type=f32)
        support = (1.0 - alpha) * hi + alpha * h0
        x2 = (theta * jnp.dot(support, wg_ref[l].astype(f32),
                              preferred_element_type=f32)
              + (1.0 - theta) * support)                                      # (N, H)

        # ---- cat((x1, x2), 1) @ Wlin^T + b (two half matmuls) + input residual ----
        wl = wl_ref[l].astype(f32)                                  # (2H, H)
        y = (jnp.dot(x1, wl[0:hdim, :], preferred_element_type=f32)
             + jnp.dot(x2, wl[hdim:2 * hdim, :], preferred_element_type=f32)
             + bl_ref[l])
        pre = h + y

        # ---- deepGCN loop body: shared LayerNorm(nhidden) + ReLU ----
        mu = jnp.mean(pre, axis=-1, keepdims=True)
        d = pre - mu
        var = jnp.mean(d * d, axis=-1, keepdims=True)
        ln = d * jax.lax.rsqrt(var + LN_EPS) * g_ref[...] + beta_ref[...]
        h = jnp.maximum(ln, 0.0)

    # ---- final classifier fcs[-1] ----
    out_ref[...] = jnp.dot(h, wc_ref[...], preferred_element_type=f32) + bc_ref[...]


# ---------------------------------------------------------------------------------
# wrapper: one pallas_call for the whole forward
# ---------------------------------------------------------------------------------
def deep_gcn_forward(params, x, adj, seq_emb):
    kernel = functools.partial(_deep_gcn_fused_kernel,
                               nlayers=NLAYERS, heads=HEADS, hdim=HIDDEN,
                               lamda=LAMDA, alpha=ALPHA)
    return pl.pallas_call(
        kernel,
        out_shape=jax.ShapeDtypeStruct((N_NODES, NCLASS), jnp.float32),
        in_specs=[VMEM] * 22,
        out_specs=VMEM,
    )(x, seq_emb, adj,
      params["lin1_Wt"], params["lin1_b"],
      params["lin2_Wt"], params["lin2_b"],
      params["fc0_Wt"], params["fc0_b"],
      params["gat_W"], params["gat_a1"], params["gat_a2"],
      params["gat_out_W"], params["gat_out_a1"], params["gat_out_a2"],
      params["gcn_W"], params["lin_Wt"], params["lin_b"],
      params["ln_gamma"], params["ln_beta"],
      params["fc1_Wt"], params["fc1_b"])


# ---------------------------------------------------------------------------------
# pure-JAX reference (same params, bf16 weights cast to f32) for correctness check
# ---------------------------------------------------------------------------------
def deep_gcn_reference(params, x, adj, seq_emb):
    f32 = jnp.float32
    u1 = x @ params["lin1_Wt"] + params["lin1_b"]
    u2 = seq_emb @ params["lin2_Wt"].astype(f32) + params["lin2_b"]
    cat = jnp.concatenate([u1, u2], axis=1)
    h0 = jax.nn.relu(cat @ params["fc0_Wt"].astype(f32) + params["fc0_b"])
    mask = adj > 0

    def softmax_masked(e):
        return jax.nn.softmax(jnp.where(mask, e, -9e15), axis=1)

    h = h0
    for l in range(NLAYERS):
        theta = math.log(LAMDA / (l + 1) + 1.0)
        wh_all = h @ params["gat_W"][l].astype(f32)
        heads_out = []
        for hd in range(HEADS):
            wh = wh_all[:, hd * HIDDEN:(hd + 1) * HIDDEN]
            a1 = params["gat_a1"][l][hd * HIDDEN:(hd + 1) * HIDDEN, hd:hd + 1]
            a2 = params["gat_a2"][l][hd:hd + 1, hd * HIDDEN:(hd + 1) * HIDDEN]
            e = jax.nn.relu(wh @ a1 + (wh @ a2.T).T)
            heads_out.append(jax.nn.elu(softmax_masked(e) @ wh))
        xh = jnp.concatenate(heads_out, axis=1)
        wh_o = xh @ params["gat_out_W"][l].astype(f32)
        e_o = jax.nn.relu(wh_o @ params["gat_out_a1"][l]
                          + (wh_o @ params["gat_out_a2"][l].T).T)
        x1 = jax.nn.elu(softmax_masked(e_o) @ wh_o)
        hi = adj @ h
        support = (1.0 - ALPHA) * hi + ALPHA * h0
        x2 = theta * (support @ params["gcn_W"][l].astype(f32)) + (1.0 - theta) * support
        y = (jnp.concatenate([x1, x2], axis=1) @ params["lin_Wt"][l].astype(f32)
             + params["lin_b"][l])
        pre = h + y
        mu = pre.mean(-1, keepdims=True)
        var = ((pre - mu) ** 2).mean(-1, keepdims=True)
        ln = (pre - mu) * jax.lax.rsqrt(var + LN_EPS) * params["ln_gamma"] + params["ln_beta"]
        h = jax.nn.relu(ln)
    return h @ params["fc1_Wt"] + params["fc1_b"]


# ---------------------------------------------------------------------------------
# parameter construction (same distributions as the torch module inits)
# ---------------------------------------------------------------------------------
def init_params(key):
    keys = iter(jax.random.split(key, 40))

    def unif(shape, bound):
        return jax.random.uniform(next(keys), shape, jnp.float32, -bound, bound)

    def xavier(shape, gain=1.414):
        bound = gain * math.sqrt(6.0 / (shape[0] + shape[1]))
        return jax.random.uniform(next(keys), shape, jnp.float32, -bound, bound)

    bf16 = jnp.bfloat16
    p = {}
    # lin1 = Linear(54, 256): stored transposed, f32 (tiny)
    b1 = 1.0 / math.sqrt(IN_X)
    p["lin1_Wt"] = unif((IN_X, PROJ), b1)
    p["lin1_b"] = unif((1, PROJ), b1)
    # lin2 = Linear(1024, 256): dominant weight -> bf16
    b2 = 1.0 / math.sqrt(IN_SEQ)
    p["lin2_Wt"] = unif((IN_SEQ, PROJ), b2).astype(bf16)
    p["lin2_b"] = unif((1, PROJ), b2)
    # fcs[0] = Linear(512, HIDDEN) -> bf16 weight
    bf = 1.0 / math.sqrt(NFEAT)
    p["fc0_Wt"] = unif((NFEAT, HIDDEN), bf).astype(bf16)
    p["fc0_b"] = unif((1, HIDDEN), bf)
    # fcs[-1] = Linear(HIDDEN, NCLASS) (tiny, f32)
    bc = 1.0 / math.sqrt(HIDDEN)
    p["fc1_Wt"] = unif((HIDDEN, NCLASS), bc)
    p["fc1_b"] = unif((1, NCLASS), bc)
    # single shared LayerNorm(nhidden) (matches torch deepGCN.self.ln)
    p["ln_gamma"] = jnp.ones((1, HIDDEN), jnp.float32)
    p["ln_beta"] = jnp.zeros((1, HIDDEN), jnp.float32)

    gat_W, gat_a1, gat_a2 = [], [], []
    gat_out_W, gat_out_a1, gat_out_a2 = [], [], []
    gcn_W, lin_Wt, lin_b = [], [], []
    for _ in range(NLAYERS):
        w_heads = []
        a1_bd = jnp.zeros((HIDDEN * HEADS, HEADS), jnp.float32)      # block-diag a1 columns
        a2_bd = jnp.zeros((HEADS, HIDDEN * HEADS), jnp.float32)      # block-diag a2 rows
        for h in range(HEADS):
            w_heads.append(xavier((HIDDEN, HIDDEN)))
            a = xavier((2 * HIDDEN, 1))                              # torch a: (2*out, 1)
            a1_bd = a1_bd.at[h * HIDDEN:(h + 1) * HIDDEN, h:h + 1].set(a[:HIDDEN, :])
            a2_bd = a2_bd.at[h:h + 1, h * HIDDEN:(h + 1) * HIDDEN].set(a[HIDDEN:, :].T)
        gat_W.append(jnp.concatenate(w_heads, axis=1))               # (H, H*heads)
        gat_a1.append(a1_bd)
        gat_a2.append(a2_bd)
        # output attention head: in = H*heads, out = H
        gat_out_W.append(xavier((HIDDEN * HEADS, HIDDEN)))
        a_o = xavier((2 * HIDDEN, 1))
        gat_out_a1.append(a_o[:HIDDEN, :])                           # (H, 1)
        gat_out_a2.append(a_o[HIDDEN:, :].T)                         # (1, H)
        # GraphConvolution weight: uniform(-1/sqrt(out), 1/sqrt(out))
        stdv = 1.0 / math.sqrt(HIDDEN)
        gcn_W.append(unif((HIDDEN, HIDDEN), stdv))
        # cat_lin = Linear(2*HIDDEN, HIDDEN): stored transposed
        bl = 1.0 / math.sqrt(2 * HIDDEN)
        lin_Wt.append(unif((2 * HIDDEN, HIDDEN), bl))
        lin_b.append(unif((1, HIDDEN), bl))

    # stack per-layer params on a leading axis (statically indexed inside the kernel)
    p["gat_W"] = jnp.stack(gat_W).astype(bf16)           # (L, H, H*heads)
    p["gat_a1"] = jnp.stack(gat_a1)                      # (L, H*heads, heads)
    p["gat_a2"] = jnp.stack(gat_a2)                      # (L, heads, H*heads)
    p["gat_out_W"] = jnp.stack(gat_out_W).astype(bf16)   # (L, H*heads, H)
    p["gat_out_a1"] = jnp.stack(gat_out_a1)              # (L, H, 1)
    p["gat_out_a2"] = jnp.stack(gat_out_a2)              # (L, 1, H)
    p["gcn_W"] = jnp.stack(gcn_W).astype(bf16)           # (L, H, H)
    p["lin_Wt"] = jnp.stack(lin_Wt).astype(bf16)         # (L, 2H, H)
    p["lin_b"] = jnp.stack(lin_b)                        # (L, 1, H)
    return p


if __name__ == "__main__":
    key = jax.random.PRNGKey(0)
    kp, kx, ks, ka = jax.random.split(key, 4)

    params = init_params(kp)
    x = jax.random.normal(kx, (N_NODES, IN_X), jnp.float32)
    seq_emb = jax.random.normal(ks, (N_NODES, IN_SEQ), jnp.float32)
    adj = (jax.random.uniform(ka, (N_NODES, N_NODES), jnp.float32) > 0.5).astype(jnp.float32)
    adj = jnp.minimum(adj + jnp.eye(N_NODES, dtype=jnp.float32), 1.0)   # self-loops

    fwd = jax.jit(deep_gcn_forward)
    out = fwd(params, x, adj, seq_emb)
    jax.block_until_ready(out)

    assert out.shape == (N_NODES, NCLASS) and out.dtype == jnp.float32
    assert bool(jnp.all(jnp.isfinite(out)))

    # correctness vs pure-JAX reference (approx reciprocal -> loose-ish tolerance)
    ref = jax.jit(deep_gcn_reference)(params, x, adj, seq_emb)
    jax.block_until_ready(ref)
    assert bool(jnp.all(jnp.abs(out - ref) < 1e-2)), float(jnp.max(jnp.abs(out - ref)))

    print("KERNEL_OK")
</pallas_src>

<mosaic_0001>
module attributes {stable_mosaic.version = 11 : i64} {
  func.func @_deep_gcn_fused_kernel(%arg0: memref<16x54xf32, #tpu.memory_space<vmem>>, %arg1: memref<16x1024xf32, #tpu.memory_space<vmem>>, %arg2: memref<16x16xf32, #tpu.memory_space<vmem>>, %arg3: memref<54x256xf32, #tpu.memory_space<vmem>>, %arg4: memref<1x256xf32, #tpu.memory_space<vmem>>, %arg5: memref<1024x256xbf16, #tpu.memory_space<vmem>>, %arg6: memref<1x256xf32, #tpu.memory_space<vmem>>, %arg7: memref<512x128xbf16, #tpu.memory_space<vmem>>, %arg8: memref<1x128xf32, #tpu.memory_space<vmem>>, %arg9: memref<2x128x256xbf16, #tpu.memory_space<vmem>>, %arg10: memref<2x256x2xf32, #tpu.memory_space<vmem>>, %arg11: memref<2x2x256xf32, #tpu.memory_space<vmem>>, %arg12: memref<2x256x128xbf16, #tpu.memory_space<vmem>>, %arg13: memref<2x128x1xf32, #tpu.memory_space<vmem>>, %arg14: memref<2x1x128xf32, #tpu.memory_space<vmem>>, %arg15: memref<2x128x128xbf16, #tpu.memory_space<vmem>>, %arg16: memref<2x256x128xbf16, #tpu.memory_space<vmem>>, %arg17: memref<2x1x128xf32, #tpu.memory_space<vmem>>, %arg18: memref<1x128xf32, #tpu.memory_space<vmem>>, %arg19: memref<1x128xf32, #tpu.memory_space<vmem>>, %arg20: memref<128x8xf32, #tpu.memory_space<vmem>>, %arg21: memref<1x8xf32, #tpu.memory_space<vmem>>, %arg22: memref<16x8xf32, #tpu.memory_space<vmem>>) attributes {dimension_semantics = [], scalar_prefetch = 0 : i64, scratch_operands = 0 : i64, tpu.core_type = #tpu.core_type<tc>} {
    %c0 = arith.constant 0 : index
    %c0_0 = arith.constant 0 : index
    %0 = vector.load %arg2[%c0, %c0_0] : memref<16x16xf32, #tpu.memory_space<vmem>>, vector<16x16xf32>
    %cst = arith.constant 0.000000e+00 : f32
    %1 = vector.broadcast %cst : f32 to vector<16x16xf32>
    %2 = arith.cmpf ogt, %0, %1 : vector<16x16xf32>
    %cst_1 = arith.constant 0.000000e+00 : f32
    %cst_2 = arith.constant -9.000000e+15 : f32
    %3 = vector.broadcast %cst_1 : f32 to vector<16x16xf32>
    %4 = vector.broadcast %cst_2 : f32 to vector<16x16xf32>
    %5 = arith.select %2, %3, %4 : vector<16x16xi1>, vector<16x16xf32>
    %c0_3 = arith.constant 0 : index
    %c0_4 = arith.constant 0 : index
    %6 = vector.load %arg0[%c0_3, %c0_4] : memref<16x54xf32, #tpu.memory_space<vmem>>, vector<16x54xf32>
    %c0_5 = arith.constant 0 : index
    %c0_6 = arith.constant 0 : index
    %7 = vector.load %arg3[%c0_5, %c0_6] : memref<54x256xf32, #tpu.memory_space<vmem>>, vector<54x256xf32>
    %cst_7 = arith.constant dense<0.000000e+00> : vector<16x256xf32>
    %8 = tpu.matmul %6, %7, %cst_7 {dimension_numbers = #tpu.dot_dimension_numbers<[1], [0], [0], [1], [0, 0, 1, 1], [], []>} : vector<16x54xf32>, vector<54x256xf32>, vector<16x256xf32> -> vector<16x256xf32>
    %c0_8 = arith.constant 0 : index
    %c0_9 = arith.constant 0 : index
    %9 = vector.load %arg4[%c0_8, %c0_9] : memref<1x256xf32, #tpu.memory_space<vmem>>, vector<1x256xf32>
    %10 = vector.broadcast %9 : vector<1x256xf32> to vector<16x256xf32>
    %11 = arith.addf %8, %10 : vector<16x256xf32>
    %c0_10 = arith.constant 0 : index
    %c0_11 = arith.constant 0 : index
    %12 = vector.load %arg1[%c0_10, %c0_11] : memref<16x1024xf32, #tpu.memory_space<vmem>>, vector<16x1024xf32>
    %c0_12 = arith.constant 0 : index
    %c0_13 = arith.constant 0 : index
    %13 = vector.load %arg5[%c0_12, %c0_13] : memref<1024x256xbf16, #tpu.memory_space<vmem>>, vector<1024x256xbf16>
    %14 = arith.extf %13 : vector<1024x256xbf16> to vector<1024x256xf32>
    %cst_14 = arith.constant dense<0.000000e+00> : vector<16x256xf32>
    %15 = tpu.matmul %12, %14, %cst_14 {dimension_numbers = #tpu.dot_dimension_numbers<[1], [0], [0], [1], [0, 0, 1, 1], [], []>} : vector<16x1024xf32>, vector<1024x256xf32>, vector<16x256xf32> -> vector<16x256xf32>
    %c0_15 = arith.constant 0 : index
    %c0_16 = arith.constant 0 : index
    %16 = vector.load %arg6[%c0_15, %c0_16] : memref<1x256xf32, #tpu.memory_space<vmem>>, vector<1x256xf32>
    %17 = vector.broadcast %16 : vector<1x256xf32> to vector<16x256xf32>
    %18 = arith.addf %15, %17 : vector<16x256xf32>
    %c0_17 = arith.constant 0 : index
    %c0_18 = arith.constant 0 : index
    %19 = vector.load %arg7[%c0_17, %c0_18] : memref<512x128xbf16, #tpu.memory_space<vmem>>, vector<512x128xbf16>
    %20 = arith.extf %19 : vector<512x128xbf16> to vector<512x128xf32>
    %21 = vector.extract_strided_slice %20 {offsets = [0, 0], sizes = [256, 128], strides = [1, 1]} : vector<512x128xf32> to vector<256x128xf32>
    %cst_19 = arith.constant dense<0.000000e+00> : vector<16x128xf32>
    %22 = tpu.matmul %11, %21, %cst_19 {dimension_numbers = #tpu.dot_dimension_numbers<[1], [0], [0], [1], [0, 0, 1, 1], [], []>} : vector<16x256xf32>, vector<256x128xf32>, vector<16x128xf32> -> vector<16x128xf32>
    %23 = vector.extract_strided_slice %20 {offsets = [256, 0], sizes = [256, 128], strides = [1, 1]} : vector<512x128xf32> to vector<256x128xf32>
    %cst_20 = arith.constant dense<0.000000e+00> : vector<16x128xf32>
    %24 = tpu.matmul %18, %23, %cst_20 {dimension_numbers = #tpu.dot_dimension_numbers<[1], [0], [0], [1], [0, 0, 1, 1], [], []>} : vector<16x256xf32>, vector<256x128xf32>, vector<16x128xf32> -> vector<16x128xf32>
    %25 = arith.addf %22, %24 : vector<16x128xf32>
    %c0_21 = arith.constant 0 : index
    %c0_22 = arith.constant 0 : index
    %26 = vector.load %arg8[%c0_21, %c0_22] : memref<1x128xf32, #tpu.memory_space<vmem>>, vector<1x128xf32>
    %27 = vector.broadcast %26 : vector<1x128xf32> to vector<16x128xf32>
    %28 = arith.addf %25, %27 : vector<16x128xf32>
    %cst_23 = arith.constant 0.000000e+00 : f32
    %29 = vector.broadcast %cst_23 : f32 to vector<16x128xf32>
    %30 = arith.maximumf %28, %29 : vector<16x128xf32>
    %c0_24 = arith.constant 0 : index
    %c0_25 = arith.constant 0 : index
    %c0_26 = arith.constant 0 : index
    %31 = vector.load %arg9[%c0_24, %c0_25, %c0_26] : memref<2x128x256xbf16, #tpu.memory_space<vmem>>, vector<1x128x256xbf16>
    %32 = vector.shape_cast %31 : vector<1x128x256xbf16> to vector<128x256xbf16>
    %33 = arith.extf %32 : vector<128x256xbf16> to vector<128x256xf32>
    %cst_27 = arith.constant dense<0.000000e+00> : vector<16x256xf32>
    %34 = tpu.matmul %30, %33, %cst_27 {dimension_numbers = #tpu.dot_dimension_numbers<[1], [0], [0], [1], [0, 0, 1, 1], [], []>} : vector<16x128xf32>, vector<128x256xf32>, vector<16x256xf32> -> vector<16x256xf32>
    %c0_28 = arith.constant 0 : index
    %c0_29 = arith.constant 0 : index
    %c0_30 = arith.constant 0 : index
    %35 = vector.load %arg10[%c0_28, %c0_29, %c0_30] : memref<2x256x2xf32, #tpu.memory_space<vmem>>, vector<1x256x2xf32>
    %36 = vector.shape_cast %35 : vector<1x256x2xf32> to vector<256x2xf32>
    %cst_31 = arith.constant dense<0.000000e+00> : vector<16x2xf32>
    %37 = tpu.matmul %34, %36, %cst_31 {dimension_numbers = #tpu.dot_dimension_numbers<[1], [0], [0], [1], [0, 0, 1, 1], [], []>} : vector<16x256xf32>, vector<256x2xf32>, vector<16x2xf32> -> vector<16x2xf32>
    %c0_32 = arith.constant 0 : index
    %c0_33 = arith.constant 0 : index
    %c0_34 = arith.constant 0 : index
    %38 = vector.load %arg11[%c0_32, %c0_33, %c0_34] : memref<2x2x256xf32, #tpu.memory_space<vmem>>, vector<1x2x256xf32>
    %39 = vector.shape_cast %38 : vector<1x2x256xf32> to vector<2x256xf32>
    %cst_35 = arith.constant dense<0.000000e+00> : vector<2x16xf32>
    %40 = tpu.matmul %39, %34, %cst_35 {dimension_numbers = #tpu.dot_dimension_numbers<[1], [1], [0], [0], [0, 0, 1, 0], [], []>} : vector<2x256xf32>, vector<16x256xf32>, vector<2x16xf32> -> vector<2x16xf32>
    %c0_36 = arith.constant 0 : index
    %c0_37 = arith.constant 0 : index
    %c0_38 = arith.constant 0 : index
    %41 = vector.load %arg12[%c0_36, %c0_37, %c0_38] : memref<2x256x128xbf16, #tpu.memory_space<vmem>>, vector<1x256x128xbf16>
    %42 = vector.shape_cast %41 : vector<1x256x128xbf16> to vector<256x128xbf16>
    %43 = arith.extf %42 : vector<256x128xbf16> to vector<256x128xf32>
    %cst_39 = arith.constant 0.000000e+00 : f32
    %44 = vector.broadcast %cst_39 : f32 to vector<16x128xf32>
    %45 = vector.extract_strided_slice %37 {offsets = [0, 0], sizes = [16, 1], strides = [1, 1]} : vector<16x2xf32> to vector<16x1xf32>
    %46 = vector.extract_strided_slice %40 {offsets = [0, 0], sizes = [1, 16], strides = [1, 1]} : vector<2x16xf32> to vector<1x16xf32>
    %47 = vector.broadcast %45 : vector<16x1xf32> to vector<16x16xf32>
    %48 = vector.broadcast %46 : vector<1x16xf32> to vector<16x16xf32>
    %49 = arith.addf %47, %48 : vector<16x16xf32>
    %cst_40 = arith.constant 0.000000e+00 : f32
    %50 = vector.broadcast %cst_40 : f32 to vector<16x16xf32>
    %51 = arith.maximumf %49, %50 : vector<16x16xf32>
    %52 = arith.addf %51, %5 : vector<16x16xf32>
    %cst_41 = arith.constant dense<0xFF800000> : vector<16xf32>
    %53 = vector.multi_reduction <maximumf>, %52, %cst_41 [1] : vector<16x16xf32> to vector<16xf32>
    %54 = vector.shape_cast %53 : vector<16xf32> to vector<16x1xf32>
    %55 = vector.broadcast %54 : vector<16x1xf32> to vector<16x16xf32>
    %56 = arith.subf %52, %55 : vector<16x16xf32>
    %57 = math.exp %56 : vector<16x16xf32>
    %cst_42 = arith.constant dense<0.000000e+00> : vector<16xf32>
    %58 = vector.multi_reduction <add>, %57, %cst_42 [1] : vector<16x16xf32> to vector<16xf32>
    %59 = vector.shape_cast %58 : vector<16xf32> to vector<16x1xf32>
    %60 = tpu.reciprocal %59 {approx = true} : vector<16x1xf32> -> vector<16x1xf32>
    %61 = vector.broadcast %60 : vector<16x1xf32> to vector<16x16xf32>
    %62 = arith.mulf %57, %61 : vector<16x16xf32>
    %63 = vector.extract_strided_slice %34 {offsets = [0, 0], sizes = [16, 128], strides = [1, 1]} : vector<16x256xf32> to vector<16x128xf32>
    %cst_43 = arith.constant dense<0.000000e+00> : vector<16x128xf32>
    %64 = tpu.matmul %62, %63, %cst_43 {dimension_numbers = #tpu.dot_dimension_numbers<[1], [0], [0], [1], [0, 0, 1, 1], [], []>} : vector<16x16xf32>, vector<16x128xf32>, vector<16x128xf32> -> vector<16x128xf32>
    %cst_44 = arith.constant 0.000000e+00 : f32
    %65 = vector.broadcast %cst_44 : f32 to vector<16x128xf32>
    %66 = arith.cmpf ogt, %64, %65 : vector<16x128xf32>
    %cst_45 = arith.constant 0.000000e+00 : f32
    %67 = vector.broadcast %cst_45 : f32 to vector<16x128xf32>
    %68 = arith.minimumf %64, %67 : vector<16x128xf32>
    %69 = math.exp %68 : vector<16x128xf32>
    %cst_46 = arith.constant 1.000000e+00 : f32
    %70 = vector.broadcast %cst_46 : f32 to vector<16x128xf32>
    %71 = arith.subf %69, %70 : vector<16x128xf32>
    %72 = arith.select %66, %64, %71 : vector<16x128xi1>, vector<16x128xf32>
    %73 = vector.extract_strided_slice %43 {offsets = [0, 0], sizes = [128, 128], strides = [1, 1]} : vector<256x128xf32> to vector<128x128xf32>
    %cst_47 = arith.constant dense<0.000000e+00> : vector<16x128xf32>
    %74 = tpu.matmul %72, %73, %cst_47 {dimension_numbers = #tpu.dot_dimension_numbers<[1], [0], [0], [1], [0, 0, 1, 1], [], []>} : vector<16x128xf32>, vector<128x128xf32>, vector<16x128xf32> -> vector<16x128xf32>
    %75 = arith.addf %44, %74 : vector<16x128xf32>
    %76 = vector.extract_strided_slice %37 {offsets = [0, 1], sizes = [16, 1], strides = [1, 1]} : vector<16x2xf32> to vector<16x1xf32>
    %77 = vector.extract_strided_slice %40 {offsets = [1, 0], sizes = [1, 16], strides = [1, 1]} : vector<2x16xf32> to vector<1x16xf32>
    %78 = vector.broadcast %76 : vector<16x1xf32> to vector<16x16xf32>
    %79 = vector.broadcast %77 : vector<1x16xf32> to vector<16x16xf32>
    %80 = arith.addf %78, %79 : vector<16x16xf32>
    %cst_48 = arith.constant 0.000000e+00 : f32
    %81 = vector.broadcast %cst_48 : f32 to vector<16x16xf32>
    %82 = arith.maximumf %80, %81 : vector<16x16xf32>
    %83 = arith.addf %82, %5 : vector<16x16xf32>
    %cst_49 = arith.constant dense<0xFF800000> : vector<16xf32>
    %84 = vector.multi_reduction <maximumf>, %83, %cst_49 [1] : vector<16x16xf32> to vector<16xf32>
    %85 = vector.shape_cast %84 : vector<16xf32> to vector<16x1xf32>
    %86 = vector.broadcast %85 : vector<16x1xf32> to vector<16x16xf32>
    %87 = arith.subf %83, %86 : vector<16x16xf32>
    %88 = math.exp %87 : vector<16x16xf32>
    %cst_50 = arith.constant dense<0.000000e+00> : vector<16xf32>
    %89 = vector.multi_reduction <add>, %88, %cst_50 [1] : vector<16x16xf32> to vector<16xf32>
    %90 = vector.shape_cast %89 : vector<16xf32> to vector<16x1xf32>
    %91 = tpu.reciprocal %90 {approx = true} : vector<16x1xf32> -> vector<16x1xf32>
    %92 = vector.broadcast %91 : vector<16x1xf32> to vector<16x16xf32>
    %93 = arith.mulf %88, %92 : vector<16x16xf32>
    %94 = vector.extract_strided_slice %34 {offsets = [0, 128], sizes = [16, 128], strides = [1, 1]} : vector<16x256xf32> to vector<16x128xf32>
    %cst_51 = arith.constant dense<0.000000e+00> : vector<16x128xf32>
    %95 = tpu.matmul %93, %94, %cst_51 {dimension_numbers = #tpu.dot_dimension_numbers<[1], [0], [0], [1], [0, 0, 1, 1], [], []>} : vector<16x16xf32>, vector<16x128xf32>, vector<16x128xf32> -> vector<16x128xf32>
    %cst_52 = arith.constant 0.000000e+00 : f32
    %96 = vector.broadcast %cst_52 : f32 to vector<16x128xf32>
    %97 = arith.cmpf ogt, %95, %96 : vector<16x128xf32>
    %cst_53 = arith.constant 0.000000e+00 : f32
    %98 = vector.broadcast %cst_53 : f32 to vector<16x128xf32>
    %99 = arith.minimumf %95, %98 : vector<16x128xf32>
    %100 = math.exp %99 : vector<16x128xf32>
    %cst_54 = arith.constant 1.000000e+00 : f32
    %101 = vector.broadcast %cst_54 : f32 to vector<16x128xf32>
    %102 = arith.subf %100, %101 : vector<16x128xf32>
    %103 = arith.select %97, %95, %102 : vector<16x128xi1>, vector<16x128xf32>
    %104 = vector.extract_strided_slice %43 {offsets = [128, 0], sizes = [128, 128], strides = [1, 1]} : vector<256x128xf32> to vector<128x128xf32>
    %cst_55 = arith.constant dense<0.000000e+00> : vector<16x128xf32>
    %105 = tpu.matmul %103, %104, %cst_55 {dimension_numbers = #tpu.dot_dimension_numbers<[1], [0], [0], [1], [0, 0, 1, 1], [], []>} : vector<16x128xf32>, vector<128x128xf32>, vector<16x128xf32> -> vector<16x128xf32>
    %106 = arith.addf %75, %105 : vector<16x128xf32>
    %c0_56 = arith.constant 0 : index
    %c0_57 = arith.constant 0 : index
    %c0_58 = arith.constant 0 : index
    %107 = vector.load %arg13[%c0_56, %c0_57, %c0_58] : memref<2x128x1xf32, #tpu.memory_space<vmem>>, vector<1x128x1xf32>
    %108 = vector.shape_cast %107 : vector<1x128x1xf32> to vector<128x1xf32>
    %cst_59 = arith.constant dense<0.000000e+00> : vector<16x1xf32>
    %109 = tpu.matmul %106, %108, %cst_59 {dimension_numbers = #tpu.dot_dimension_numbers<[1], [0], [0], [1], [0, 0, 1, 1], [], []>} : vector<16x128xf32>, vector<128x1xf32>, vector<16x1xf32> -> vector<16x1xf32>
    %c0_60 = arith.constant 0 : index
    %c0_61 = arith.constant 0 : index
    %c0_62 = arith.constant 0 : index
    %110 = vector.load %arg14[%c0_60, %c0_61, %c0_62] : memref<2x1x128xf32, #tpu.memory_space<vmem>>, vector<1x1x128xf32>
    %111 = vector.shape_cast %110 : vector<1x1x128xf32> to vector<1x128xf32>
    %cst_63 = arith.constant dense<0.000000e+00> : vector<1x16xf32>
    %112 = tpu.matmul %111, %106, %cst_63 {dimension_numbers = #tpu.dot_dimension_numbers<[1], [1], [0], [0], [0, 0, 1, 0], [], []>} : vector<1x128xf32>, vector<16x128xf32>, vector<1x16xf32> -> vector<1x16xf32>
    %113 = vector.broadcast %109 : vector<16x1xf32> to vector<16x16xf32>
    %114 = vector.broadcast %112 : vector<1x16xf32> to vector<16x16xf32>
    %115 = arith.addf %113, %114 : vector<16x16xf32>
    %cst_64 = arith.constant 0.000000e+00 : f32
    %116 = vector.broadcast %cst_64 : f32 to vector<16x16xf32>
    %117 = arith.maximumf %115, %116 : vector<16x16xf32>
    %118 = arith.addf %117, %5 : vector<16x16xf32>
    %cst_65 = arith.constant dense<0xFF800000> : vector<16xf32>
    %119 = vector.multi_reduction <maximumf>, %118, %cst_65 [1] : vector<16x16xf32> to vector<16xf32>
    %120 = vector.shape_cast %119 : vector<16xf32> to vector<16x1xf32>
    %121 = vector.broadcast %120 : vector<16x1xf32> to vector<16x16xf32>
    %122 = arith.subf %118, %121 : vector<16x16xf32>
    %123 = math.exp %122 : vector<16x16xf32>
    %cst_66 = arith.constant dense<0.000000e+00> : vector<16xf32>
    %124 = vector.multi_reduction <add>, %123, %cst_66 [1] : vector<16x16xf32> to vector<16xf32>
    %125 = vector.shape_cast %124 : vector<16xf32> to vector<16x1xf32>
    %126 = tpu.reciprocal %125 {approx = true} : vector<16x1xf32> -> vector<16x1xf32>
    %127 = vector.broadcast %126 : vector<16x1xf32> to vector<16x16xf32>
    %128 = arith.mulf %123, %127 : vector<16x16xf32>
    %cst_67 = arith.constant dense<0.000000e+00> : vector<16x128xf32>
    %129 = tpu.matmul %128, %106, %cst_67 {dimension_numbers = #tpu.dot_dimension_numbers<[1], [0], [0], [1], [0, 0, 1, 1], [], []>} : vector<16x16xf32>, vector<16x128xf32>, vector<16x128xf32> -> vector<16x128xf32>
    %cst_68 = arith.constant 0.000000e+00 : f32
    %130 = vector.broadcast %cst_68 : f32 to vector<16x128xf32>
    %131 = arith.cmpf ogt, %129, %130 : vector<16x128xf32>
    %cst_69 = arith.constant 0.000000e+00 : f32
    %132 = vector.broadcast %cst_69 : f32 to vector<16x128xf32>
    %133 = arith.minimumf %129, %132 : vector<16x128xf32>
    %134 = math.exp %133 : vector<16x128xf32>
    %cst_70 = arith.constant 1.000000e+00 : f32
    %135 = vector.broadcast %cst_70 : f32 to vector<16x128xf32>
    %136 = arith.subf %134, %135 : vector<16x128xf32>
    %137 = arith.select %131, %129, %136 : vector<16x128xi1>, vector<16x128xf32>
    %cst_71 = arith.constant dense<0.000000e+00> : vector<16x128xf32>
    %138 = tpu.matmul %0, %30, %cst_71 {dimension_numbers = #tpu.dot_dimension_numbers<[1], [0], [0], [1], [0, 0, 1, 1], [], []>} : vector<16x16xf32>, vector<16x128xf32>, vector<16x128xf32> -> vector<16x128xf32>
    %cst_72 = arith.constant 0.899999976 : f32
    %139 = vector.broadcast %cst_72 : f32 to vector<16x128xf32>
    %140 = arith.mulf %139, %138 : vector<16x128xf32>
    %cst_73 = arith.constant 1.000000e-01 : f32
    %141 = vector.broadcast %cst_73 : f32 to vector<16x128xf32>
    %142 = arith.mulf %141, %30 : vector<16x128xf32>
    %143 = arith.addf %140, %142 : vector<16x128xf32>
    %c0_74 = arith.constant 0 : index
    %c0_75 = arith.constant 0 : index
    %c0_76 = arith.constant 0 : index
    %144 = vector.load %arg15[%c0_74, %c0_75, %c0_76] : memref<2x128x128xbf16, #tpu.memory_space<vmem>>, vector<1x128x128xbf16>
    %145 = vector.shape_cast %144 : vector<1x128x128xbf16> to vector<128x128xbf16>
    %146 = arith.extf %145 : vector<128x128xbf16> to vector<128x128xf32>
    %cst_77 = arith.constant dense<0.000000e+00> : vector<16x128xf32>
    %147 = tpu.matmul %143, %146, %cst_77 {dimension_numbers = #tpu.dot_dimension_numbers<[1], [0], [0], [1], [0, 0, 1, 1], [], []>} : vector<16x128xf32>, vector<128x128xf32>, vector<16x128xf32> -> vector<16x128xf32>
    %cst_78 = arith.constant 0.405465096 : f32
    %148 = vector.broadcast %cst_78 : f32 to vector<16x128xf32>
    %149 = arith.mulf %148, %147 : vector<16x128xf32>
    %cst_79 = arith.constant 0.594534874 : f32
    %150 = vector.broadcast %cst_79 : f32 to vector<16x128xf32>
    %151 = arith.mulf %150, %143 : vector<16x128xf32>
    %152 = arith.addf %149, %151 : vector<16x128xf32>
    %c0_80 = arith.constant 0 : index
    %c0_81 = arith.constant 0 : index
    %c0_82 = arith.constant 0 : index
    %153 = vector.load %arg16[%c0_80, %c0_81, %c0_82] : memref<2x256x128xbf16, #tpu.memory_space<vmem>>, vector<1x256x128xbf16>
    %154 = vector.shape_cast %153 : vector<1x256x128xbf16> to vector<256x128xbf16>
    %155 = arith.extf %154 : vector<256x128xbf16> to vector<256x128xf32>
    %156 = vector.extract_strided_slice %155 {offsets = [0, 0], sizes = [128, 128], strides = [1, 1]} : vector<256x128xf32> to vector<128x128xf32>
    %cst_83 = arith.constant dense<0.000000e+00> : vector<16x128xf32>
    %157 = tpu.matmul %137, %156, %cst_83 {dimension_numbers = #tpu.dot_dimension_numbers<[1], [0], [0], [1], [0, 0, 1, 1], [], []>} : vector<16x128xf32>, vector<128x128xf32>, vector<16x128xf32> -> vector<16x128xf32>
    %158 = vector.extract_strided_slice %155 {offsets = [128, 0], sizes = [128, 128], strides = [1, 1]} : vector<256x128xf32> to vector<128x128xf32>
    %cst_84 = arith.constant dense<0.000000e+00> : vector<16x128xf32>
    %159 = tpu.matmul %152, %158, %cst_84 {dimension_numbers = #tpu.dot_dimension_numbers<[1], [0], [0], [1], [0, 0, 1, 1], [], []>} : vector<16x128xf32>, vector<128x128xf32>, vector<16x128xf32> -> vector<16x128xf32>
    %160 = arith.addf %157, %159 : vector<16x128xf32>
    %c0_85 = arith.constant 0 : index
    %c0_86 = arith.constant 0 : index
    %c0_87 = arith.constant 0 : index
    %161 = vector.load %arg17[%c0_85, %c0_86, %c0_87] : memref<2x1x128xf32, #tpu.memory_space<vmem>>, vector<1x1x128xf32>
    %162 = vector.shape_cast %161 : vector<1x1x128xf32> to vector<1x128xf32>
    %163 = vector.broadcast %162 : vector<1x128xf32> to vector<16x128xf32>
    %164 = arith.addf %160, %163 : vector<16x128xf32>
    %165 = arith.addf %30, %164 : vector<16x128xf32>
    %cst_88 = arith.constant dense<0.000000e+00> : vector<16xf32>
    %166 = vector.multi_reduction <add>, %165, %cst_88 [1] : vector<16x128xf32> to vector<16xf32>
    %167 = vector.shape_cast %166 : vector<16xf32> to vector<16x1xf32>
    %cst_89 = arith.constant 1.280000e+02 : f32
    %168 = vector.broadcast %cst_89 : f32 to vector<16x1xf32>
    %169 = arith.divf %167, %168 : vector<16x1xf32>
    %170 = vector.broadcast %169 : vector<16x1xf32> to vector<16x128xf32>
    %171 = arith.subf %165, %170 : vector<16x128xf32>
    %172 = arith.mulf %171, %171 : vector<16x128xf32>
    %cst_90 = arith.constant dense<0.000000e+00> : vector<16xf32>
    %173 = vector.multi_reduction <add>, %172, %cst_90 [1] : vector<16x128xf32> to vector<16xf32>
    %174 = vector.shape_cast %173 : vector<16xf32> to vector<16x1xf32>
    %cst_91 = arith.constant 1.280000e+02 : f32
    %175 = vector.broadcast %cst_91 : f32 to vector<16x1xf32>
    %176 = arith.divf %174, %175 : vector<16x1xf32>
    %cst_92 = arith.constant 9.99999974E-6 : f32
    %177 = vector.broadcast %cst_92 : f32 to vector<16x1xf32>
    %178 = arith.addf %176, %177 : vector<16x1xf32>
    %179 = math.rsqrt %178 : vector<16x1xf32>
    %180 = vector.broadcast %179 : vector<16x1xf32> to vector<16x128xf32>
    %181 = arith.mulf %171, %180 : vector<16x128xf32>
    %c0_93 = arith.constant 0 : index
    %c0_94 = arith.constant 0 : index
    %182 = vector.load %arg18[%c0_93, %c0_94] : memref<1x128xf32, #tpu.memory_space<vmem>>, vector<1x128xf32>
    %183 = vector.broadcast %182 : vector<1x128xf32> to vector<16x128xf32>
    %184 = arith.mulf %181, %183 : vector<16x128xf32>
    %c0_95 = arith.constant 0 : index
    %c0_96 = arith.constant 0 : index
    %185 = vector.load %arg19[%c0_95, %c0_96] : memref<1x128xf32, #tpu.memory_space<vmem>>, vector<1x128xf32>
    %186 = vector.broadcast %185 : vector<1x128xf32> to vector<16x128xf32>
    %187 = arith.addf %184, %186 : vector<16x128xf32>
    %cst_97 = arith.constant 0.000000e+00 : f32
    %188 = vector.broadcast %cst_97 : f32 to vector<16x128xf32>
    %189 = arith.maximumf %187, %188 : vector<16x128xf32>
    %c1 = arith.constant 1 : index
    %c0_98 = arith.constant 0 : index
    %c0_99 = arith.constant 0 : index
    %190 = vector.load %arg9[%c1, %c0_98, %c0_99] : memref<2x128x256xbf16, #tpu.memory_space<vmem>>, vector<1x128x256xbf16>
    %191 = vector.shape_cast %190 : vector<1x128x256xbf16> to vector<128x256xbf16>
    %192 = arith.extf %191 : vector<128x256xbf16> to vector<128x256xf32>
    %cst_100 = arith.constant dense<0.000000e+00> : vector<16x256xf32>
    %193 = tpu.matmul %189, %192, %cst_100 {dimension_numbers = #tpu.dot_dimension_numbers<[1], [0], [0], [1], [0, 0, 1, 1], [], []>} : vector<16x128xf32>, vector<128x256xf32>, vector<16x256xf32> -> vector<16x256xf32>
    %c1_101 = arith.constant 1 : index
    %c0_102 = arith.constant 0 : index
    %c0_103 = arith.constant 0 : index
    %194 = vector.load %arg10[%c1_101, %c0_102, %c0_103] : memref<2x256x2xf32, #tpu.memory_space<vmem>>, vector<1x256x2xf32>
    %195 = vector.shape_cast %194 : vector<1x256x2xf32> to vector<256x2xf32>
    %cst_104 = arith.constant dense<0.000000e+00> : vector<16x2xf32>
    %196 = tpu.matmul %193, %195, %cst_104 {dimension_numbers = #tpu.dot_dimension_numbers<[1], [0], [0], [1], [0, 0, 1, 1], [], []>} : vector<16x256xf32>, vector<256x2xf32>, vector<16x2xf32> -> vector<16x2xf32>
    %c1_105 = arith.constant 1 : index
    %c0_106 = arith.constant 0 : index
    %c0_107 = arith.constant 0 : index
    %197 = vector.load %arg11[%c1_105, %c0_106, %c0_107] : memref<2x2x256xf32, #tpu.memory_space<vmem>>, vector<1x2x256xf32>
    %198 = vector.shape_cast %197 : vector<1x2x256xf32> to vector<2x256xf32>
    %cst_108 = arith.constant dense<0.000000e+00> : vector<2x16xf32>
    %199 = tpu.matmul %198, %193, %cst_108 {dimension_numbers = #tpu.dot_dimension_numbers<[1], [1], [0], [0], [0, 0, 1, 0], [], []>} : vector<2x256xf32>, vector<16x256xf32>, vector<2x16xf32> -> vector<2x16xf32>
    %c1_109 = arith.constant 1 : index
    %c0_110 = arith.constant 0 : index
    %c0_111 = arith.constant 0 : index
    %200 = vector.load %arg12[%c1_109, %c0_110, %c0_111] : memref<2x256x128xbf16, #tpu.memory_space<vmem>>, vector<1x256x128xbf16>
    %201 = vector.shape_cast %200 : vector<1x256x128xbf16> to vector<256x128xbf16>
    %202 = arith.extf %201 : vector<256x128xbf16> to vector<256x128xf32>
    %cst_112 = arith.constant 0.000000e+00 : f32
    %203 = vector.broadcast %cst_112 : f32 to vector<16x128xf32>
    %204 = vector.extract_strided_slice %196 {offsets = [0, 0], sizes = [16, 1], strides = [1, 1]} : vector<16x2xf32> to vector<16x1xf32>
    %205 = vector.extract_strided_slice %199 {offsets = [0, 0], sizes = [1, 16], strides = [1, 1]} : vector<2x16xf32> to vector<1x16xf32>
    %206 = vector.broadcast %204 : vector<16x1xf32> to vector<16x16xf32>
    %207 = vector.broadcast %205 : vector<1x16xf32> to vector<16x16xf32>
    %208 = arith.addf %206, %207 : vector<16x16xf32>
    %cst_113 = arith.constant 0.000000e+00 : f32
    %209 = vector.broadcast %cst_113 : f32 to vector<16x16xf32>
    %210 = arith.maximumf %208, %209 : vector<16x16xf32>
    %211 = arith.addf %210, %5 : vector<16x16xf32>
    %cst_114 = arith.constant dense<0xFF800000> : vector<16xf32>
    %212 = vector.multi_reduction <maximumf>, %211, %cst_114 [1] : vector<16x16xf32> to vector<16xf32>
    %213 = vector.shape_cast %212 : vector<16xf32> to vector<16x1xf32>
    %214 = vector.broadcast %213 : vector<16x1xf32> to vector<16x16xf32>
    %215 = arith.subf %211, %214 : vector<16x16xf32>
    %216 = math.exp %215 : vector<16x16xf32>
    %cst_115 = arith.constant dense<0.000000e+00> : vector<16xf32>
    %217 = vector.multi_reduction <add>, %216, %cst_115 [1] : vector<16x16xf32> to vector<16xf32>
    %218 = vector.shape_cast %217 : vector<16xf32> to vector<16x1xf32>
    %219 = tpu.reciprocal %218 {approx = true} : vector<16x1xf32> -> vector<16x1xf32>
    %220 = vector.broadcast %219 : vector<16x1xf32> to vector<16x16xf32>
    %221 = arith.mulf %216, %220 : vector<16x16xf32>
    %222 = vector.extract_strided_slice %193 {offsets = [0, 0], sizes = [16, 128], strides = [1, 1]} : vector<16x256xf32> to vector<16x128xf32>
    %cst_116 = arith.constant dense<0.000000e+00> : vector<16x128xf32>
    %223 = tpu.matmul %221, %222, %cst_116 {dimension_numbers = #tpu.dot_dimension_numbers<[1], [0], [0], [1], [0, 0, 1, 1], [], []>} : vector<16x16xf32>, vector<16x128xf32>, vector<16x128xf32> -> vector<16x128xf32>
    %cst_117 = arith.constant 0.000000e+00 : f32
    %224 = vector.broadcast %cst_117 : f32 to vector<16x128xf32>
    %225 = arith.cmpf ogt, %223, %224 : vector<16x128xf32>
    %cst_118 = arith.constant 0.000000e+00 : f32
    %226 = vector.broadcast %cst_118 : f32 to vector<16x128xf32>
    %227 = arith.minimumf %223, %226 : vector<16x128xf32>
    %228 = math.exp %227 : vector<16x128xf32>
    %cst_119 = arith.constant 1.000000e+00 : f32
    %229 = vector.broadcast %cst_119 : f32 to vector<16x128xf32>
    %230 = arith.subf %228, %229 : vector<16x128xf32>
    %231 = arith.select %225, %223, %230 : vector<16x128xi1>, vector<16x128xf32>
    %232 = vector.extract_strided_slice %202 {offsets = [0, 0], sizes = [128, 128], strides = [1, 1]} : vector<256x128xf32> to vector<128x128xf32>
    %cst_120 = arith.constant dense<0.000000e+00> : vector<16x128xf32>
    %233 = tpu.matmul %231, %232, %cst_120 {dimension_numbers = #tpu.dot_dimension_numbers<[1], [0], [0], [1], [0, 0, 1, 1], [], []>} : vector<16x128xf32>, vector<128x128xf32>, vector<16x128xf32> -> vector<16x128xf32>
    %234 = arith.addf %203, %233 : vector<16x128xf32>
    %235 = vector.extract_strided_slice %196 {offsets = [0, 1], sizes = [16, 1], strides = [1, 1]} : vector<16x2xf32> to vector<16x1xf32>
    %236 = vector.extract_strided_slice %199 {offsets = [1, 0], sizes = [1, 16], strides = [1, 1]} : vector<2x16xf32> to vector<1x16xf32>
    %237 = vector.broadcast %235 : vector<16x1xf32> to vector<16x16xf32>
    %238 = vector.broadcast %236 : vector<1x16xf32> to vector<16x16xf32>
    %239 = arith.addf %237, %238 : vector<16x16xf32>
    %cst_121 = arith.constant 0.000000e+00 : f32
    %240 = vector.broadcast %cst_121 : f32 to vector<16x16xf32>
    %241 = arith.maximumf %239, %240 : vector<16x16xf32>
    %242 = arith.addf %241, %5 : vector<16x16xf32>
    %cst_122 = arith.constant dense<0xFF800000> : vector<16xf32>
    %243 = vector.multi_reduction <maximumf>, %242, %cst_122 [1] : vector<16x16xf32> to vector<16xf32>
    %244 = vector.shape_cast %243 : vector<16xf32> to vector<16x1xf32>
    %245 = vector.broadcast %244 : vector<16x1xf32> to vector<16x16xf32>
    %246 = arith.subf %242, %245 : vector<16x16xf32>
    %247 = math.exp %246 : vector<16x16xf32>
    %cst_123 = arith.constant dense<0.000000e+00> : vector<16xf32>
    %248 = vector.multi_reduction <add>, %247, %cst_123 [1] : vector<16x16xf32> to vector<16xf32>
    %249 = vector.shape_cast %248 : vector<16xf32> to vector<16x1xf32>
    %250 = tpu.reciprocal %249 {approx = true} : vector<16x1xf32> -> vector<16x1xf32>
    %251 = vector.broadcast %250 : vector<16x1xf32> to vector<16x16xf32>
    %252 = arith.mulf %247, %251 : vector<16x16xf32>
    %253 = vector.extract_strided_slice %193 {offsets = [0, 128], sizes = [16, 128], strides = [1, 1]} : vector<16x256xf32> to vector<16x128xf32>
    %cst_124 = arith.constant dense<0.000000e+00> : vector<16x128xf32>
    %254 = tpu.matmul %252, %253, %cst_124 {dimension_numbers = #tpu.dot_dimension_numbers<[1], [0], [0], [1], [0, 0, 1, 1], [], []>} : vector<16x16xf32>, vector<16x128xf32>, vector<16x128xf32> -> vector<16x128xf32>
    %cst_125 = arith.constant 0.000000e+00 : f32
    %255 = vector.broadcast %cst_125 : f32 to vector<16x128xf32>
    %256 = arith.cmpf ogt, %254, %255 : vector<16x128xf32>
    %cst_126 = arith.constant 0.000000e+00 : f32
    %257 = vector.broadcast %cst_126 : f32 to vector<16x128xf32>
    %258 = arith.minimumf %254, %257 : vector<16x128xf32>
    %259 = math.exp %258 : vector<16x128xf32>
    %cst_127 = arith.constant 1.000000e+00 : f32
    %260 = vector.broadcast %cst_127 : f32 to vector<16x128xf32>
    %261 = arith.subf %259, %260 : vector<16x128xf32>
    %262 = arith.select %256, %254, %261 : vector<16x128xi1>, vector<16x128xf32>
    %263 = vector.extract_strided_slice %202 {offsets = [128, 0], sizes = [128, 128], strides = [1, 1]} : vector<256x128xf32> to vector<128x128xf32>
    %cst_128 = arith.constant dense<0.000000e+00> : vector<16x128xf32>
    %264 = tpu.matmul %262, %263, %cst_128 {dimension_numbers = #tpu.dot_dimension_numbers<[1], [0], [0], [1], [0, 0, 1, 1], [], []>} : vector<16x128xf32>, vector<128x128xf32>, vector<16x128xf32> -> vector<16x128xf32>
    %265 = arith.addf %234, %264 : vector<16x128xf32>
    %c1_129 = arith.constant 1 : index
    %c0_130 = arith.constant 0 : index
    %c0_131 = arith.constant 0 : index
    %266 = vector.load %arg13[%c1_129, %c0_130, %c0_131] : memref<2x128x1xf32, #tpu.memory_space<vmem>>, vector<1x128x1xf32>
    %267 = vector.shape_cast %266 : vector<1x128x1xf32> to vector<128x1xf32>
    %cst_132 = arith.constant dense<0.000000e+00> : vector<16x1xf32>
    %268 = tpu.matmul %265, %267, %cst_132 {dimension_numbers = #tpu.dot_dimension_numbers<[1], [0], [0], [1], [0, 0, 1, 1], [], []>} : vector<16x128xf32>, vector<128x1xf32>, vector<16x1xf32> -> vector<16x1xf32>
    %c1_133 = arith.constant 1 : index
    %c0_134 = arith.constant 0 : index
    %c0_135 = arith.constant 0 : index
    %269 = vector.load %arg14[%c1_133, %c0_134, %c0_135] : memref<2x1x128xf32, #tpu.memory_space<vmem>>, vector<1x1x128xf32>
    %270 = vector.shape_cast %269 : vector<1x1x128xf32> to vector<1x128xf32>
    %cst_136 = arith.constant dense<0.000000e+00> : vector<1x16xf32>
    %271 = tpu.matmul %270, %265, %cst_136 {dimension_numbers = #tpu.dot_dimension_numbers<[1], [1], [0], [0], [0, 0, 1, 0], [], []>} : vector<1x128xf32>, vector<16x128xf32>, vector<1x16xf32> -> vector<1x16xf32>
    %272 = vector.broadcast %268 : vector<16x1xf32> to vector<16x16xf32>
    %273 = vector.broadcast %271 : vector<1x16xf32> to vector<16x16xf32>
    %274 = arith.addf %272, %273 : vector<16x16xf32>
    %cst_137 = arith.constant 0.000000e+00 : f32
    %275 = vector.broadcast %cst_137 : f32 to vector<16x16xf32>
    %276 = arith.maximumf %274, %275 : vector<16x16xf32>
    %277 = arith.addf %276, %5 : vector<16x16xf32>
    %cst_138 = arith.constant dense<0xFF800000> : vector<16xf32>
    %278 = vector.multi_reduction <maximumf>, %277, %cst_138 [1] : vector<16x16xf32> to vector<16xf32>
    %279 = vector.shape_cast %278 : vector<16xf32> to vector<16x1xf32>
    %280 = vector.broadcast %279 : vector<16x1xf32> to vector<16x16xf32>
    %281 = arith.subf %277, %280 : vector<16x16xf32>
    %282 = math.exp %281 : vector<16x16xf32>
    %cst_139 = arith.constant dense<0.000000e+00> : vector<16xf32>
    %283 = vector.multi_reduction <add>, %282, %cst_139 [1] : vector<16x16xf32> to vector<16xf32>
    %284 = vector.shape_cast %283 : vector<16xf32> to vector<16x1xf32>
    %285 = tpu.reciprocal %284 {approx = true} : vector<16x1xf32> -> vector<16x1xf32>
    %286 = vector.broadcast %285 : vector<16x1xf32> to vector<16x16xf32>
    %287 = arith.mulf %282, %286 : vector<16x16xf32>
    %cst_140 = arith.constant dense<0.000000e+00> : vector<16x128xf32>
    %288 = tpu.matmul %287, %265, %cst_140 {dimension_numbers = #tpu.dot_dimension_numbers<[1], [0], [0], [1], [0, 0, 1, 1], [], []>} : vector<16x16xf32>, vector<16x128xf32>, vector<16x128xf32> -> vector<16x128xf32>
    %cst_141 = arith.constant 0.000000e+00 : f32
    %289 = vector.broadcast %cst_141 : f32 to vector<16x128xf32>
    %290 = arith.cmpf ogt, %288, %289 : vector<16x128xf32>
    %cst_142 = arith.constant 0.000000e+00 : f32
    %291 = vector.broadcast %cst_142 : f32 to vector<16x128xf32>
    %292 = arith.minimumf %288, %291 : vector<16x128xf32>
    %293 = math.exp %292 : vector<16x128xf32>
    %cst_143 = arith.constant 1.000000e+00 : f32
    %294 = vector.broadcast %cst_143 : f32 to vector<16x128xf32>
    %295 = arith.subf %293, %294 : vector<16x128xf32>
    %296 = arith.select %290, %288, %295 : vector<16x128xi1>, vector<16x128xf32>
    %cst_144 = arith.constant dense<0.000000e+00> : vector<16x128xf32>
    %297 = tpu.matmul %0, %189, %cst_144 {dimension_numbers = #tpu.dot_dimension_numbers<[1], [0], [0], [1], [0, 0, 1, 1], [], []>} : vector<16x16xf32>, vector<16x128xf32>, vector<16x128xf32> -> vector<16x128xf32>
    %cst_145 = arith.constant 0.899999976 : f32
    %298 = vector.broadcast %cst_145 : f32 to vector<16x128xf32>
    %299 = arith.mulf %298, %297 : vector<16x128xf32>
    %cst_146 = arith.constant 1.000000e-01 : f32
    %300 = vector.broadcast %cst_146 : f32 to vector<16x128xf32>
    %301 = arith.mulf %300, %30 : vector<16x128xf32>
    %302 = arith.addf %299, %301 : vector<16x128xf32>
    %c1_147 = arith.constant 1 : index
    %c0_148 = arith.constant 0 : index
    %c0_149 = arith.constant 0 : index
    %303 = vector.load %arg15[%c1_147, %c0_148, %c0_149] : memref<2x128x128xbf16, #tpu.memory_space<vmem>>, vector<1x128x128xbf16>
    %304 = vector.shape_cast %303 : vector<1x128x128xbf16> to vector<128x128xbf16>
    %305 = arith.extf %304 : vector<128x128xbf16> to vector<128x128xf32>
    %cst_150 = arith.constant dense<0.000000e+00> : vector<16x128xf32>
    %306 = tpu.matmul %302, %305, %cst_150 {dimension_numbers = #tpu.dot_dimension_numbers<[1], [0], [0], [1], [0, 0, 1, 1], [], []>} : vector<16x128xf32>, vector<128x128xf32>, vector<16x128xf32> -> vector<16x128xf32>
    %cst_151 = arith.constant 0.223143548 : f32
    %307 = vector.broadcast %cst_151 : f32 to vector<16x128xf32>
    %308 = arith.mulf %307, %306 : vector<16x128xf32>
    %cst_152 = arith.constant 0.776856422 : f32
    %309 = vector.broadcast %cst_152 : f32 to vector<16x128xf32>
    %310 = arith.mulf %309, %302 : vector<16x128xf32>
    %311 = arith.addf %308, %310 : vector<16x128xf32>
    %c1_153 = arith.constant 1 : index
    %c0_154 = arith.constant 0 : index
    %c0_155 = arith.constant 0 : index
    %312 = vector.load %arg16[%c1_153, %c0_154, %c0_155] : memref<2x256x128xbf16, #tpu.memory_space<vmem>>, vector<1x256x128xbf16>
    %313 = vector.shape_cast %312 : vector<1x256x128xbf16> to vector<256x128xbf16>
    %314 = arith.extf %313 : vector<256x128xbf16> to vector<256x128xf32>
    %315 = vector.extract_strided_slice %314 {offsets = [0, 0], sizes = [128, 128], strides = [1, 1]} : vector<256x128xf32> to vector<128x128xf32>
    %cst_156 = arith.constant dense<0.000000e+00> : vector<16x128xf32>
    %316 = tpu.matmul %296, %315, %cst_156 {dimension_numbers = #tpu.dot_dimension_numbers<[1], [0], [0], [1], [0, 0, 1, 1], [], []>} : vector<16x128xf32>, vector<128x128xf32>, vector<16x128xf32> -> vector<16x128xf32>
    %317 = vector.extract_strided_slice %314 {offsets = [128, 0], sizes = [128, 128], strides = [1, 1]} : vector<256x128xf32> to vector<128x128xf32>
    %cst_157 = arith.constant dense<0.000000e+00> : vector<16x128xf32>
    %318 = tpu.matmul %311, %317, %cst_157 {dimension_numbers = #tpu.dot_dimension_numbers<[1], [0], [0], [1], [0, 0, 1, 1], [], []>} : vector<16x128xf32>, vector<128x128xf32>, vector<16x128xf32> -> vector<16x128xf32>
    %319 = arith.addf %316, %318 : vector<16x128xf32>
    %c1_158 = arith.constant 1 : index
    %c0_159 = arith.constant 0 : index
    %c0_160 = arith.constant 0 : index
    %320 = vector.load %arg17[%c1_158, %c0_159, %c0_160] : memref<2x1x128xf32, #tpu.memory_space<vmem>>, vector<1x1x128xf32>
    %321 = vector.shape_cast %320 : vector<1x1x128xf32> to vector<1x128xf32>
    %322 = vector.broadcast %321 : vector<1x128xf32> to vector<16x128xf32>
    %323 = arith.addf %319, %322 : vector<16x128xf32>
    %324 = arith.addf %189, %323 : vector<16x128xf32>
    %cst_161 = arith.constant dense<0.000000e+00> : vector<16xf32>
    %325 = vector.multi_reduction <add>, %324, %cst_161 [1] : vector<16x128xf32> to vector<16xf32>
    %326 = vector.shape_cast %325 : vector<16xf32> to vector<16x1xf32>
    %cst_162 = arith.constant 1.280000e+02 : f32
    %327 = vector.broadcast %cst_162 : f32 to vector<16x1xf32>
    %328 = arith.divf %326, %327 : vector<16x1xf32>
    %329 = vector.broadcast %328 : vector<16x1xf32> to vector<16x128xf32>
    %330 = arith.subf %324, %329 : vector<16x128xf32>
    %331 = arith.mulf %330, %330 : vector<16x128xf32>
    %cst_163 = arith.constant dense<0.000000e+00> : vector<16xf32>
    %332 = vector.multi_reduction <add>, %331, %cst_163 [1] : vector<16x128xf32> to vector<16xf32>
    %333 = vector.shape_cast %332 : vector<16xf32> to vector<16x1xf32>
    %cst_164 = arith.constant 1.280000e+02 : f32
    %334 = vector.broadcast %cst_164 : f32 to vector<16x1xf32>
    %335 = arith.divf %333, %334 : vector<16x1xf32>
    %cst_165 = arith.constant 9.99999974E-6 : f32
    %336 = vector.broadcast %cst_165 : f32 to vector<16x1xf32>
    %337 = arith.addf %335, %336 : vector<16x1xf32>
    %338 = math.rsqrt %337 : vector<16x1xf32>
    %339 = vector.broadcast %338 : vector<16x1xf32> to vector<16x128xf32>
    %340 = arith.mulf %330, %339 : vector<16x128xf32>
    %c0_166 = arith.constant 0 : index
    %c0_167 = arith.constant 0 : index
    %341 = vector.load %arg18[%c0_166, %c0_167] : memref<1x128xf32, #tpu.memory_space<vmem>>, vector<1x128xf32>
    %342 = vector.broadcast %341 : vector<1x128xf32> to vector<16x128xf32>
    %343 = arith.mulf %340, %342 : vector<16x128xf32>
    %c0_168 = arith.constant 0 : index
    %c0_169 = arith.constant 0 : index
    %344 = vector.load %arg19[%c0_168, %c0_169] : memref<1x128xf32, #tpu.memory_space<vmem>>, vector<1x128xf32>
    %345 = vector.broadcast %344 : vector<1x128xf32> to vector<16x128xf32>
    %346 = arith.addf %343, %345 : vector<16x128xf32>
    %cst_170 = arith.constant 0.000000e+00 : f32
    %347 = vector.broadcast %cst_170 : f32 to vector<16x128xf32>
    %348 = arith.maximumf %346, %347 : vector<16x128xf32>
    %c0_171 = arith.constant 0 : index
    %c0_172 = arith.constant 0 : index
    %349 = vector.load %arg20[%c0_171, %c0_172] : memref<128x8xf32, #tpu.memory_space<vmem>>, vector<128x8xf32>
    %cst_173 = arith.constant dense<0.000000e+00> : vector<16x8xf32>
    %350 = tpu.matmul %348, %349, %cst_173 {dimension_numbers = #tpu.dot_dimension_numbers<[1], [0], [0], [1], [0, 0, 1, 1], [], []>} : vector<16x128xf32>, vector<128x8xf32>, vector<16x8xf32> -> vector<16x8xf32>
    %c0_174 = arith.constant 0 : index
    %c0_175 = arith.constant 0 : index
    %351 = vector.load %arg21[%c0_174, %c0_175] : memref<1x8xf32, #tpu.memory_space<vmem>>, vector<1x8xf32>
    %352 = vector.broadcast %351 : vector<1x8xf32> to vector<16x8xf32>
    %353 = arith.addf %350, %352 : vector<16x8xf32>
    %c0_176 = arith.constant 0 : index
    %c0_177 = arith.constant 0 : index
    %354 = vector.load %arg22[%c0_176, %c0_177] : memref<16x8xf32, #tpu.memory_space<vmem>>, vector<16x8xf32>
    tpu.vector_store %arg22[%c0_176, %c0_177], %353 {strides = array<i32>} : memref<16x8xf32, #tpu.memory_space<vmem>>, vector<16x8xf32>,
    return
  }
}

</mosaic_0001>

<llo_original>
// kernel: deep_gcn_forward.1
$region0: #{deep_gcn_forward.1}
  #allocation0 [shape = 'u32[]', space=smem, size = 0x4, offset = 0x4, fixed_abs, tag = 'smem constant byte address 0x4 - core index']
  #allocation1 [shape = 'u32[144,128]{1,0:T(1,128)}', space=vmem, size = 0x12000, scoped, tag = 'internal scratch']
  %s0 = inlined_call_operand.vmem [shape: f32[16,54], index: 0, kind: input, shape index: {}]
  %s1 = inlined_call_operand.vmem [shape: f32[16,1024], index: 1, kind: input, shape index: {}]
  %s2 = inlined_call_operand.vmem [shape: f32[16,16], index: 2, kind: input, shape index: {}]
  %s3 = inlined_call_operand.hbm [shape: f32[54,256], index: 3, kind: input, shape index: {}]
  %s4 = inlined_call_operand.vmem [shape: f32[1,256], index: 4, kind: input, shape index: {}]
  %s5 = inlined_call_operand.hbm [shape: bf16[1024,256], index: 5, kind: input, shape index: {}]
  %s6 = inlined_call_operand.vmem [shape: f32[1,256], index: 6, kind: input, shape index: {}]
  %s7 = inlined_call_operand.vmem [shape: bf16[512,128], index: 7, kind: input, shape index: {}]
  %s8 = inlined_call_operand.hbm [shape: f32[1,128], index: 8, kind: input, shape index: {}]
  %s9 = inlined_call_operand.vmem [shape: bf16[2,128,256], index: 9, kind: input, shape index: {}]
  %s10 = inlined_call_operand.vmem [shape: f32[2,256,2], index: 10, kind: input, shape index: {}]
  %s11 = inlined_call_operand.hbm [shape: f32[2,2,256], index: 11, kind: input, shape index: {}]
  %s12 = inlined_call_operand.vmem [shape: bf16[2,256,128], index: 12, kind: input, shape index: {}]
  %s13 = inlined_call_operand.vmem [shape: f32[2,128,1], index: 13, kind: input, shape index: {}]
  %s14 = inlined_call_operand.vmem [shape: f32[2,1,128], index: 14, kind: input, shape index: {}]
  %s15 = inlined_call_operand.hbm [shape: bf16[2,128,128], index: 15, kind: input, shape index: {}]
  %s16 = inlined_call_operand.hbm [shape: bf16[2,256,128], index: 16, kind: input, shape index: {}]
  %s17 = inlined_call_operand.vmem [shape: f32[2,1,128], index: 17, kind: input, shape index: {}]
  %s18 = inlined_call_operand.vmem [shape: f32[1,128], index: 18, kind: input, shape index: {}]
  %s19 = inlined_call_operand.vmem [shape: f32[1,128], index: 19, kind: input, shape index: {}]
  %s20 = inlined_call_operand.vmem [shape: f32[128,8], index: 20, kind: input, shape index: {}]
  %s21 = inlined_call_operand.hbm [shape: f32[1,8], index: 21, kind: input, shape index: {}]
  %s22 = inlined_call_operand.vmem [shape: f32[16,8], index: 22, kind: output, shape index: {}]
  %s23 = sld [smem:[#allocation0]]
  $region126: #{deep_gcn_forward.1} parent=0
    _
  %s25 = ssub.s32 1, %s23
  %s26 = scalar_select 0, %s25, %s23
  $region1: #{deep_gcn_forward.1} parent=0
    #allocation2 [shape = 'u8[57344]{0}', space=vmem, size = 0xe000, scoped, tag = 'input window, operand 3, single buffered']
    #allocation3 [shape = 's32[1]{0}', space=sflag, size = 0x4, scoped, tag = 'scoped memory for deep_gcn_forward.1']
    #allocation4 [shape = 'u8[524288]{0}', space=vmem, size = 0x80000, scoped, tag = 'input window, operand 5, single buffered']
    #allocation5 [shape = 's32[1]{0}', space=sflag, size = 0x4, scoped, tag = 'scoped memory for deep_gcn_forward.1']
    #allocation6 [shape = 'u8[512]{0}', space=vmem, size = 0x400, scoped, tag = 'input window, operand 8, single buffered']
    #allocation7 [shape = 'u8[4096]{0}', space=vmem, size = 0x1000, scoped, tag = 'input window, operand 11, single buffered']
    #allocation8 [shape = 's32[1]{0}', space=sflag, size = 0x4, scoped, tag = 'scoped memory for deep_gcn_forward.1']
    #allocation9 [shape = 'u8[65536]{0}', space=vmem, size = 0x10000, scoped, tag = 'input window, operand 15, single buffered']
    #allocation10 [shape = 'u8[131072]{0}', space=vmem, size = 0x20000, scoped, tag = 'input window, operand 16, single buffered']
    #allocation11 [shape = 's32[1]{0}', space=sflag, size = 0x4, scoped, tag = 'scoped memory for deep_gcn_forward.1']
    #allocation12 [shape = 'u8[512]{0}', space=vmem, size = 0x400, scoped, tag = 'input window, operand 21, single buffered']
    %27 = vsyncpa [#allocation3], 0
    %28 = vsyncpa [#allocation5], 0
    %29 = vsyncpa [#allocation8], 0
    %30 = vsyncpa [#allocation11], 0
    // Predicated region
    $region2: #{deep_gcn_forward.1} parent=1 // pred_check
      _
    $region3: #{deep_gcn_forward.1} parent=1 // pred_check_branch
      %32 = sbr.rel (0) target = $region5
    $region4: #{deep_gcn_forward.1} parent=1 // pred_region
      _
    $region5: #{deep_gcn_forward.1} parent=1 // pred_fallthru
      _
    // Predicated region
    $region6: #{deep_gcn_forward.1} parent=1 // pred_check
      _
    $region7: #{deep_gcn_forward.1} parent=1 // pred_check_branch
      %34 = sbr.rel (0) target = $region9
    $region8: #{deep_gcn_forward.1} parent=1 // pred_region
      _
    $region9: #{deep_gcn_forward.1} parent=1 // pred_fallthru
      _
    // Predicated region
    $region10: #{deep_gcn_forward.1} parent=1 // pred_check
      _
    $region11: #{deep_gcn_forward.1} parent=1 // pred_check_branch
      %36 = sbr.rel (0) target = $region13
    $region12: #{deep_gcn_forward.1} parent=1 // pred_region
      _
    $region13: #{deep_gcn_forward.1} parent=1 // pred_fallthru
      _
    // Predicated region
    $region14: #{deep_gcn_forward.1} parent=1 // pred_check
      _
    $region15: #{deep_gcn_forward.1} parent=1 // pred_check_branch
      %38 = sbr.rel (0) target = $region17
    $region16: #{deep_gcn_forward.1} parent=1 // pred_region
      %s40 = ssub.s32 1792, 1792
      %41 = vsyncadd [#allocation3], %s40
      %s42 = sshll.u32 [#allocation2], 4
      %s43 = int_to_ptr.vmem [resolvable:$true] %s42
      %48 = dma.hbm_to_vmem [thread:$0]  %s3, 1792, %s43, [#allocation3], 256, 256, 16
    $region17: #{deep_gcn_forward.1} parent=1 // pred_fallthru
      _
    // Predicated region
    $region18: #{deep_gcn_forward.1} parent=1 // pred_check
      _
    $region19: #{deep_gcn_forward.1} parent=1 // pred_check_branch
      %50 = sbr.rel (0) target = $region21
    $region20: #{deep_gcn_forward.1} parent=1 // pred_region
      _
    $region21: #{deep_gcn_forward.1} parent=1 // pred_fallthru
      _
    // Predicated region
    $region22: #{deep_gcn_forward.1} parent=1 // pred_check
      _
    $region23: #{deep_gcn_forward.1} parent=1 // pred_check_branch
      %52 = sbr.rel (0) target = $region25
    $region24: #{deep_gcn_forward.1} parent=1 // pred_region
      %s54 = ssub.s32 16384, 16384
      %55 = vsyncadd [#allocation5], %s54
      %s56 = sshll.u32 [#allocation4], 4
      %s57 = int_to_ptr.vmem [resolvable:$true] %s56
      %62 = dma.hbm_to_vmem [thread:$0]  %s5, 16384, %s57, [#allocation5], 128, 128, 8
    $region25: #{deep_gcn_forward.1} parent=1 // pred_fallthru
      _
    // Predicated region
    $region26: #{deep_gcn_forward.1} parent=1 // pred_check
      _
    $region27: #{deep_gcn_forward.1} parent=1 // pred_check_branch
      %64 = sbr.rel (0) target = $region29
    $region28: #{deep_gcn_forward.1} parent=1 // pred_region
      _
    $region29: #{deep_gcn_forward.1} parent=1 // pred_fallthru
      _
    // Predicated region
    $region30: #{deep_gcn_forward.1} parent=1 // pred_check
      _
    $region31: #{deep_gcn_forward.1} parent=1 // pred_check_branch
      %66 = sbr.rel (0) target = $region33
    $region32: #{deep_gcn_forward.1} parent=1 // pred_region
      _
    $region33: #{deep_gcn_forward.1} parent=1 // pred_fallthru
      _
    // Predicated region
    $region34: #{deep_gcn_forward.1} parent=1 // pred_check
      _
    $region35: #{deep_gcn_forward.1} parent=1 // pred_check_branch
      %68 = sbr.rel (0) target = $region37
    $region36: #{deep_gcn_forward.1} parent=1 // pred_region
      %s70 = ssub.s32 16, 16
      %71 = vsyncadd [#allocation5], %s70
      %s73 = sshll.u32 [#allocation6], 4
      %s74 = int_to_ptr.vmem [resolvable:$true] %s73
      %76 = dma.hbm_to_vmem [thread:$0]  %s8, 16, %s74, [#allocation5]
    $region37: #{deep_gcn_forward.1} parent=1 // pred_fallthru
      _
    // Predicated region
    $region38: #{deep_gcn_forward.1} parent=1 // pred_check
      _
    $region39: #{deep_gcn_forward.1} parent=1 // pred_check_branch
      %78 = sbr.rel (0) target = $region41
    $region40: #{deep_gcn_forward.1} parent=1 // pred_region
      _
    $region41: #{deep_gcn_forward.1} parent=1 // pred_fallthru
      _
    // Predicated region
    $region42: #{deep_gcn_forward.1} parent=1 // pred_check
      _
    $region43: #{deep_gcn_forward.1} parent=1 // pred_check_branch
      %80 = sbr.rel (0) target = $region45
    $region44: #{deep_gcn_forward.1} parent=1 // pred_region
      _
    $region45: #{deep_gcn_forward.1} parent=1 // pred_fallthru
      _
    // Predicated region
    $region46: #{deep_gcn_forward.1} parent=1 // pred_check
      _
    $region47: #{deep_gcn_forward.1} parent=1 // pred_check_branch
      %82 = sbr.rel (0) target = $region49
    $region48: #{deep_gcn_forward.1} parent=1 // pred_region
      %s84 = ssub.s32 128, 128
      %85 = vsyncadd [#allocation8], %s84
      %s86 = sshll.u32 [#allocation7], 4
      %s87 = int_to_ptr.vmem [resolvable:$true] %s86
      %92 = dma.hbm_to_vmem [thread:$0]  %s11, 128, %s87, [#allocation8], 64, 64, 4
    $region49: #{deep_gcn_forward.1} parent=1 // pred_fallthru
      _
    // Predicated region
    $region50: #{deep_gcn_forward.1} parent=1 // pred_check
      _
    $region51: #{deep_gcn_forward.1} parent=1 // pred_check_branch
      %94 = sbr.rel (0) target = $region53
    $region52: #{deep_gcn_forward.1} parent=1 // pred_region
      _
    $region53: #{deep_gcn_forward.1} parent=1 // pred_fallthru
      _
    // Predicated region
    $region54: #{deep_gcn_forward.1} parent=1 // pred_check
      _
    $region55: #{deep_gcn_forward.1} parent=1 // pred_check_branch
      %96 = sbr.rel (0) target = $region57
    $region56: #{deep_gcn_forward.1} parent=1 // pred_region
      _
    $region57: #{deep_gcn_forward.1} parent=1 // pred_fallthru
      _
    // Predicated region
    $region58: #{deep_gcn_forward.1} parent=1 // pred_check
      _
    $region59: #{deep_gcn_forward.1} parent=1 // pred_check_branch
      %98 = sbr.rel (0) target = $region61
    $region60: #{deep_gcn_forward.1} parent=1 // pred_region
      _
    $region61: #{deep_gcn_forward.1} parent=1 // pred_fallthru
      _
    // Predicated region
    $region62: #{deep_gcn_forward.1} parent=1 // pred_check
      _
    $region63: #{deep_gcn_forward.1} parent=1 // pred_check_branch
      %100 = sbr.rel (0) target = $region65
    $region64: #{deep_gcn_forward.1} parent=1 // pred_region
      %s102 = ssub.s32 2048, 2048
      %103 = vsyncadd [#allocation8], %s102
      %s104 = sshll.u32 [#allocation9], 4
      %s105 = int_to_ptr.vmem [resolvable:$true] %s104
      %110 = dma.hbm_to_vmem [thread:$0]  %s15, 2048, %s105, [#allocation8], 64, 64, 4
    $region65: #{deep_gcn_forward.1} parent=1 // pred_fallthru
      _
    // Predicated region
    $region66: #{deep_gcn_forward.1} parent=1 // pred_check
      _
    $region67: #{deep_gcn_forward.1} parent=1 // pred_check_branch
      %112 = sbr.rel (0) target = $region69
    $region68: #{deep_gcn_forward.1} parent=1 // pred_region
      %s114 = ssub.s32 4096, 4096
      %115 = vsyncadd [#allocation11], %s114
      %s116 = sshll.u32 [#allocation10], 4
      %s117 = int_to_ptr.vmem [resolvable:$true] %s116
      %122 = dma.hbm_to_vmem [thread:$0]  %s16, 4096, %s117, [#allocation11], 64, 64, 4
    $region69: #{deep_gcn_forward.1} parent=1 // pred_fallthru
      _
    // Predicated region
    $region70: #{deep_gcn_forward.1} parent=1 // pred_check
      _
    $region71: #{deep_gcn_forward.1} parent=1 // pred_check_branch
      %124 = sbr.rel (0) target = $region73
    $region72: #{deep_gcn_forward.1} parent=1 // pred_region
      _
    $region73: #{deep_gcn_forward.1} parent=1 // pred_fallthru
      _
    // Predicated region
    $region74: #{deep_gcn_forward.1} parent=1 // pred_check
      _
    $region75: #{deep_gcn_forward.1} parent=1 // pred_check_branch
      %126 = sbr.rel (0) target = $region77
    $region76: #{deep_gcn_forward.1} parent=1 // pred_region
      _
    $region77: #{deep_gcn_forward.1} parent=1 // pred_fallthru
      _
    // Predicated region
    $region78: #{deep_gcn_forward.1} parent=1 // pred_check
      _
    $region79: #{deep_gcn_forward.1} parent=1 // pred_check_branch
      %128 = sbr.rel (0) target = $region81
    $region80: #{deep_gcn_forward.1} parent=1 // pred_region
      _
    $region81: #{deep_gcn_forward.1} parent=1 // pred_fallthru
      _
    // Predicated region
    $region82: #{deep_gcn_forward.1} parent=1 // pred_check
      _
    $region83: #{deep_gcn_forward.1} parent=1 // pred_check_branch
      %130 = sbr.rel (0) target = $region85
    $region84: #{deep_gcn_forward.1} parent=1 // pred_region
      _
    $region85: #{deep_gcn_forward.1} parent=1 // pred_fallthru
      _
    // Predicated region
    $region86: #{deep_gcn_forward.1} parent=1 // pred_check
      _
    $region87: #{deep_gcn_forward.1} parent=1 // pred_check_branch
      %132 = sbr.rel (0) target = $region89
    $region88: #{deep_gcn_forward.1} parent=1 // pred_region
      %s134 = ssub.s32 16, 16
      %135 = vsyncadd [#allocation11], %s134
      %s137 = sshll.u32 [#allocation12], 4
      %s138 = int_to_ptr.vmem [resolvable:$true] %s137
      %140 = dma.hbm_to_vmem [thread:$0]  %s21, 16, %s138, [#allocation11]
    $region89: #{deep_gcn_forward.1} parent=1 // pred_fallthru
      _
    // Predicated region
    $region90: #{deep_gcn_forward.1} parent=1 // pred_check
      _
    $region91: #{deep_gcn_forward.1} parent=1 // pred_check_branch
      %142 = sbr.rel (0) target = $region93
    $region92: #{deep_gcn_forward.1} parent=1 // pred_region
      %143 = dma.done [#allocation3], 1792
    $region93: #{deep_gcn_forward.1} parent=1 // pred_fallthru
      _
    // Predicated region
    $region94: #{deep_gcn_forward.1} parent=1 // pred_check
      _
    $region95: #{deep_gcn_forward.1} parent=1 // pred_check_branch
      %145 = sbr.rel (0) target = $region97
    $region96: #{deep_gcn_forward.1} parent=1 // pred_region
      %146 = dma.done [#allocation5], 16384
    $region97: #{deep_gcn_forward.1} parent=1 // pred_fallthru
      _
    // Predicated region
    $region98: #{deep_gcn_forward.1} parent=1 // pred_check
      _
    $region99: #{deep_gcn_forward.1} parent=1 // pred_check_branch
      %148 = sbr.rel (0) target = $region101
    $region100: #{deep_gcn_forward.1} parent=1 // pred_region
      %149 = dma.done [#allocation5], 16
    $region101: #{deep_gcn_forward.1} parent=1 // pred_fallthru
      _
    // Predicated region
    $region102: #{deep_gcn_forward.1} parent=1 // pred_check
      _
    $region103: #{deep_gcn_forward.1} parent=1 // pred_check_branch
      %151 = sbr.rel (0) target = $region105
    $region104: #{deep_gcn_forward.1} parent=1 // pred_region
      %152 = dma.done [#allocation8], 128
    $region105: #{deep_gcn_forward.1} parent=1 // pred_fallthru
      _
    // Predicated region
    $region106: #{deep_gcn_forward.1} parent=1 // pred_check
      _
    $region107: #{deep_gcn_forward.1} parent=1 // pred_check_branch
      %154 = sbr.rel (0) target = $region109
    $region108: #{deep_gcn_forward.1} parent=1 // pred_region
      %155 = dma.done [#allocation8], 2048
    $region109: #{deep_gcn_forward.1} parent=1 // pred_fallthru
      _
    // Predicated region
    $region110: #{deep_gcn_forward.1} parent=1 // pred_check
      _
    $region111: #{deep_gcn_forward.1} parent=1 // pred_check_branch
      %157 = sbr.rel (0) target = $region113
    $region112: #{deep_gcn_forward.1} parent=1 // pred_region
      %158 = dma.done [#allocation11], 4096
    $region113: #{deep_gcn_forward.1} parent=1 // pred_fallthru
      _
    // Predicated region
    $region114: #{deep_gcn_forward.1} parent=1 // pred_check
      _
    $region115: #{deep_gcn_forward.1} parent=1 // pred_check_branch
      %160 = sbr.rel (0) target = $region117
    $region116: #{deep_gcn_forward.1} parent=1 // pred_region
      %161 = dma.done [#allocation11], 16
    $region117: #{deep_gcn_forward.1} parent=1 // pred_fallthru
      _
    %v162 = vld [vmem:[%s2] sm:$0xff]
    %v163 = vld [vmem:[%s2 + $0x8] sm:$0xff]
    %vm164 = vcmp.gt.f32.partialorder %v162, 0.0
    %vm165 = vcmp.gt.f32.partialorder %v163, 0.0
    %v166 = vsel %vm164, 0.0, -9e+15
    %v167 = vsel %vm165, 0.0, -9e+15
    %v168 = vld [vmem:[%s0] sm:$0xff]
    %v169 = vld [vmem:[%s0 + $0x8] sm:$0xff]
    %v170 = vld [vmem:[#allocation2] sm:$0xff]
    %v171 = vld [vmem:[#allocation2 + $0x8] sm:$0xff]
    %v172 = vld [vmem:[#allocation2 + $0x10] sm:$0xff]
    %v173 = vld [vmem:[#allocation2 + $0x18] sm:$0xff]
    %v174 = vld [vmem:[#allocation2 + $0x20] sm:$0xff]
    %v175 = vld [vmem:[#allocation2 + $0x28] sm:$0xff]
    %v176 = vld [vmem:[#allocation2 + $0x30] sm:$0xff]
    %v177 = vld [vmem:[#allocation2 + $0x38] sm:$0xff]
    %v178 = vld [vmem:[#allocation2 + $0x40] sm:$0xff]
    %v179 = vld [vmem:[#allocation2 + $0x48] sm:$0xff]
    %v180 = vld [vmem:[#allocation2 + $0x50] sm:$0xff]
    %v181 = vld [vmem:[#allocation2 + $0x58] sm:$0xff]
    %v182 = vld [vmem:[#allocation2 + $0x60] sm:$0x3f]
    %v183 = vld [vmem:[#allocation2 + $0x68] sm:$0x3f]
    %v184 = vld [vmem:[%s4] sm:$0x3]
    %v186 = vlaneseq
    %v187 = vshrl.u32 %v186, 7
    %v188 = vsub.s32 0, %v187
    %v189 = vrot.slane %v184, %v188
    %v190 = vlaneseq
    %v191 = vshrl.u32 %v190, 7
    %v192 = vsub.s32 1, %v191
    %v193 = vrot.slane %v184, %v192
    %vm196 = vcmask 441344
    %v198 = vsel %vm196, %v168, 0
    %v201 = vsel %vm196, %v169, 0
    %vm203 = vcmask 1045504
    %v205 = vsel %vm203, %v182, 0
    %v208 = vsel %vm203, %v183, 0
    %210 = vmatprep.subr.mxu0 %v171
    %211 = vmatpush1.msra.mxu0 %v170
    %212 = vmatprep.subr.mxu0 %v173
    %213 = vmatpush1.msra.mxu0 %v172
    %214 = vmatprep.subr.mxu0 %v175
    %215 = vmatpush1.msra.mxu0 %v174
    %216 = vmatprep.subr.mxu0 %v177
    %217 = vmatpush1.msra.mxu0 %v176
    %218 = vmatprep.subr.mxu0 %v179
    %219 = vmatpush1.msra.mxu0 %v178
    %220 = vmatprep.subr.mxu0 %v181
    %221 = vmatpush1.msra.mxu0 %v180
    %222 = vmatprep.subr.mxu0 %v208
    %223 = vmatpush1.msra.mxu0 %v205
    %224 = vmatprep.subr.mxu0 0.0
    %225 = vmatpush1.msra.mxu0 0.0
    %226 = vmatprep.subr.mxu0 0.0
    %227 = vmatpush1.msra.mxu0 0.0
    %228 = vmatprep.subr.mxu0 0.0
    %229 = vmatpush1.msra.mxu0 0.0
    %230 = vmatprep.subr.mxu0 0.0
    %231 = vmatpush1.msra.mxu0 0.0
    %232 = vmatprep.subr.mxu0 0.0
    %233 = vmatpush1.msra.mxu0 0.0
    %234 = vmatprep.subr.mxu0 0.0
    %235 = vmatpush1.msra.mxu0 0.0
    %236 = vmatprep.subr.mxu0 0.0
    %237 = vmatpush1.msra.mxu0 0.0
    %238 = vmatprep.subr.mxu0 0.0
    %239 = vmatpush1.msra.mxu0 0.0
    %240 = vmatprep.subr.mxu0 0.0
    %241 = vmatpush1.msra.mxu0 0.0
    %242 = vmatprep.subr.mxu0 0.0
    %243 = vmatpush1.msra.mxu0 0.0
    %244 = vmatprep.subr.mxu0 0.0
    %245 = vmatpush1.msra.mxu0 0.0
    %246 = vmatprep.subr.mxu0 0.0
    %247 = vmatpush1.msra.mxu0 0.0
    %248 = vmatprep.subr.mxu0 0.0
    %249 = vmatpush1.msra.mxu0 0.0
    %250 = vmatprep.subr.mxu0 0.0
    %251 = vmatpush1.msra.mxu0 0.0
    %252 = vmatprep.subr.mxu0 0.0
    %253 = vmatpush1.msra.mxu0 0.0
    %254 = vmatprep.subr.mxu0 0.0
    %255 = vmatpush1.msra.mxu0 0.0
    %256 = vmatprep.subr.mxu0 0.0
    %257 = vmatpush1.msra.mxu0 0.0
    %258 = vmatprep.subr.mxu0 0.0
    %259 = vmatpush1.msra.mxu0 0.0
    %260 = vmatprep.subr.mxu0 0.0
    %261 = vmatpush1.msra.mxu0 0.0
    %262 = vmatprep.subr.mxu0 0.0
    %263 = vmatpush1.msra.mxu0 0.0
    %264 = vmatprep.subr.mxu0 0.0
    %265 = vmatpush1.msra.mxu0 0.0
    %266 = vmatprep.subr.mxu0 0.0
    %267 = vmatpush1.msra.mxu0 0.0
    %268 = vmatprep.subr.mxu0 0.0
    %269 = vmatpush1.msra.mxu0 0.0
    %270 = vmatprep.subr.mxu0 0.0
    %271 = vmatpush1.msra.mxu0 0.0
    %272 = vmatprep.subr.mxu0 0.0
    %273 = vmatpush1.msra.mxu0 0.0
    %274 = vmatprep.mubr.f32.mxu0 0.0
    %275 = vmatmul.mubr.f32.gmra.mrb[0].mxu0 %v198
    %v276 = vpop.f32.mrb[0].mxu0
    %v277 = vadd.f32 %v189, %v276
    %v278 = vpop.f32.mrb[0].mxu0
    %v279 = vadd.f32 %v193, %v278
    %280 = vmatprep.mubr.f32.mxu0 0.0
    %281 = vmatmul.mubr.f32.gmra.mrb[0].mxu0 %v201
    %v282 = vpop.f32.mrb[0].mxu0
    %v283 = vadd.f32 %v189, %v282
    %v284 = vpop.f32.mrb[0].mxu0
    %v285 = vadd.f32 %v193, %v284
    %286 = vdwg.mxu0
    %v287 = vld [vmem:[%s1] sm:$0xff]
    %v288 = vld [vmem:[%s1 + $0x8] sm:$0xff]
    %v289 = vld [vmem:[%s1 + $0x10] sm:$0xff]
    %v290 = vld [vmem:[%s1 + $0x18] sm:$0xff]
    %v291 = vld [vmem:[%s1 + $0x20] sm:$0xff]
    %v292 = vld [vmem:[%s1 + $0x28] sm:$0xff]
    %v293 = vld [vmem:[%s1 + $0x30] sm:$0xff]
    %v294 = vld [vmem:[%s1 + $0x38] sm:$0xff]
    %v295 = vld [vmem:[%s1 + $0x40] sm:$0xff]
    %v296 = vld [vmem:[%s1 + $0x48] sm:$0xff]
    %v297 = vld [vmem:[%s1 + $0x50] sm:$0xff]
    %v298 = vld [vmem:[%s1 + $0x58] sm:$0xff]
    %v299 = vld [vmem:[%s1 + $0x60] sm:$0xff]
    %v300 = vld [vmem:[%s1 + $0x68] sm:$0xff]
    %v301 = vld [vmem:[%s1 + $0x70] sm:$0xff]
    %v302 = vld [vmem:[%s1 + $0x78] sm:$0xff]
    %v303 = vld [vmem:[#allocation4] sm:$0xff]
    %v304 = vld [vmem:[#allocation4 + $0x8] sm:$0xff]
    %v305 = vld [vmem:[#allocation4 + $0x10] sm:$0xff]
    %v306 = vld [vmem:[#allocation4 + $0x18] sm:$0xff]
    %v307 = vld [vmem:[#allocation4 + $0x20] sm:$0xff]
    %v308 = vld [vmem:[#allocation4 + $0x28] sm:$0xff]
    %v309 = vld [vmem:[#allocation4 + $0x30] sm:$0xff]
    %v310 = vld [vmem:[#allocation4 + $0x38] sm:$0xff]
    %v311 = vld [vmem:[#allocation4 + $0x40] sm:$0xff]
    %v312 = vld [vmem:[#allocation4 + $0x48] sm:$0xff]
    %v313 = vld [vmem:[#allocation4 + $0x50] sm:$0xff]
    %v314 = vld [vmem:[#allocation4 + $0x58] sm:$0xff]
    %v315 = vld [vmem:[#allocation4 + $0x60] sm:$0xff]
    %v316 = vld [vmem:[#allocation4 + $0x68] sm:$0xff]
    %v317 = vld [vmem:[#allocation4 + $0x70] sm:$0xff]
    %v318 = vld [vmem:[#allocation4 + $0x78] sm:$0xff]
    %v319 = vld [vmem:[#allocation4 + $0x80] sm:$0xff]
    %v320 = vld [vmem:[#allocation4 + $0x88] sm:$0xff]
    %v321 = vld [vmem:[#allocation4 + $0x90] sm:$0xff]
    %v322 = vld [vmem:[#allocation4 + $0x98] sm:$0xff]
    %v323 = vld [vmem:[#allocation4 + $0xa0] sm:$0xff]
    %v324 = vld [vmem:[#allocation4 + $0xa8] sm:$0xff]
    %v325 = vld [vmem:[#allocation4 + $0xb0] sm:$0xff]
    %v326 = vld [vmem:[#allocation4 + $0xb8] sm:$0xff]
    %v327 = vld [vmem:[#allocation4 + $0xc0] sm:$0xff]
    %v328 = vld [vmem:[#allocation4 + $0xc8] sm:$0xff]
    %v329 = vld [vmem:[#allocation4 + $0xd0] sm:$0xff]
    %v330 = vld [vmem:[#allocation4 + $0xd8] sm:$0xff]
    %v331 = vld [vmem:[#allocation4 + $0xe0] sm:$0xff]
    %v332 = vld [vmem:[#allocation4 + $0xe8] sm:$0xff]
    %v333 = vld [vmem:[#allocation4 + $0xf0] sm:$0xff]
    %v334 = vld [vmem:[#allocation4 + $0xf8] sm:$0xff]
    %v335 = vld [vmem:[#allocation4 + $0x100] sm:$0xff]
    %v336 = vld [vmem:[#allocation4 + $0x108] sm:$0xff]
    %v337 = vld [vmem:[#allocation4 + $0x110] sm:$0xff]
    %v338 = vld [vmem:[#allocation4 + $0x118] sm:$0xff]
    %v339 = vld [vmem:[#allocation4 + $0x120] sm:$0xff]
    %v340 = vld [vmem:[#allocation4 + $0x128] sm:$0xff]
    %v341 = vld [vmem:[#allocation4 + $0x130] sm:$0xff]
    %v342 = vld [vmem:[#allocation4 + $0x138] sm:$0xff]
    %v343 = vld [vmem:[#allocation4 + $0x140] sm:$0xff]
    %v344 = vld [vmem:[#allocation4 + $0x148] sm:$0xff]
    %v345 = vld [vmem:[#allocation4 + $0x150] sm:$0xff]
    %v346 = vld [vmem:[#allocation4 + $0x158] sm:$0xff]
    %v347 = vld [vmem:[#allocation4 + $0x160] sm:$0xff]
    %v348 = vld [vmem:[#allocation4 + $0x168] sm:$0xff]
    %v349 = vld [vmem:[#allocation4 + $0x170] sm:$0xff]
    %v350 = vld [vmem:[#allocation4 + $0x178] sm:$0xff]
    %v351 = vld [vmem:[#allocation4 + $0x180] sm:$0xff]
    %v352 = vld [vmem:[#allocation4 + $0x188] sm:$0xff]
    %v353 = vld [vmem:[#allocation4 + $0x190] sm:$0xff]
    %v354 = vld [vmem:[#allocation4 + $0x198] sm:$0xff]
    %v355 = vld [vmem:[#allocation4 + $0x1a0] sm:$0xff]
    %v356 = vld [vmem:[#allocation4 + $0x1a8] sm:$0xff]
    %v357 = vld [vmem:[#allocation4 + $0x1b0] sm:$0xff]
    %v358 = vld [vmem:[#allocation4 + $0x1b8] sm:$0xff]
    %v359 = vld [vmem:[#allocation4 + $0x1c0] sm:$0xff]
    %v360 = vld [vmem:[#allocation4 + $0x1c8] sm:$0xff]
    %v361 = vld [vmem:[#allocation4 + $0x1d0] sm:$0xff]
    %v362 = vld [vmem:[#allocation4 + $0x1d8] sm:$0xff]
    %v363 = vld [vmem:[#allocation4 + $0x1e0] sm:$0xff]
    %v364 = vld [vmem:[#allocation4 + $0x1e8] sm:$0xff]
    %v365 = vld [vmem:[#allocation4 + $0x1f0] sm:$0xff]
    %v366 = vld [vmem:[#allocation4 + $0x1f8] sm:$0xff]
    %v367 = vld [vmem:[#allocation4 + $0x200] sm:$0xff]
    %v368 = vld [vmem:[#allocation4 + $0x208] sm:$0xff]
    %v369 = vld [vmem:[#allocation4 + $0x210] sm:$0xff]
    %v370 = vld [vmem:[#allocation4 + $0x218] sm:$0xff]
    %v371 = vld [vmem:[#allocation4 + $0x220] sm:$0xff]
    %v372 = vld [vmem:[#allocation4 + $0x228] sm:$0xff]
    %v373 = vld [vmem:[#allocation4 + $0x230] sm:$0xff]
    %v374 = vld [vmem:[#allocation4 + $0x238] sm:$0xff]
    %v375 = vld [vmem:[#allocation4 + $0x240] sm:$0xff]
    %v376 = vld [vmem:[#allocation4 + $0x248] sm:$0xff]
    %v377 = vld [vmem:[#allocation4 + $0x250] sm:$0xff]
    %v378 = vld [vmem:[#allocation4 + $0x258] sm:$0xff]
    %v379 = vld [vmem:[#allocation4 + $0x260] sm:$0xff]
    %v380 = vld [vmem:[#allocation4 + $0x268] sm:$0xff]
    %v381 = vld [vmem:[#allocation4 + $0x270] sm:$0xff]
    %v382 = vld [vmem:[#allocation4 + $0x278] sm:$0xff]
    %v383 = vld [vmem:[#allocation4 + $0x280] sm:$0xff]
    %v384 = vld [vmem:[#allocation4 + $0x288] sm:$0xff]
    %v385 = vld [vmem:[#allocation4 + $0x290] sm:$0xff]
    %v386 = vld [vmem:[#allocation4 + $0x298] sm:$0xff]
    %v387 = vld [vmem:[#allocation4 + $0x2a0] sm:$0xff]
    %v388 = vld [vmem:[#allocation4 + $0x2a8] sm:$0xff]
    %v389 = vld [vmem:[#allocation4 + $0x2b0] sm:$0xff]
    %v390 = vld [vmem:[#allocation4 + $0x2b8] sm:$0xff]
    %v391 = vld [vmem:[#allocation4 + $0x2c0] sm:$0xff]
    %v392 = vld [vmem:[#allocation4 + $0x2c8] sm:$0xff]
    %v393 = vld [vmem:[#allocation4 + $0x2d0] sm:$0xff]
    %v394 = vld [vmem:[#allocation4 + $0x2d8] sm:$0xff]
    %v395 = vld [vmem:[#allocation4 + $0x2e0] sm:$0xff]
    %v396 = vld [vmem:[#allocation4 + $0x2e8] sm:$0xff]
    %v397 = vld [vmem:[#allocation4 + $0x2f0] sm:$0xff]
    %v398 = vld [vmem:[#allocation4 + $0x2f8] sm:$0xff]
    %v399 = vld [vmem:[#allocation4 + $0x300] sm:$0xff]
    %v400 = vld [vmem:[#allocation4 + $0x308] sm:$0xff]
    %v401 = vld [vmem:[#allocation4 + $0x310] sm:$0xff]
    %v402 = vld [vmem:[#allocation4 + $0x318] sm:$0xff]
    %v403 = vld [vmem:[#allocation4 + $0x320] sm:$0xff]
    %v404 = vld [vmem:[#allocation4 + $0x328] sm:$0xff]
    %v405 = vld [vmem:[#allocation4 + $0x330] sm:$0xff]
    %v406 = vld [vmem:[#allocation4 + $0x338] sm:$0xff]
    %v407 = vld [vmem:[#allocation4 + $0x340] sm:$0xff]
    %v408 = vld [vmem:[#allocation4 + $0x348] sm:$0xff]
    %v409 = vld [vmem:[#allocation4 + $0x350] sm:$0xff]
    %v410 = vld [vmem:[#allocation4 + $0x358] sm:$0xff]
    %v411 = vld [vmem:[#allocation4 + $0x360] sm:$0xff]
    %v412 = vld [vmem:[#allocation4 + $0x368] sm:$0xff]
    %v413 = vld [vmem:[#allocation4 + $0x370] sm:$0xff]
    %v414 = vld [vmem:[#allocation4 + $0x378] sm:$0xff]
    %v415 = vld [vmem:[#allocation4 + $0x380] sm:$0xff]
    %v416 = vld [vmem:[#allocation4 + $0x388] sm:$0xff]
    %v417 = vld [vmem:[#allocation4 + $0x390] sm:$0xff]
    %v418 = vld [vmem:[#allocation4 + $0x398] sm:$0xff]
    %v419 = vld [vmem:[#allocation4 + $0x3a0] sm:$0xff]
    %v420 = vld [vmem:[#allocation4 + $0x3a8] sm:$0xff]
    %v421 = vld [vmem:[#allocation4 + $0x3b0] sm:$0xff]
    %v422 = vld [vmem:[#allocation4 + $0x3b8] sm:$0xff]
    %v423 = vld [vmem:[#allocation4 + $0x3c0] sm:$0xff]
    %v424 = vld [vmem:[#allocation4 + $0x3c8] sm:$0xff]
    %v425 = vld [vmem:[#allocation4 + $0x3d0] sm:$0xff]
    %v426 = vld [vmem:[#allocation4 + $0x3d8] sm:$0xff]
    %v427 = vld [vmem:[#allocation4 + $0x3e0] sm:$0xff]
    %v428 = vld [vmem:[#allocation4 + $0x3e8] sm:$0xff]
    %v429 = vld [vmem:[#allocation4 + $0x3f0] sm:$0xff]
    %v430 = vld [vmem:[#allocation4 + $0x3f8] sm:$0xff]
    %v431 = vunpack.c.l.bf16 %v303
    %v432 = vunpack.c.h.bf16 %v303
    %v433 = vunpack.c.l.bf16 %v304
    %v434 = vunpack.c.h.bf16 %v304
    %v435 = vunpack.c.l.bf16 %v305
    %v436 = vunpack.c.h.bf16 %v305
    %v437 = vunpack.c.l.bf16 %v306
    %v438 = vunpack.c.h.bf16 %v306
    %v439 = vunpack.c.l.bf16 %v307
    %v440 = vunpack.c.h.bf16 %v307
    %v441 = vunpack.c.l.bf16 %v308
    %v442 = vunpack.c.h.bf16 %v308
    %v443 = vunpack.c.l.bf16 %v309
    %v444 = vunpack.c.h.bf16 %v309
    %v445 = vunpack.c.l.bf16 %v310
    %v446 = vunpack.c.h.bf16 %v310
    %v447 = vunpack.c.l.bf16 %v311
    %v448 = vunpack.c.h.bf16 %v311
    %v449 = vunpack.c.l.bf16 %v312
    %v450 = vunpack.c.h.bf16 %v312
    %v451 = vunpack.c.l.bf16 %v313
    %v452 = vunpack.c.h.bf16 %v313
    %v453 = vunpack.c.l.bf16 %v314
    %v454 = vunpack.c.h.bf16 %v314
    %v455 = vunpack.c.l.bf16 %v315
    %v456 = vunpack.c.h.bf16 %v315
    %v457 = vunpack.c.l.bf16 %v316
    %v458 = vunpack.c.h.bf16 %v316
    %v459 = vunpack.c.l.bf16 %v317
    %v460 = vunpack.c.h.bf16 %v317
    %v461 = vunpack.c.l.bf16 %v318
    %v462 = vunpack.c.h.bf16 %v318
    %v463 = vunpack.c.l.bf16 %v319
    %v464 = vunpack.c.h.bf16 %v319
    %v465 = vunpack.c.l.bf16 %v320
    %v466 = vunpack.c.h.bf16 %v320
    %v467 = vunpack.c.l.bf16 %v321
    %v468 = vunpack.c.h.bf16 %v321
    %v469 = vunpack.c.l.bf16 %v322
    %v470 = vunpack.c.h.bf16 %v322
    %v471 = vunpack.c.l.bf16 %v323
    %v472 = vunpack.c.h.bf16 %v323
    %v473 = vunpack.c.l.bf16 %v324
    %v474 = vunpack.c.h.bf16 %v324
    %v475 = vunpack.c.l.bf16 %v325
    %v476 = vunpack.c.h.bf16 %v325
    %v477 = vunpack.c.l.bf16 %v326
    %v478 = vunpack.c.h.bf16 %v326
    %v479 = vunpack.c.l.bf16 %v327
    %v480 = vunpack.c.h.bf16 %v327
    %v481 = vunpack.c.l.bf16 %v328
    %v482 = vunpack.c.h.bf16 %v328
    %v483 = vunpack.c.l.bf16 %v329
    %v484 = vunpack.c.h.bf16 %v329
    %v485 = vunpack.c.l.bf16 %v330
    %v486 = vunpack.c.h.bf16 %v330
    %v487 = vunpack.c.l.bf16 %v331
    %v488 = vunpack.c.h.bf16 %v331
    %v489 = vunpack.c.l.bf16 %v332
    %v490 = vunpack.c.h.bf16 %v332
    %v491 = vunpack.c.l.bf16 %v333
    %v492 = vunpack.c.h.bf16 %v333
    %v493 = vunpack.c.l.bf16 %v334
    %v494 = vunpack.c.h.bf16 %v334
    %v495 = vunpack.c.l.bf16 %v335
    %v496 = vunpack.c.h.bf16 %v335
    %v497 = vunpack.c.l.bf16 %v336
    %v498 = vunpack.c.h.bf16 %v336
    %v499 = vunpack.c.l.bf16 %v337
    %v500 = vunpack.c.h.bf16 %v337
    %v501 = vunpack.c.l.bf16 %v338
    %v502 = vunpack.c.h.bf16 %v338
    %v503 = vunpack.c.l.bf16 %v339
    %v504 = vunpack.c.h.bf16 %v339
    %v505 = vunpack.c.l.bf16 %v340
    %v506 = vunpack.c.h.bf16 %v340
    %v507 = vunpack.c.l.bf16 %v341
    %v508 = vunpack.c.h.bf16 %v341
    %v509 = vunpack.c.l.bf16 %v342
    %v510 = vunpack.c.h.bf16 %v342
    %v511 = vunpack.c.l.bf16 %v343
    %v512 = vunpack.c.h.bf16 %v343
    %v513 = vunpack.c.l.bf16 %v344
    %v514 = vunpack.c.h.bf16 %v344
    %v515 = vunpack.c.l.bf16 %v345
    %v516 = vunpack.c.h.bf16 %v345
    %v517 = vunpack.c.l.bf16 %v346
    %v518 = vunpack.c.h.bf16 %v346
    %v519 = vunpack.c.l.bf16 %v347
    %v520 = vunpack.c.h.bf16 %v347
    %v521 = vunpack.c.l.bf16 %v348
    %v522 = vunpack.c.h.bf16 %v348
    %v523 = vunpack.c.l.bf16 %v349
    %v524 = vunpack.c.h.bf16 %v349
    %v525 = vunpack.c.l.bf16 %v350
    %v526 = vunpack.c.h.bf16 %v350
    %v527 = vunpack.c.l.bf16 %v351
    %v528 = vunpack.c.h.bf16 %v351
    %v529 = vunpack.c.l.bf16 %v352
    %v530 = vunpack.c.h.bf16 %v352
    %v531 = vunpack.c.l.bf16 %v353
    %v532 = vunpack.c.h.bf16 %v353
    %v533 = vunpack.c.l.bf16 %v354
    %v534 = vunpack.c.h.bf16 %v354
    %v535 = vunpack.c.l.bf16 %v355
    %v536 = vunpack.c.h.bf16 %v355
    %v537 = vunpack.c.l.bf16 %v356
    %v538 = vunpack.c.h.bf16 %v356
    %v539 = vunpack.c.l.bf16 %v357
    %v540 = vunpack.c.h.bf16 %v357
    %v541 = vunpack.c.l.bf16 %v358
    %v542 = vunpack.c.h.bf16 %v358
    %v543 = vunpack.c.l.bf16 %v359
    %v544 = vunpack.c.h.bf16 %v359
    %v545 = vunpack.c.l.bf16 %v360
    %v546 = vunpack.c.h.bf16 %v360
    %v547 = vunpack.c.l.bf16 %v361
    %v548 = vunpack.c.h.bf16 %v361
    %v549 = vunpack.c.l.bf16 %v362
    %v550 = vunpack.c.h.bf16 %v362
    %v551 = vunpack.c.l.bf16 %v363
    %v552 = vunpack.c.h.bf16 %v363
    %v553 = vunpack.c.l.bf16 %v364
    %v554 = vunpack.c.h.bf16 %v364
    %v555 = vunpack.c.l.bf16 %v365
    %v556 = vunpack.c.h.bf16 %v365
    %v557 = vunpack.c.l.bf16 %v366
    %v558 = vunpack.c.h.bf16 %v366
    %v559 = vunpack.c.l.bf16 %v367
    %v560 = vunpack.c.h.bf16 %v367
    %v561 = vunpack.c.l.bf16 %v368
    %v562 = vunpack.c.h.bf16 %v368
    %v563 = vunpack.c.l.bf16 %v369
    %v564 = vunpack.c.h.bf16 %v369
    %v565 = vunpack.c.l.bf16 %v370
    %v566 = vunpack.c.h.bf16 %v370
    %v567 = vunpack.c.l.bf16 %v371
    %v568 = vunpack.c.h.bf16 %v371
    %v569 = vunpack.c.l.bf16 %v372
    %v570 = vunpack.c.h.bf16 %v372
    %v571 = vunpack.c.l.bf16 %v373
    %v572 = vunpack.c.h.bf16 %v373
    %v573 = vunpack.c.l.bf16 %v374
    %v574 = vunpack.c.h.bf16 %v374
    %v575 = vunpack.c.l.bf16 %v375
    %v576 = vunpack.c.h.bf16 %v375
    %v577 = vunpack.c.l.bf16 %v376
    %v578 = vunpack.c.h.bf16 %v376
    %v579 = vunpack.c.l.bf16 %v377
    %v580 = vunpack.c.h.bf16 %v377
    %v581 = vunpack.c.l.bf16 %v378
    %v582 = vunpack.c.h.bf16 %v378
    %v583 = vunpack.c.l.bf16 %v379
    %v584 = vunpack.c.h.bf16 %v379
    %v585 = vunpack.c.l.bf16 %v380
    %v586 = vunpack.c.h.bf16 %v380
    %v587 = vunpack.c.l.bf16 %v381
    %v588 = vunpack.c.h.bf16 %v381
    %v589 = vunpack.c.l.bf16 %v382
    %v590 = vunpack.c.h.bf16 %v382
    %v591 = vunpack.c.l.bf16 %v383
    %v592 = vunpack.c.h.bf16 %v383
    %v593 = vunpack.c.l.bf16 %v384
    %v594 = vunpack.c.h.bf16 %v384
    %v595 = vunpack.c.l.bf16 %v385
    %v596 = vunpack.c.h.bf16 %v385
    %v597 = vunpack.c.l.bf16 %v386
    %v598 = vunpack.c.h.bf16 %v386
    %v599 = vunpack.c.l.bf16 %v387
    %v600 = vunpack.c.h.bf16 %v387
    %v601 = vunpack.c.l.bf16 %v388
    %v602 = vunpack.c.h.bf16 %v388
    %v603 = vunpack.c.l.bf16 %v389
    %v604 = vunpack.c.h.bf16 %v389
    %v605 = vunpack.c.l.bf16 %v390
    %v606 = vunpack.c.h.bf16 %v390
    %v607 = vunpack.c.l.bf16 %v391
    %v608 = vunpack.c.h.bf16 %v391
    %v609 = vunpack.c.l.bf16 %v392
    %v610 = vunpack.c.h.bf16 %v392
    %v611 = vunpack.c.l.bf16 %v393
    %v612 = vunpack.c.h.bf16 %v393
    %v613 = vunpack.c.l.bf16 %v394
    %v614 = vunpack.c.h.bf16 %v394
    %v615 = vunpack.c.l.bf16 %v395
    %v616 = vunpack.c.h.bf16 %v395
    %v617 = vunpack.c.l.bf16 %v396
    %v618 = vunpack.c.h.bf16 %v396
    %v619 = vunpack.c.l.bf16 %v397
    %v620 = vunpack.c.h.bf16 %v397
    %v621 = vunpack.c.l.bf16 %v398
    %v622 = vunpack.c.h.bf16 %v398
    %v623 = vunpack.c.l.bf16 %v399
    %v624 = vunpack.c.h.bf16 %v399
    %v625 = vunpack.c.l.bf16 %v400
    %v626 = vunpack.c.h.bf16 %v400
    %v627 = vunpack.c.l.bf16 %v401
    %v628 = vunpack.c.h.bf16 %v401
    %v629 = vunpack.c.l.bf16 %v402
    %v630 = vunpack.c.h.bf16 %v402
    %v631 = vunpack.c.l.bf16 %v403
    %v632 = vunpack.c.h.bf16 %v403
    %v633 = vunpack.c.l.bf16 %v404
    %v634 = vunpack.c.h.bf16 %v404
    %v635 = vunpack.c.l.bf16 %v405
    %v636 = vunpack.c.h.bf16 %v405
    %v637 = vunpack.c.l.bf16 %v406
    %v638 = vunpack.c.h.bf16 %v406
    %v639 = vunpack.c.l.bf16 %v407
    %v640 = vunpack.c.h.bf16 %v407
    %v641 = vunpack.c.l.bf16 %v408
    %v642 = vunpack.c.h.bf16 %v408
    %v643 = vunpack.c.l.bf16 %v409
    %v644 = vunpack.c.h.bf16 %v409
    %v645 = vunpack.c.l.bf16 %v410
    %v646 = vunpack.c.h.bf16 %v410
    %v647 = vunpack.c.l.bf16 %v411
    %v648 = vunpack.c.h.bf16 %v411
    %v649 = vunpack.c.l.bf16 %v412
    %v650 = vunpack.c.h.bf16 %v412
    %v651 = vunpack.c.l.bf16 %v413
    %v652 = vunpack.c.h.bf16 %v413
    %v653 = vunpack.c.l.bf16 %v414
    %v654 = vunpack.c.h.bf16 %v414
    %v655 = vunpack.c.l.bf16 %v415
    %v656 = vunpack.c.h.bf16 %v415
    %v657 = vunpack.c.l.bf16 %v416
    %v658 = vunpack.c.h.bf16 %v416
    %v659 = vunpack.c.l.bf16 %v417
    %v660 = vunpack.c.h.bf16 %v417
    %v661 = vunpack.c.l.bf16 %v418
    %v662 = vunpack.c.h.bf16 %v418
    %v663 = vunpack.c.l.bf16 %v419
    %v664 = vunpack.c.h.bf16 %v419
    %v665 = vunpack.c.l.bf16 %v420
    %v666 = vunpack.c.h.bf16 %v420
    %v667 = vunpack.c.l.bf16 %v421
    %v668 = vunpack.c.h.bf16 %v421
    %v669 = vunpack.c.l.bf16 %v422
    %v670 = vunpack.c.h.bf16 %v422
    %v671 = vunpack.c.l.bf16 %v423
    %v672 = vunpack.c.h.bf16 %v423
    %v673 = vunpack.c.l.bf16 %v424
    %v674 = vunpack.c.h.bf16 %v424
    %v675 = vunpack.c.l.bf16 %v425
    %v676 = vunpack.c.h.bf16 %v425
    %v677 = vunpack.c.l.bf16 %v426
    %v678 = vunpack.c.h.bf16 %v426
    %v679 = vunpack.c.l.bf16 %v427
    %v680 = vunpack.c.h.bf16 %v427
    %v681 = vunpack.c.l.bf16 %v428
    %v682 = vunpack.c.h.bf16 %v428
    %v683 = vunpack.c.l.bf16 %v429
    %v684 = vunpack.c.h.bf16 %v429
    %v685 = vunpack.c.l.bf16 %v430
    %v686 = vunpack.c.h.bf16 %v430
    %v687 = vld [vmem:[%s6] sm:$0x3]
    %v689 = vlaneseq
    %v690 = vshrl.u32 %v689, 7
    %v691 = vsub.s32 0, %v690
    %v692 = vrot.slane %v687, %v691
    %v693 = vlaneseq
    %v694 = vshrl.u32 %v693, 7
    %v695 = vsub.s32 1, %v694
    %v696 = vrot.slane %v687, %v695
    %699 = vmatprep.subr.mxu0 %v432
    %700 = vmatpush1.msra.mxu0 %v431
    %701 = vmatprep.subr.mxu0 %v434
    %702 = vmatpush1.msra.mxu0 %v433
    %703 = vmatprep.subr.mxu0 %v436
    %704 = vmatpush1.msra.mxu0 %v435
    %705 = vmatprep.subr.mxu0 %v438
    %706 = vmatpush1.msra.mxu0 %v437
    %707 = vmatprep.subr.mxu0 %v440
    %708 = vmatpush1.msra.mxu0 %v439
    %709 = vmatprep.subr.mxu0 %v442
    %710 = vmatpush1.msra.mxu0 %v441
    %711 = vmatprep.subr.mxu0 %v444
    %712 = vmatpush1.msra.mxu0 %v443
    %713 = vmatprep.subr.mxu0 %v446
    %714 = vmatpush1.msra.mxu0 %v445
    %715 = vmatprep.subr.mxu0 %v448
    %716 = vmatpush1.msra.mxu0 %v447
    %717 = vmatprep.subr.mxu0 %v450
    %718 = vmatpush1.msra.mxu0 %v449
    %719 = vmatprep.subr.mxu0 %v452
    %720 = vmatpush1.msra.mxu0 %v451
    %721 = vmatprep.subr.mxu0 %v454
    %722 = vmatpush1.msra.mxu0 %v453
    %723 = vmatprep.subr.mxu0 %v456
    %724 = vmatpush1.msra.mxu0 %v455
    %725 = vmatprep.subr.mxu0 %v458
    %726 = vmatpush1.msra.mxu0 %v457
    %727 = vmatprep.subr.mxu0 %v460
    %728 = vmatpush1.msra.mxu0 %v459
    %729 = vmatprep.subr.mxu0 %v462
    %730 = vmatpush1.msra.mxu0 %v461
    %731 = vmatprep.subr.mxu0 %v464
    %732 = vmatpush1.msra.mxu0 %v463
    %733 = vmatprep.subr.mxu0 %v466
    %734 = vmatpush1.msra.mxu0 %v465
    %735 = vmatprep.subr.mxu0 %v468
    %736 = vmatpush1.msra.mxu0 %v467
    %737 = vmatprep.subr.mxu0 %v470
    %738 = vmatpush1.msra.mxu0 %v469
    %739 = vmatprep.subr.mxu0 %v472
    %740 = vmatpush1.msra.mxu0 %v471
    %741 = vmatprep.subr.mxu0 %v474
    %742 = vmatpush1.msra.mxu0 %v473
    %743 = vmatprep.subr.mxu0 %v476
    %744 = vmatpush1.msra.mxu0 %v475
    %745 = vmatprep.subr.mxu0 %v478
    %746 = vmatpush1.msra.mxu0 %v477
    %747 = vmatprep.subr.mxu0 %v480
    %748 = vmatpush1.msra.mxu0 %v479
    %749 = vmatprep.subr.mxu0 %v482
    %750 = vmatpush1.msra.mxu0 %v481
    %751 = vmatprep.subr.mxu0 %v484
    %752 = vmatpush1.msra.mxu0 %v483
    %753 = vmatprep.subr.mxu0 %v486
    %754 = vmatpush1.msra.mxu0 %v485
    %755 = vmatprep.subr.mxu0 %v488
    %756 = vmatpush1.msra.mxu0 %v487
    %757 = vmatprep.subr.mxu0 %v490
    %758 = vmatpush1.msra.mxu0 %v489
    %759 = vmatprep.subr.mxu0 %v492
    %760 = vmatpush1.msra.mxu0 %v491
    %761 = vmatprep.subr.mxu0 %v494
    %762 = vmatpush1.msra.mxu0 %v493
    %763 = vmatprep.mubr.f32.mxu0 %v288
    %764 = vmatmul.mubr.f32.gmra.mrb[0].mxu0 %v287
    %v765 = vpop.f32.mrb[0].mxu0
    %v766 = vadd.f32 %v692, %v765
    %v767 = vpop.f32.mrb[0].mxu0
    %v768 = vadd.f32 %v696, %v767
    %769 = vmatprep.mubr.f32.mxu0 %v296
    %770 = vmatmul.mubr.f32.gmra.mrb[0].mxu0 %v295
    %v771 = vpop.f32.mrb[0].mxu0
    %v772 = vadd.f32 %v692, %v771
    %v773 = vpop.f32.mrb[0].mxu0
    %v774 = vadd.f32 %v696, %v773
    %775 = vdwg.mxu0
    %776 = vmatprep.subr.mxu0 %v496
    %777 = vmatpush1.msra.mxu0 %v495
    %778 = vmatprep.subr.mxu0 %v498
    %779 = vmatpush1.msra.mxu0 %v497
    %780 = vmatprep.subr.mxu0 %v500
    %781 = vmatpush1.msra.mxu0 %v499
    %782 = vmatprep.subr.mxu0 %v502
    %783 = vmatpush1.msra.mxu0 %v501
    %784 = vmatprep.subr.mxu0 %v504
    %785 = vmatpush1.msra.mxu0 %v503
    %786 = vmatprep.subr.mxu0 %v506
    %787 = vmatpush1.msra.mxu0 %v505
    %788 = vmatprep.subr.mxu0 %v508
    %789 = vmatpush1.msra.mxu0 %v507
    %790 = vmatprep.subr.mxu0 %v510
    %791 = vmatpush1.msra.mxu0 %v509
    %792 = vmatprep.subr.mxu0 %v512
    %793 = vmatpush1.msra.mxu0 %v511
    %794 = vmatprep.subr.mxu0 %v514
    %795 = vmatpush1.msra.mxu0 %v513
    %796 = vmatprep.subr.mxu0 %v516
    %797 = vmatpush1.msra.mxu0 %v515
    %798 = vmatprep.subr.mxu0 %v518
    %799 = vmatpush1.msra.mxu0 %v517
    %800 = vmatprep.subr.mxu0 %v520
    %801 = vmatpush1.msra.mxu0 %v519
    %802 = vmatprep.subr.mxu0 %v522
    %803 = vmatpush1.msra.mxu0 %v521
    %804 = vmatprep.subr.mxu0 %v524
    %805 = vmatpush1.msra.mxu0 %v523
    %806 = vmatprep.subr.mxu0 %v526
    %807 = vmatpush1.msra.mxu0 %v525
    %808 = vmatprep.subr.mxu0 %v528
    %809 = vmatpush1.msra.mxu0 %v527
    %810 = vmatprep.subr.mxu0 %v530
    %811 = vmatpush1.msra.mxu0 %v529
    %812 = vmatprep.subr.mxu0 %v532
    %813 = vmatpush1.msra.mxu0 %v531
    %814 = vmatprep.subr.mxu0 %v534
    %815 = vmatpush1.msra.mxu0 %v533
    %816 = vmatprep.subr.mxu0 %v536
    %817 = vmatpush1.msra.mxu0 %v535
    %818 = vmatprep.subr.mxu0 %v538
    %819 = vmatpush1.msra.mxu0 %v537
    %820 = vmatprep.subr.mxu0 %v540
    %821 = vmatpush1.msra.mxu0 %v539
    %822 = vmatprep.subr.mxu0 %v542
    %823 = vmatpush1.msra.mxu0 %v541
    %824 = vmatprep.subr.mxu0 %v544
    %825 = vmatpush1.msra.mxu0 %v543
    %826 = vmatprep.subr.mxu0 %v546
    %827 = vmatpush1.msra.mxu0 %v545
    %828 = vmatprep.subr.mxu0 %v548
    %829 = vmatpush1.msra.mxu0 %v547
    %830 = vmatprep.subr.mxu0 %v550
    %831 = vmatpush1.msra.mxu0 %v549
    %832 = vmatprep.subr.mxu0 %v552
    %833 = vmatpush1.msra.mxu0 %v551
    %834 = vmatprep.subr.mxu0 %v554
    %835 = vmatpush1.msra.mxu0 %v553
    %836 = vmatprep.subr.mxu0 %v556
    %837 = vmatpush1.msra.mxu0 %v555
    %838 = vmatprep.subr.mxu0 %v558
    %839 = vmatpush1.msra.mxu0 %v557
    %840 = vmatprep.mubr.f32.mxu0 %v290
    %841 = vmatmul.mubr.f32.gmra.mrb[0].mxu0 %v289
    %v842 = vpop.f32.mrb[0].mxu0
    %v843 = vadd.f32 %v766, %v842
    %v844 = vpop.f32.mrb[0].mxu0
    %v845 = vadd.f32 %v768, %v844
    %846 = vmatprep.mubr.f32.mxu0 %v298
    %847 = vmatmul.mubr.f32.gmra.mrb[0].mxu0 %v297
    %v848 = vpop.f32.mrb[0].mxu0
    %v849 = vadd.f32 %v772, %v848
    %v850 = vpop.f32.mrb[0].mxu0
    %v851 = vadd.f32 %v774, %v850
    %852 = vdwg.mxu0
    %853 = vmatprep.subr.mxu0 %v560
    %854 = vmatpush1.msra.mxu0 %v559
    %855 = vmatprep.subr.mxu0 %v562
    %856 = vmatpush1.msra.mxu0 %v561
    %857 = vmatprep.subr.mxu0 %v564
    %858 = vmatpush1.msra.mxu0 %v563
    %859 = vmatprep.subr.mxu0 %v566
    %860 = vmatpush1.msra.mxu0 %v565
    %861 = vmatprep.subr.mxu0 %v568
    %862 = vmatpush1.msra.mxu0 %v567
    %863 = vmatprep.subr.mxu0 %v570
    %864 = vmatpush1.msra.mxu0 %v569
    %865 = vmatprep.subr.mxu0 %v572
    %866 = vmatpush1.msra.mxu0 %v571
    %867 = vmatprep.subr.mxu0 %v574
    %868 = vmatpush1.msra.mxu0 %v573
    %869 = vmatprep.subr.mxu0 %v576
    %870 = vmatpush1.msra.mxu0 %v575
    %871 = vmatprep.subr.mxu0 %v578
    %872 = vmatpush1.msra.mxu0 %v577
    %873 = vmatprep.subr.mxu0 %v580
    %874 = vmatpush1.msra.mxu0 %v579
    %875 = vmatprep.subr.mxu0 %v582
    %876 = vmatpush1.msra.mxu0 %v581
    %877 = vmatprep.subr.mxu0 %v584
    %878 = vmatpush1.msra.mxu0 %v583
    %879 = vmatprep.subr.mxu0 %v586
    %880 = vmatpush1.msra.mxu0 %v585
    %881 = vmatprep.subr.mxu0 %v588
    %882 = vmatpush1.msra.mxu0 %v587
    %883 = vmatprep.subr.mxu0 %v590
    %884 = vmatpush1.msra.mxu0 %v589
    %885 = vmatprep.subr.mxu0 %v592
    %886 = vmatpush1.msra.mxu0 %v591
    %887 = vmatprep.subr.mxu0 %v594
    %888 = vmatpush1.msra.mxu0 %v593
    %889 = vmatprep.subr.mxu0 %v596
    %890 = vmatpush1.msra.mxu0 %v595
    %891 = vmatprep.subr.mxu0 %v598
    %892 = vmatpush1.msra.mxu0 %v597
    %893 = vmatprep.subr.mxu0 %v600
    %894 = vmatpush1.msra.mxu0 %v599
    %895 = vmatprep.subr.mxu0 %v602
    %896 = vmatpush1.msra.mxu0 %v601
    %897 = vmatprep.subr.mxu0 %v604
    %898 = vmatpush1.msra.mxu0 %v603
    %899 = vmatprep.subr.mxu0 %v606
    %900 = vmatpush1.msra.mxu0 %v605
    %901 = vmatprep.subr.mxu0 %v608
    %902 = vmatpush1.msra.mxu0 %v607
    %903 = vmatprep.subr.mxu0 %v610
    %904 = vmatpush1.msra.mxu0 %v609
    %905 = vmatprep.subr.mxu0 %v612
    %906 = vmatpush1.msra.mxu0 %v611
    %907 = vmatprep.subr.mxu0 %v614
    %908 = vmatpush1.msra.mxu0 %v613
    %909 = vmatprep.subr.mxu0 %v616
    %910 = vmatpush1.msra.mxu0 %v615
    %911 = vmatprep.subr.mxu0 %v618
    %912 = vmatpush1.msra.mxu0 %v617
    %913 = vmatprep.subr.mxu0 %v620
    %914 = vmatpush1.msra.mxu0 %v619
    %915 = vmatprep.subr.mxu0 %v622
    %916 = vmatpush1.msra.mxu0 %v621
    %917 = vmatprep.mubr.f32.mxu0 %v292
    %918 = vmatmul.mubr.f32.gmra.mrb[0].mxu0 %v291
    %v919 = vpop.f32.mrb[0].mxu0
    %v920 = vadd.f32 %v843, %v919
    %v921 = vpop.f32.mrb[0].mxu0
    %v922 = vadd.f32 %v845, %v921
    %923 = vmatprep.mubr.f32.mxu0 %v300
    %924 = vmatmul.mubr.f32.gmra.mrb[0].mxu0 %v299
    %v925 = vpop.f32.mrb[0].mxu0
    %v926 = vadd.f32 %v849, %v925
    %v927 = vpop.f32.mrb[0].mxu0
    %v928 = vadd.f32 %v851, %v927
    %929 = vdwg.mxu0
    %930 = vmatprep.subr.mxu0 %v624
    %931 = vmatpush1.msra.mxu0 %v623
    %932 = vmatprep.subr.mxu0 %v626
    %933 = vmatpush1.msra.mxu0 %v625
    %934 = vmatprep.subr.mxu0 %v628
    %935 = vmatpush1.msra.mxu0 %v627
    %936 = vmatprep.subr.mxu0 %v630
    %937 = vmatpush1.msra.mxu0 %v629
    %938 = vmatprep.subr.mxu0 %v632
    %939 = vmatpush1.msra.mxu0 %v631
    %940 = vmatprep.subr.mxu0 %v634
    %941 = vmatpush1.msra.mxu0 %v633
    %942 = vmatprep.subr.mxu0 %v636
    %943 = vmatpush1.msra.mxu0 %v635
    %944 = vmatprep.subr.mxu0 %v638
    %945 = vmatpush1.msra.mxu0 %v637
    %946 = vmatprep.subr.mxu0 %v640
    %947 = vmatpush1.msra.mxu0 %v639
    %948 = vmatprep.subr.mxu0 %v642
    %949 = vmatpush1.msra.mxu0 %v641
    %950 = vmatprep.subr.mxu0 %v644
    %951 = vmatpush1.msra.mxu0 %v643
    %952 = vmatprep.subr.mxu0 %v646
    %953 = vmatpush1.msra.mxu0 %v645
    %954 = vmatprep.subr.mxu0 %v648
    %955 = vmatpush1.msra.mxu0 %v647
    %956 = vmatprep.subr.mxu0 %v650
    %957 = vmatpush1.msra.mxu0 %v649
    %958 = vmatprep.subr.mxu0 %v652
    %959 = vmatpush1.msra.mxu0 %v651
    %960 = vmatprep.subr.mxu0 %v654
    %961 = vmatpush1.msra.mxu0 %v653
    %962 = vmatprep.subr.mxu0 %v656
    %963 = vmatpush1.msra.mxu0 %v655
    %964 = vmatprep.subr.mxu0 %v658
    %965 = vmatpush1.msra.mxu0 %v657
    %966 = vmatprep.subr.mxu0 %v660
    %967 = vmatpush1.msra.mxu0 %v659
    %968 = vmatprep.subr.mxu0 %v662
    %969 = vmatpush1.msra.mxu0 %v661
    %970 = vmatprep.subr.mxu0 %v664
    %971 = vmatpush1.msra.mxu0 %v663
    %972 = vmatprep.subr.mxu0 %v666
    %973 = vmatpush1.msra.mxu0 %v665
    %974 = vmatprep.subr.mxu0 %v668
    %975 = vmatpush1.msra.mxu0 %v667
    %976 = vmatprep.subr.mxu0 %v670
    %977 = vmatpush1.msra.mxu0 %v669
    %978 = vmatprep.subr.mxu0 %v672
    %979 = vmatpush1.msra.mxu0 %v671
    %980 = vmatprep.subr.mxu0 %v674
    %981 = vmatpush1.msra.mxu0 %v673
    %982 = vmatprep.subr.mxu0 %v676
    %983 = vmatpush1.msra.mxu0 %v675
    %984 = vmatprep.subr.mxu0 %v678
    %985 = vmatpush1.msra.mxu0 %v677
    %986 = vmatprep.subr.mxu0 %v680
    %987 = vmatpush1.msra.mxu0 %v679
    %988 = vmatprep.subr.mxu0 %v682
    %989 = vmatpush1.msra.mxu0 %v681
    %990 = vmatprep.subr.mxu0 %v684
    %991 = vmatpush1.msra.mxu0 %v683
    %992 = vmatprep.subr.mxu0 %v686
    %993 = vmatpush1.msra.mxu0 %v685
    %994 = vmatprep.mubr.f32.mxu0 %v294
    %995 = vmatmul.mubr.f32.gmra.mrb[0].mxu0 %v293
    %v996 = vpop.f32.mrb[0].mxu0
    %v997 = vadd.f32 %v920, %v996
    %v998 = vpop.f32.mrb[0].mxu0
    %v999 = vadd.f32 %v922, %v998
    %1000 = vmatprep.mubr.f32.mxu0 %v302
    %1001 = vmatmul.mubr.f32.gmra.mrb[0].mxu0 %v301
    %v1002 = vpop.f32.mrb[0].mxu0
    %v1003 = vadd.f32 %v926, %v1002
    %v1004 = vpop.f32.mrb[0].mxu0
    %v1005 = vadd.f32 %v928, %v1004
    %1006 = vdwg.mxu0
    %v1007 = vld [vmem:[%s7] sm:$0xf]
    %v1008 = vld [vmem:[%s7 + $0x4] sm:$0xf]
    %v1009 = vld [vmem:[%s7 + $0x8] sm:$0xf]
    %v1010 = vld [vmem:[%s7 + $0xc] sm:$0xf]
    %v1011 = vld [vmem:[%s7 + $0x10] sm:$0xf]
    %v1012 = vld [vmem:[%s7 + $0x14] sm:$0xf]
    %v1013 = vld [vmem:[%s7 + $0x18] sm:$0xf]
    %v1014 = vld [vmem:[%s7 + $0x1c] sm:$0xf]
    %v1015 = vld [vmem:[%s7 + $0x20] sm:$0xf]
    %v1016 = vld [vmem:[%s7 + $0x24] sm:$0xf]
    %v1017 = vld [vmem:[%s7 + $0x28] sm:$0xf]
    %v1018 = vld [vmem:[%s7 + $0x2c] sm:$0xf]
    %v1019 = vld [vmem:[%s7 + $0x30] sm:$0xf]
    %v1020 = vld [vmem:[%s7 + $0x34] sm:$0xf]
    %v1021 = vld [vmem:[%s7 + $0x38] sm:$0xf]
    %v1022 = vld [vmem:[%s7 + $0x3c] sm:$0xf]
    %v1023 = vld [vmem:[%s7 + $0x40] sm:$0xf]
    %v1024 = vld [vmem:[%s7 + $0x44] sm:$0xf]
    %v1025 = vld [vmem:[%s7 + $0x48] sm:$0xf]
    %v1026 = vld [vmem:[%s7 + $0x4c] sm:$0xf]
    %v1027 = vld [vmem:[%s7 + $0x50] sm:$0xf]
    %v1028 = vld [vmem:[%s7 + $0x54] sm:$0xf]
    %v1029 = vld [vmem:[%s7 + $0x58] sm:$0xf]
    %v1030 = vld [vmem:[%s7 + $0x5c] sm:$0xf]
    %v1031 = vld [vmem:[%s7 + $0x60] sm:$0xf]
    %v1032 = vld [vmem:[%s7 + $0x64] sm:$0xf]
    %v1033 = vld [vmem:[%s7 + $0x68] sm:$0xf]
    %v1034 = vld [vmem:[%s7 + $0x6c] sm:$0xf]
    %v1035 = vld [vmem:[%s7 + $0x70] sm:$0xf]
    %v1036 = vld [vmem:[%s7 + $0x74] sm:$0xf]
    %v1037 = vld [vmem:[%s7 + $0x78] sm:$0xf]
    %v1038 = vld [vmem:[%s7 + $0x7c] sm:$0xf]
    %v1039 = vld [vmem:[%s7 + $0x80] sm:$0xf]
    %v1040 = vld [vmem:[%s7 + $0x84] sm:$0xf]
    %v1041 = vld [vmem:[%s7 + $0x88] sm:$0xf]
    %v1042 = vld [vmem:[%s7 + $0x8c] sm:$0xf]
    %v1043 = vld [vmem:[%s7 + $0x90] sm:$0xf]
    %v1044 = vld [vmem:[%s7 + $0x94] sm:$0xf]
    %v1045 = vld [vmem:[%s7 + $0x98] sm:$0xf]
    %v1046 = vld [vmem:[%s7 + $0x9c] sm:$0xf]
    %v1047 = vld [vmem:[%s7 + $0xa0] sm:$0xf]
    %v1048 = vld [vmem:[%s7 + $0xa4] sm:$0xf]
    %v1049 = vld [vmem:[%s7 + $0xa8] sm:$0xf]
    %v1050 = vld [vmem:[%s7 + $0xac] sm:$0xf]
    %v1051 = vld [vmem:[%s7 + $0xb0] sm:$0xf]
    %v1052 = vld [vmem:[%s7 + $0xb4] sm:$0xf]
    %v1053 = vld [vmem:[%s7 + $0xb8] sm:$0xf]
    %v1054 = vld [vmem:[%s7 + $0xbc] sm:$0xf]
    %v1055 = vld [vmem:[%s7 + $0xc0] sm:$0xf]
    %v1056 = vld [vmem:[%s7 + $0xc4] sm:$0xf]
    %v1057 = vld [vmem:[%s7 + $0xc8] sm:$0xf]
    %v1058 = vld [vmem:[%s7 + $0xcc] sm:$0xf]
    %v1059 = vld [vmem:[%s7 + $0xd0] sm:$0xf]
    %v1060 = vld [vmem:[%s7 + $0xd4] sm:$0xf]
    %v1061 = vld [vmem:[%s7 + $0xd8] sm:$0xf]
    %v1062 = vld [vmem:[%s7 + $0xdc] sm:$0xf]
    %v1063 = vld [vmem:[%s7 + $0xe0] sm:$0xf]
    %v1064 = vld [vmem:[%s7 + $0xe4] sm:$0xf]
    %v1065 = vld [vmem:[%s7 + $0xe8] sm:$0xf]
    %v1066 = vld [vmem:[%s7 + $0xec] sm:$0xf]
    %v1067 = vld [vmem:[%s7 + $0xf0] sm:$0xf]
    %v1068 = vld [vmem:[%s7 + $0xf4] sm:$0xf]
    %v1069 = vld [vmem:[%s7 + $0xf8] sm:$0xf]
    %v1070 = vld [vmem:[%s7 + $0xfc] sm:$0xf]
    %v1071 = vunpack.c.l.bf16 %v1007
    %v1072 = vunpack.c.l.bf16 %v1008
    %v1073 = vunpack.c.l.bf16 %v1009
    %v1074 = vunpack.c.l.bf16 %v1010
    %v1075 = vunpack.c.l.bf16 %v1011
    %v1076 = vunpack.c.l.bf16 %v1012
    %v1077 = vunpack.c.l.bf16 %v1013
    %v1078 = vunpack.c.l.bf16 %v1014
    %v1079 = vunpack.c.l.bf16 %v1015
    %v1080 = vunpack.c.l.bf16 %v1016
    %v1081 = vunpack.c.l.bf16 %v1017
    %v1082 = vunpack.c.l.bf16 %v1018
    %v1083 = vunpack.c.l.bf16 %v1019
    %v1084 = vunpack.c.l.bf16 %v1020
    %v1085 = vunpack.c.l.bf16 %v1021
    %v1086 = vunpack.c.l.bf16 %v1022
    %v1087 = vunpack.c.l.bf16 %v1023
    %v1088 = vunpack.c.l.bf16 %v1024
    %v1089 = vunpack.c.l.bf16 %v1025
    %v1090 = vunpack.c.l.bf16 %v1026
    %v1091 = vunpack.c.l.bf16 %v1027
    %v1092 = vunpack.c.l.bf16 %v1028
    %v1093 = vunpack.c.l.bf16 %v1029
    %v1094 = vunpack.c.l.bf16 %v1030
    %v1095 = vunpack.c.l.bf16 %v1031
    %v1096 = vunpack.c.l.bf16 %v1032
    %v1097 = vunpack.c.l.bf16 %v1033
    %v1098 = vunpack.c.l.bf16 %v1034
    %v1099 = vunpack.c.l.bf16 %v1035
    %v1100 = vunpack.c.l.bf16 %v1036
    %v1101 = vunpack.c.l.bf16 %v1037
    %v1102 = vunpack.c.l.bf16 %v1038
    %v1103 = vunpack.c.l.bf16 %v1039
    %v1104 = vunpack.c.l.bf16 %v1040
    %v1105 = vunpack.c.l.bf16 %v1041
    %v1106 = vunpack.c.l.bf16 %v1042
    %v1107 = vunpack.c.l.bf16 %v1043
    %v1108 = vunpack.c.l.bf16 %v1044
    %v1109 = vunpack.c.l.bf16 %v1045
    %v1110 = vunpack.c.l.bf16 %v1046
    %v1111 = vunpack.c.l.bf16 %v1047
    %v1112 = vunpack.c.l.bf16 %v1048
    %v1113 = vunpack.c.l.bf16 %v1049
    %v1114 = vunpack.c.l.bf16 %v1050
    %v1115 = vunpack.c.l.bf16 %v1051
    %v1116 = vunpack.c.l.bf16 %v1052
    %v1117 = vunpack.c.l.bf16 %v1053
    %v1118 = vunpack.c.l.bf16 %v1054
    %v1119 = vunpack.c.l.bf16 %v1055
    %v1120 = vunpack.c.l.bf16 %v1056
    %v1121 = vunpack.c.l.bf16 %v1057
    %v1122 = vunpack.c.l.bf16 %v1058
    %v1123 = vunpack.c.l.bf16 %v1059
    %v1124 = vunpack.c.l.bf16 %v1060
    %v1125 = vunpack.c.l.bf16 %v1061
    %v1126 = vunpack.c.l.bf16 %v1062
    %v1127 = vunpack.c.l.bf16 %v1063
    %v1128 = vunpack.c.l.bf16 %v1064
    %v1129 = vunpack.c.l.bf16 %v1065
    %v1130 = vunpack.c.l.bf16 %v1066
    %v1131 = vunpack.c.l.bf16 %v1067
    %v1132 = vunpack.c.l.bf16 %v1068
    %v1133 = vunpack.c.l.bf16 %v1069
    %v1134 = vunpack.c.l.bf16 %v1070
    %1135 = vmatprep.subr.mxu0 0.0
    %1136 = vmatpush1.msra.mxu0 %v1103
    %1137 = vmatprep.subr.mxu0 0.0
    %1138 = vmatpush1.msra.mxu0 %v1104
    %1139 = vmatprep.subr.mxu0 0.0
    %1140 = vmatpush1.msra.mxu0 %v1105
    %1141 = vmatprep.subr.mxu0 0.0
    %1142 = vmatpush1.msra.mxu0 %v1106
    %1143 = vmatprep.subr.mxu0 0.0
    %1144 = vmatpush1.msra.mxu0 %v1107
    %1145 = vmatprep.subr.mxu0 0.0
    %1146 = vmatpush1.msra.mxu0 %v1108
    %1147 = vmatprep.subr.mxu0 0.0
    %1148 = vmatpush1.msra.mxu0 %v1109
    %1149 = vmatprep.subr.mxu0 0.0
    %1150 = vmatpush1.msra.mxu0 %v1110
    %1151 = vmatprep.subr.mxu0 0.0
    %1152 = vmatpush1.msra.mxu0 %v1111
    %1153 = vmatprep.subr.mxu0 0.0
    %1154 = vmatpush1.msra.mxu0 %v1112
    %1155 = vmatprep.subr.mxu0 0.0
    %1156 = vmatpush1.msra.mxu0 %v1113
    %1157 = vmatprep.subr.mxu0 0.0
    %1158 = vmatpush1.msra.mxu0 %v1114
    %1159 = vmatprep.subr.mxu0 0.0
    %1160 = vmatpush1.msra.mxu0 %v1115
    %1161 = vmatprep.subr.mxu0 0.0
    %1162 = vmatpush1.msra.mxu0 %v1116
    %1163 = vmatprep.subr.mxu0 0.0
    %1164 = vmatpush1.msra.mxu0 %v1117
    %1165 = vmatprep.subr.mxu0 0.0
    %1166 = vmatpush1.msra.mxu0 %v1118
    %1167 = vmatprep.subr.mxu0 0.0
    %1168 = vmatpush1.msra.mxu0 %v1119
    %1169 = vmatprep.subr.mxu0 0.0
    %1170 = vmatpush1.msra.mxu0 %v1120
    %1171 = vmatprep.subr.mxu0 0.0
    %1172 = vmatpush1.msra.mxu0 %v1121
    %1173 = vmatprep.subr.mxu0 0.0
    %1174 = vmatpush1.msra.mxu0 %v1122
    %1175 = vmatprep.subr.mxu0 0.0
    %1176 = vmatpush1.msra.mxu0 %v1123
    %1177 = vmatprep.subr.mxu0 0.0
    %1178 = vmatpush1.msra.mxu0 %v1124
    %1179 = vmatprep.subr.mxu0 0.0
    %1180 = vmatpush1.msra.mxu0 %v1125
    %1181 = vmatprep.subr.mxu0 0.0
    %1182 = vmatpush1.msra.mxu0 %v1126
    %1183 = vmatprep.subr.mxu0 0.0
    %1184 = vmatpush1.msra.mxu0 %v1127
    %1185 = vmatprep.subr.mxu0 0.0
    %1186 = vmatpush1.msra.mxu0 %v1128
    %1187 = vmatprep.subr.mxu0 0.0
    %1188 = vmatpush1.msra.mxu0 %v1129
    %1189 = vmatprep.subr.mxu0 0.0
    %1190 = vmatpush1.msra.mxu0 %v1130
    %1191 = vmatprep.subr.mxu0 0.0
    %1192 = vmatpush1.msra.mxu0 %v1131
    %1193 = vmatprep.subr.mxu0 0.0
    %1194 = vmatpush1.msra.mxu0 %v1132
    %1195 = vmatprep.subr.mxu0 0.0
    %1196 = vmatpush1.msra.mxu0 %v1133
    %1197 = vmatprep.subr.mxu0 0.0
    %1198 = vmatpush1.msra.mxu0 %v1134
    %1199 = vmatprep.mubr.f32.mxu0 %v999
    %1200 = vmatmul.mubr.f32.gmra.mrb[0].mxu0 %v997
    %v1201 = vpop.f32.mrb[0].mxu0
    %v1202 = vadd.f32 0.0, %v1201
    %v1203 = vpop.f32.mrb[0].mxu0
    %1204 = vmatprep.mubr.f32.mxu0 %v1005
    %1205 = vmatmul.mubr.f32.gmra.mrb[0].mxu0 %v1003
    %v1206 = vpop.f32.mrb[0].mxu0
    %v1207 = vadd.f32 0.0, %v1206
    %v1208 = vpop.f32.mrb[0].mxu0
    %1209 = vdwg.mxu0
    %1210 = vmatprep.subr.mxu0 0.0
    %1211 = vmatpush1.msra.mxu0 %v1071
    %1212 = vmatprep.subr.mxu0 0.0
    %1213 = vmatpush1.msra.mxu0 %v1072
    %1214 = vmatprep.subr.mxu0 0.0
    %1215 = vmatpush1.msra.mxu0 %v1073
    %1216 = vmatprep.subr.mxu0 0.0
    %1217 = vmatpush1.msra.mxu0 %v1074
    %1218 = vmatprep.subr.mxu0 0.0
    %1219 = vmatpush1.msra.mxu0 %v1075
    %1220 = vmatprep.subr.mxu0 0.0
    %1221 = vmatpush1.msra.mxu0 %v1076
    %1222 = vmatprep.subr.mxu0 0.0
    %1223 = vmatpush1.msra.mxu0 %v1077
    %1224 = vmatprep.subr.mxu0 0.0
    %1225 = vmatpush1.msra.mxu0 %v1078
    %1226 = vmatprep.subr.mxu0 0.0
    %1227 = vmatpush1.msra.mxu0 %v1079
    %1228 = vmatprep.subr.mxu0 0.0
    %1229 = vmatpush1.msra.mxu0 %v1080
    %1230 = vmatprep.subr.mxu0 0.0
    %1231 = vmatpush1.msra.mxu0 %v1081
    %1232 = vmatprep.subr.mxu0 0.0
    %1233 = vmatpush1.msra.mxu0 %v1082
    %1234 = vmatprep.subr.mxu0 0.0
    %1235 = vmatpush1.msra.mxu0 %v1083
    %1236 = vmatprep.subr.mxu0 0.0
    %1237 = vmatpush1.msra.mxu0 %v1084
    %1238 = vmatprep.subr.mxu0 0.0
    %1239 = vmatpush1.msra.mxu0 %v1085
    %1240 = vmatprep.subr.mxu0 0.0
    %1241 = vmatpush1.msra.mxu0 %v1086
    %1242 = vmatprep.subr.mxu0 0.0
    %1243 = vmatpush1.msra.mxu0 %v1087
    %1244 = vmatprep.subr.mxu0 0.0
    %1245 = vmatpush1.msra.mxu0 %v1088
    %1246 = vmatprep.subr.mxu0 0.0
    %1247 = vmatpush1.msra.mxu0 %v1089
    %1248 = vmatprep.subr.mxu0 0.0
    %1249 = vmatpush1.msra.mxu0 %v1090
    %1250 = vmatprep.subr.mxu0 0.0
    %1251 = vmatpush1.msra.mxu0 %v1091
    %1252 = vmatprep.subr.mxu0 0.0
    %1253 = vmatpush1.msra.mxu0 %v1092
    %1254 = vmatprep.subr.mxu0 0.0
    %1255 = vmatpush1.msra.mxu0 %v1093
    %1256 = vmatprep.subr.mxu0 0.0
    %1257 = vmatpush1.msra.mxu0 %v1094
    %1258 = vmatprep.subr.mxu0 0.0
    %1259 = vmatpush1.msra.mxu0 %v1095
    %1260 = vmatprep.subr.mxu0 0.0
    %1261 = vmatpush1.msra.mxu0 %v1096
    %1262 = vmatprep.subr.mxu0 0.0
    %1263 = vmatpush1.msra.mxu0 %v1097
    %1264 = vmatprep.subr.mxu0 0.0
    %1265 = vmatpush1.msra.mxu0 %v1098
    %1266 = vmatprep.subr.mxu0 0.0
    %1267 = vmatpush1.msra.mxu0 %v1099
    %1268 = vmatprep.subr.mxu0 0.0
    %1269 = vmatpush1.msra.mxu0 %v1100
    %1270 = vmatprep.subr.mxu0 0.0
    %1271 = vmatpush1.msra.mxu0 %v1101
    %1272 = vmatprep.subr.mxu0 0.0
    %1273 = vmatpush1.msra.mxu0 %v1102
    %1274 = vmatprep.mubr.f32.mxu0 %v279
    %1275 = vmatmul.mubr.f32.gmra.mrb[0].mxu0 %v277
    %v1276 = vpop.f32.mrb[0].mxu0
    %v1277 = vadd.f32 %v1202, %v1276
    %v1278 = vpop.f32.mrb[0].mxu0
    %1279 = vmatprep.mubr.f32.mxu0 %v285
    %1280 = vmatmul.mubr.f32.gmra.mrb[0].mxu0 %v283
    %v1281 = vpop.f32.mrb[0].mxu0
    %v1282 = vadd.f32 %v1207, %v1281
    %v1283 = vpop.f32.mrb[0].mxu0
    %1284 = vdwg.mxu0
    %v1285 = vld [vmem:[#allocation6] sm:$0x1]
    %v1287 = vlaneseq
    %v1288 = vshrl.u32 %v1287, 7
    %v1289 = vsub.s32 0, %v1288
    %v1290 = vrot.slane %v1285, %v1289
    %v1292 = vadd.f32 %v1277, %v1290
    %v1293 = vadd.f32 %v1282, %v1290
    %v1294 = vmax.f32 %v1292, 0.0
    %v1295 = vmax.f32 %v1293, 0.0
    %v1296 = vld [vmem:[%s9] sm:$0xff]
    %v1297 = vld [vmem:[%s9 + $0x8] sm:$0xff]
    %v1298 = vld [vmem:[%s9 + $0x10] sm:$0xff]
    %v1299 = vld [vmem:[%s9 + $0x18] sm:$0xff]
    %v1300 = vld [vmem:[%s9 + $0x20] sm:$0xff]
    %v1301 = vld [vmem:[%s9 + $0x28] sm:$0xff]
    %v1302 = vld [vmem:[%s9 + $0x30] sm:$0xff]
    %v1303 = vld [vmem:[%s9 + $0x38] sm:$0xff]
    %v1304 = vld [vmem:[%s9 + $0x40] sm:$0xff]
    %v1305 = vld [vmem:[%s9 + $0x48] sm:$0xff]
    %v1306 = vld [vmem:[%s9 + $0x50] sm:$0xff]
    %v1307 = vld [vmem:[%s9 + $0x58] sm:$0xff]
    %v1308 = vld [vmem:[%s9 + $0x60] sm:$0xff]
    %v1309 = vld [vmem:[%s9 + $0x68] sm:$0xff]
    %v1310 = vld [vmem:[%s9 + $0x70] sm:$0xff]
    %v1311 = vld [vmem:[%s9 + $0x78] sm:$0xff]
    %v1312 = vunpack.c.l.bf16 %v1296
    %v1313 = vunpack.c.h.bf16 %v1296
    %v1314 = vunpack.c.l.bf16 %v1297
    %v1315 = vunpack.c.h.bf16 %v1297
    %v1316 = vunpack.c.l.bf16 %v1298
    %v1317 = vunpack.c.h.bf16 %v1298
    %v1318 = vunpack.c.l.bf16 %v1299
    %v1319 = vunpack.c.h.bf16 %v1299
    %v1320 = vunpack.c.l.bf16 %v1300
    %v1321 = vunpack.c.h.bf16 %v1300
    %v1322 = vunpack.c.l.bf16 %v1301
    %v1323 = vunpack.c.h.bf16 %v1301
    %v1324 = vunpack.c.l.bf16 %v1302
    %v1325 = vunpack.c.h.bf16 %v1302
    %v1326 = vunpack.c.l.bf16 %v1303
    %v1327 = vunpack.c.h.bf16 %v1303
    %v1328 = vunpack.c.l.bf16 %v1304
    %v1329 = vunpack.c.h.bf16 %v1304
    %v1330 = vunpack.c.l.bf16 %v1305
    %v1331 = vunpack.c.h.bf16 %v1305
    %v1332 = vunpack.c.l.bf16 %v1306
    %v1333 = vunpack.c.h.bf16 %v1306
    %v1334 = vunpack.c.l.bf16 %v1307
    %v1335 = vunpack.c.h.bf16 %v1307
    %v1336 = vunpack.c.l.bf16 %v1308
    %v1337 = vunpack.c.h.bf16 %v1308
    %v1338 = vunpack.c.l.bf16 %v1309
    %v1339 = vunpack.c.h.bf16 %v1309
    %v1340 = vunpack.c.l.bf16 %v1310
    %v1341 = vunpack.c.h.bf16 %v1310
    %v1342 = vunpack.c.l.bf16 %v1311
    %v1343 = vunpack.c.h.bf16 %v1311
    %1344 = vmatprep.subr.mxu0 %v1313
    %1345 = vmatpush1.msra.mxu0 %v1312
    %1346 = vmatprep.subr.mxu0 %v1315
    %1347 = vmatpush1.msra.mxu0 %v1314
    %1348 = vmatprep.subr.mxu0 %v1317
    %1349 = vmatpush1.msra.mxu0 %v1316
    %1350 = vmatprep.subr.mxu0 %v1319
    %1351 = vmatpush1.msra.mxu0 %v1318
    %1352 = vmatprep.subr.mxu0 %v1321
    %1353 = vmatpush1.msra.mxu0 %v1320
    %1354 = vmatprep.subr.mxu0 %v1323
    %1355 = vmatpush1.msra.mxu0 %v1322
    %1356 = vmatprep.subr.mxu0 %v1325
    %1357 = vmatpush1.msra.mxu0 %v1324
    %1358 = vmatprep.subr.mxu0 %v1327
    %1359 = vmatpush1.msra.mxu0 %v1326
    %1360 = vmatprep.subr.mxu0 %v1329
    %1361 = vmatpush1.msra.mxu0 %v1328
    %1362 = vmatprep.subr.mxu0 %v1331
    %1363 = vmatpush1.msra.mxu0 %v1330
    %1364 = vmatprep.subr.mxu0 %v1333
    %1365 = vmatpush1.msra.mxu0 %v1332
    %1366 = vmatprep.subr.mxu0 %v1335
    %1367 = vmatpush1.msra.mxu0 %v1334
    %1368 = vmatprep.subr.mxu0 %v1337
    %1369 = vmatpush1.msra.mxu0 %v1336
    %1370 = vmatprep.subr.mxu0 %v1339
    %1371 = vmatpush1.msra.mxu0 %v1338
    %1372 = vmatprep.subr.mxu0 %v1341
    %1373 = vmatpush1.msra.mxu0 %v1340
    %1374 = vmatprep.subr.mxu0 %v1343
    %1375 = vmatpush1.msra.mxu0 %v1342
    %1376 = vmatprep.subr.mxu0 0.0
    %1377 = vmatpush1.msra.mxu0 0.0
    %1378 = vmatprep.subr.mxu0 0.0
    %1379 = vmatpush1.msra.mxu0 0.0
    %1380 = vmatprep.subr.mxu0 0.0
    %1381 = vmatpush1.msra.mxu0 0.0
    %1382 = vmatprep.subr.mxu0 0.0
    %1383 = vmatpush1.msra.mxu0 0.0
    %1384 = vmatprep.subr.mxu0 0.0
    %1385 = vmatpush1.msra.mxu0 0.0
    %1386 = vmatprep.subr.mxu0 0.0
    %1387 = vmatpush1.msra.mxu0 0.0
    %1388 = vmatprep.subr.mxu0 0.0
    %1389 = vmatpush1.msra.mxu0 0.0
    %1390 = vmatprep.subr.mxu0 0.0
    %1391 = vmatpush1.msra.mxu0 0.0
    %1392 = vmatprep.subr.mxu0 0.0
    %1393 = vmatpush1.msra.mxu0 0.0
    %1394 = vmatprep.subr.mxu0 0.0
    %1395 = vmatpush1.msra.mxu0 0.0
    %1396 = vmatprep.subr.mxu0 0.0
    %1397 = vmatpush1.msra.mxu0 0.0
    %1398 = vmatprep.subr.mxu0 0.0
    %1399 = vmatpush1.msra.mxu0 0.0
    %1400 = vmatprep.subr.mxu0 0.0
    %1401 = vmatpush1.msra.mxu0 0.0
    %1402 = vmatprep.subr.mxu0 0.0
    %1403 = vmatpush1.msra.mxu0 0.0
    %1404 = vmatprep.subr.mxu0 0.0
    %1405 = vmatpush1.msra.mxu0 0.0
    %1406 = vmatprep.subr.mxu0 0.0
    %1407 = vmatpush1.msra.mxu0 0.0
    %1408 = vmatprep.mubr.f32.mxu0 0.0
    %1409 = vmatmul.mubr.f32.gmra.mrb[0].mxu0 %v1294
    %v1410 = vpop.f32.mrb[0].mxu0
    %v1411 = vadd.f32 0.0, %v1410
    %v1412 = vpop.f32.mrb[0].mxu0
    %v1413 = vadd.f32 0.0, %v1412
    %1414 = vmatprep.mubr.f32.mxu0 0.0
    %1415 = vmatmul.mubr.f32.gmra.mrb[0].mxu0 %v1295
    %v1416 = vpop.f32.mrb[0].mxu0
    %v1417 = vadd.f32 0.0, %v1416
    %v1418 = vpop.f32.mrb[0].mxu0
    %v1419 = vadd.f32 0.0, %v1418
    %1420 = vdwg.mxu0
    %v1421 = vld [vmem:[%s10] sm:$0xff]
    %v1422 = vld [vmem:[%s10 + $0x8] sm:$0xff]
    %v1423 = vld [vmem:[%s10 + $0x10] sm:$0xff]
    %v1424 = vld [vmem:[%s10 + $0x18] sm:$0xff]
    %v1425 = vld [vmem:[%s10 + $0x20] sm:$0xff]
    %v1426 = vld [vmem:[%s10 + $0x28] sm:$0xff]
    %v1427 = vld [vmem:[%s10 + $0x30] sm:$0xff]
    %v1428 = vld [vmem:[%s10 + $0x38] sm:$0xff]
    %v1429 = vld [vmem:[%s10 + $0x40] sm:$0xff]
    %v1430 = vld [vmem:[%s10 + $0x48] sm:$0xff]
    %v1431 = vld [vmem:[%s10 + $0x50] sm:$0xff]
    %v1432 = vld [vmem:[%s10 + $0x58] sm:$0xff]
    %v1433 = vld [vmem:[%s10 + $0x60] sm:$0xff]
    %v1434 = vld [vmem:[%s10 + $0x68] sm:$0xff]
    %v1435 = vld [vmem:[%s10 + $0x70] sm:$0xff]
    %v1436 = vld [vmem:[%s10 + $0x78] sm:$0xff]
    %v1437 = vld [vmem:[%s10 + $0x80] sm:$0xff]
    %v1438 = vld [vmem:[%s10 + $0x88] sm:$0xff]
    %v1439 = vld [vmem:[%s10 + $0x90] sm:$0xff]
    %v1440 = vld [vmem:[%s10 + $0x98] sm:$0xff]
    %v1441 = vld [vmem:[%s10 + $0xa0] sm:$0xff]
    %v1442 = vld [vmem:[%s10 + $0xa8] sm:$0xff]
    %v1443 = vld [vmem:[%s10 + $0xb0] sm:$0xff]
    %v1444 = vld [vmem:[%s10 + $0xb8] sm:$0xff]
    %v1445 = vld [vmem:[%s10 + $0xc0] sm:$0xff]
    %v1446 = vld [vmem:[%s10 + $0xc8] sm:$0xff]
    %v1447 = vld [vmem:[%s10 + $0xd0] sm:$0xff]
    %v1448 = vld [vmem:[%s10 + $0xd8] sm:$0xff]
    %v1449 = vld [vmem:[%s10 + $0xe0] sm:$0xff]
    %v1450 = vld [vmem:[%s10 + $0xe8] sm:$0xff]
    %v1451 = vld [vmem:[%s10 + $0xf0] sm:$0xff]
    %v1452 = vld [vmem:[%s10 + $0xf8] sm:$0xff]
    %1453 = vmatprep.subr.mxu0 0.0
    %1454 = vmatpush1.msra.mxu0 %v1421
    %1455 = vmatprep.subr.mxu0 0.0
    %1456 = vmatpush1.msra.mxu0 %v1422
    %1457 = vmatprep.subr.mxu0 0.0
    %1458 = vmatpush1.msra.mxu0 %v1423
    %1459 = vmatprep.subr.mxu0 0.0
    %1460 = vmatpush1.msra.mxu0 %v1424
    %1461 = vmatprep.subr.mxu0 0.0
    %1462 = vmatpush1.msra.mxu0 %v1425
    %1463 = vmatprep.subr.mxu0 0.0
    %1464 = vmatpush1.msra.mxu0 %v1426
    %1465 = vmatprep.subr.mxu0 0.0
    %1466 = vmatpush1.msra.mxu0 %v1427
    %1467 = vmatprep.subr.mxu0 0.0
    %1468 = vmatpush1.msra.mxu0 %v1428
    %1469 = vmatprep.subr.mxu0 0.0
    %1470 = vmatpush1.msra.mxu0 %v1429
    %1471 = vmatprep.subr.mxu0 0.0
    %1472 = vmatpush1.msra.mxu0 %v1430
    %1473 = vmatprep.subr.mxu0 0.0
    %1474 = vmatpush1.msra.mxu0 %v1431
    %1475 = vmatprep.subr.mxu0 0.0
    %1476 = vmatpush1.msra.mxu0 %v1432
    %1477 = vmatprep.subr.mxu0 0.0
    %1478 = vmatpush1.msra.mxu0 %v1433
    %1479 = vmatprep.subr.mxu0 0.0
    %1480 = vmatpush1.msra.mxu0 %v1434
    %1481 = vmatprep.subr.mxu0 0.0
    %1482 = vmatpush1.msra.mxu0 %v1435
    %1483 = vmatprep.subr.mxu0 0.0
    %1484 = vmatpush1.msra.mxu0 %v1436
    %1485 = vmatprep.subr.mxu0 0.0
    %1486 = vmatpush1.msra.mxu0 %v1437
    %1487 = vmatprep.subr.mxu0 0.0
    %1488 = vmatpush1.msra.mxu0 %v1438
    %1489 = vmatprep.subr.mxu0 0.0
    %1490 = vmatpush1.msra.mxu0 %v1439
    %1491 = vmatprep.subr.mxu0 0.0
    %1492 = vmatpush1.msra.mxu0 %v1440
    %1493 = vmatprep.subr.mxu0 0.0
    %1494 = vmatpush1.msra.mxu0 %v1441
    %1495 = vmatprep.subr.mxu0 0.0
    %1496 = vmatpush1.msra.mxu0 %v1442
    %1497 = vmatprep.subr.mxu0 0.0
    %1498 = vmatpush1.msra.mxu0 %v1443
    %1499 = vmatprep.subr.mxu0 0.0
    %1500 = vmatpush1.msra.mxu0 %v1444
    %1501 = vmatprep.subr.mxu0 0.0
    %1502 = vmatpush1.msra.mxu0 %v1445
    %1503 = vmatprep.subr.mxu0 0.0
    %1504 = vmatpush1.msra.mxu0 %v1446
    %1505 = vmatprep.subr.mxu0 0.0
    %1506 = vmatpush1.msra.mxu0 %v1447
    %1507 = vmatprep.subr.mxu0 0.0
    %1508 = vmatpush1.msra.mxu0 %v1448
    %1509 = vmatprep.subr.mxu0 0.0
    %1510 = vmatpush1.msra.mxu0 %v1449
    %1511 = vmatprep.subr.mxu0 0.0
    %1512 = vmatpush1.msra.mxu0 %v1450
    %1513 = vmatprep.subr.mxu0 0.0
    %1514 = vmatpush1.msra.mxu0 %v1451
    %1515 = vmatprep.subr.mxu0 0.0
    %1516 = vmatpush1.msra.mxu0 %v1452
    %1517 = vmatprep.mubr.f32.mxu0 %v1413
    %1518 = vmatmul.mubr.f32.gmra.mrb[0].mxu0 %v1411
    %v1519 = vpop.f32.mrb[0].mxu0
    %v1520 = vadd.f32 0.0, %v1519
    %v1521 = vpop.f32.mrb[0].mxu0
    %1522 = vmatprep.mubr.f32.mxu0 %v1419
    %1523 = vmatmul.mubr.f32.gmra.mrb[0].mxu0 %v1417
    %v1524 = vpop.f32.mrb[0].mxu0
    %v1525 = vadd.f32 0.0, %v1524
    %v1526 = vpop.f32.mrb[0].mxu0
    %1527 = vdwg.mxu0
    %v1528 = vld [vmem:[#allocation7] sm:$0xf]
    %v1531 = vunpack.c.l.s4 1983009808
    %v1532 = vunpack.c.0.s8 %v1531
    %v1533 = vlaneseq
    %v1534 = vshrl.u32 %v1533, 7
    %v1535 = vsub.s32 %v1532, %v1534
    %v1536 = vrot.slane %v1528, %v1535
    %v1537 = vcombine.high %v1536, %v1536
    %1540 = vmatprep.subr.mxu0 %v1413
    %1541 = vmatpush1.xpose.msra.mxu0 %v1411
    %1542 = vmatprep.subr.mxu0 %v1419
    %1543 = vmatpush1.xpose.msra.mxu0 %v1417
    %1544 = vmatprep.subr.mxu0 0.0
    %1545 = vmatpush1.xpose.msra.mxu0 0.0
    %1546 = vmatprep.subr.mxu0 0.0
    %1547 = vmatpush1.xpose.msra.mxu0 0.0
    %1548 = vmatprep.subr.mxu0 0.0
    %1549 = vmatpush1.xpose.msra.mxu0 0.0
    %1550 = vmatprep.subr.mxu0 0.0
    %1551 = vmatpush1.xpose.msra.mxu0 0.0
    %1552 = vmatprep.subr.mxu0 0.0
    %1553 = vmatpush1.xpose.msra.mxu0 0.0
    %1554 = vmatprep.subr.mxu0 0.0
    %1555 = vmatpush1.xpose.msra.mxu0 0.0
    %1556 = vmatprep.subr.mxu0 0.0
    %1557 = vmatpush1.xpose.msra.mxu0 0.0
    %1558 = vmatprep.subr.mxu0 0.0
    %1559 = vmatpush1.xpose.msra.mxu0 0.0
    %1560 = vmatprep.subr.mxu0 0.0
    %1561 = vmatpush1.xpose.msra.mxu0 0.0
    %1562 = vmatprep.subr.mxu0 0.0
    %1563 = vmatpush1.xpose.msra.mxu0 0.0
    %1564 = vmatprep.subr.mxu0 0.0
    %1565 = vmatpush1.xpose.msra.mxu0 0.0
    %1566 = vmatprep.subr.mxu0 0.0
    %1567 = vmatpush1.xpose.msra.mxu0 0.0
    %1568 = vmatprep.subr.mxu0 0.0
    %1569 = vmatpush1.xpose.msra.mxu0 0.0
    %1570 = vmatprep.subr.mxu0 0.0
    %1571 = vmatpush1.xpose.msra.mxu0 0.0
    %1572 = vmatprep.subr.mxu0 0.0
    %1573 = vmatpush1.xpose.msra.mxu0 0.0
    %1574 = vmatprep.subr.mxu0 0.0
    %1575 = vmatpush1.xpose.msra.mxu0 0.0
    %1576 = vmatprep.subr.mxu0 0.0
    %1577 = vmatpush1.xpose.msra.mxu0 0.0
    %1578 = vmatprep.subr.mxu0 0.0
    %1579 = vmatpush1.xpose.msra.mxu0 0.0
    %1580 = vmatprep.subr.mxu0 0.0
    %1581 = vmatpush1.xpose.msra.mxu0 0.0
    %1582 = vmatprep.subr.mxu0 0.0
    %1583 = vmatpush1.xpose.msra.mxu0 0.0
    %1584 = vmatprep.subr.mxu0 0.0
    %1585 = vmatpush1.xpose.msra.mxu0 0.0
    %1586 = vmatprep.subr.mxu0 0.0
    %1587 = vmatpush1.xpose.msra.mxu0 0.0
    %1588 = vmatprep.subr.mxu0 0.0
    %1589 = vmatpush1.xpose.msra.mxu0 0.0
    %1590 = vmatprep.subr.mxu0 0.0
    %1591 = vmatpush1.xpose.msra.mxu0 0.0
    %1592 = vmatprep.subr.mxu0 0.0
    %1593 = vmatpush1.xpose.msra.mxu0 0.0
    %1594 = vmatprep.subr.mxu0 0.0
    %1595 = vmatpush1.xpose.msra.mxu0 0.0
    %1596 = vmatprep.subr.mxu0 0.0
    %1597 = vmatpush1.xpose.msra.mxu0 0.0
    %1598 = vmatprep.subr.mxu0 0.0
    %1599 = vmatpush1.xpose.msra.mxu0 0.0
    %1600 = vmatprep.subr.mxu0 0.0
    %1601 = vmatpush1.xpose.msra.mxu0 0.0
    %1602 = vmatprep.subr.mxu0 0.0
    %1603 = vmatpush1.xpose.msra.mxu0 0.0
    %1604 = vmatprep.mubr.f32.mxu0 %v1537
    %1605 = vmatmul.mubr.f32.gmra.mrb[0].mxu0 %v1536
    %v1606 = vpop.f32.mrb[0].mxu0
    %v1607 = vadd.f32 0.0, %v1606
    %v1608 = vpop.f32.mrb[0].mxu0
    %1609 = vdwg.mxu0
    %v1610 = vld [vmem:[%s12] sm:$0xf]
    %v1611 = vld [vmem:[%s12 + $0x4] sm:$0xf]
    %v1612 = vld [vmem:[%s12 + $0x8] sm:$0xf]
    %v1613 = vld [vmem:[%s12 + $0xc] sm:$0xf]
    %v1614 = vld [vmem:[%s12 + $0x10] sm:$0xf]
    %v1615 = vld [vmem:[%s12 + $0x14] sm:$0xf]
    %v1616 = vld [vmem:[%s12 + $0x18] sm:$0xf]
    %v1617 = vld [vmem:[%s12 + $0x1c] sm:$0xf]
    %v1618 = vld [vmem:[%s12 + $0x20] sm:$0xf]
    %v1619 = vld [vmem:[%s12 + $0x24] sm:$0xf]
    %v1620 = vld [vmem:[%s12 + $0x28] sm:$0xf]
    %v1621 = vld [vmem:[%s12 + $0x2c] sm:$0xf]
    %v1622 = vld [vmem:[%s12 + $0x30] sm:$0xf]
    %v1623 = vld [vmem:[%s12 + $0x34] sm:$0xf]
    %v1624 = vld [vmem:[%s12 + $0x38] sm:$0xf]
    %v1625 = vld [vmem:[%s12 + $0x3c] sm:$0xf]
    %v1626 = vld [vmem:[%s12 + $0x40] sm:$0xf]
    %v1627 = vld [vmem:[%s12 + $0x44] sm:$0xf]
    %v1628 = vld [vmem:[%s12 + $0x48] sm:$0xf]
    %v1629 = vld [vmem:[%s12 + $0x4c] sm:$0xf]
    %v1630 = vld [vmem:[%s12 + $0x50] sm:$0xf]
    %v1631 = vld [vmem:[%s12 + $0x54] sm:$0xf]
    %v1632 = vld [vmem:[%s12 + $0x58] sm:$0xf]
    %v1633 = vld [vmem:[%s12 + $0x5c] sm:$0xf]
    %v1634 = vld [vmem:[%s12 + $0x60] sm:$0xf]
    %v1635 = vld [vmem:[%s12 + $0x64] sm:$0xf]
    %v1636 = vld [vmem:[%s12 + $0x68] sm:$0xf]
    %v1637 = vld [vmem:[%s12 + $0x6c] sm:$0xf]
    %v1638 = vld [vmem:[%s12 + $0x70] sm:$0xf]
    %v1639 = vld [vmem:[%s12 + $0x74] sm:$0xf]
    %v1640 = vld [vmem:[%s12 + $0x78] sm:$0xf]
    %v1641 = vld [vmem:[%s12 + $0x7c] sm:$0xf]
    %v1642 = vunpack.c.l.bf16 %v1610
    %v1643 = vunpack.c.l.bf16 %v1611
    %v1644 = vunpack.c.l.bf16 %v1612
    %v1645 = vunpack.c.l.bf16 %v1613
    %v1646 = vunpack.c.l.bf16 %v1614
    %v1647 = vunpack.c.l.bf16 %v1615
    %v1648 = vunpack.c.l.bf16 %v1616
    %v1649 = vunpack.c.l.bf16 %v1617
    %v1650 = vunpack.c.l.bf16 %v1618
    %v1651 = vunpack.c.l.bf16 %v1619
    %v1652 = vunpack.c.l.bf16 %v1620
    %v1653 = vunpack.c.l.bf16 %v1621
    %v1654 = vunpack.c.l.bf16 %v1622
    %v1655 = vunpack.c.l.bf16 %v1623
    %v1656 = vunpack.c.l.bf16 %v1624
    %v1657 = vunpack.c.l.bf16 %v1625
    %v1658 = vunpack.c.l.bf16 %v1626
    %v1659 = vunpack.c.l.bf16 %v1627
    %v1660 = vunpack.c.l.bf16 %v1628
    %v1661 = vunpack.c.l.bf16 %v1629
    %v1662 = vunpack.c.l.bf16 %v1630
    %v1663 = vunpack.c.l.bf16 %v1631
    %v1664 = vunpack.c.l.bf16 %v1632
    %v1665 = vunpack.c.l.bf16 %v1633
    %v1666 = vunpack.c.l.bf16 %v1634
    %v1667 = vunpack.c.l.bf16 %v1635
    %v1668 = vunpack.c.l.bf16 %v1636
    %v1669 = vunpack.c.l.bf16 %v1637
    %v1670 = vunpack.c.l.bf16 %v1638
    %v1671 = vunpack.c.l.bf16 %v1639
    %v1672 = vunpack.c.l.bf16 %v1640
    %v1673 = vunpack.c.l.bf16 %v1641
    %1675 = vset.pattern.permute.xlu0 0
    %1676 = vperm.xlu0 %1675, %v1520
    %v1677 = vpop.permute.xlu0 %1676
    %1680 = vset.pattern.permute.xlu0 0
    %1681 = vperm.xlu0 %1680, %v1525
    %v1682 = vpop.permute.xlu0 %1681
    %v1684 = vlaneseq
    %v1685 = vshrl.u32 %v1684, 7
    %v1686 = vsub.s32 0, %v1685
    %v1687 = vrot.slane %v1607, %v1686
    %v1688 = vadd.f32 %v1677, %v1687
    %v1689 = vadd.f32 %v1682, %v1687
    %v1690 = vmax.f32 %v1688, 0.0
    %v1691 = vmax.f32 %v1689, 0.0
    %v1692 = vadd.f32 %v1690, %v166
    %v1693 = vadd.f32 %v1691, %v167
    %vm1694 = vcmask 130048
    %v1695 = vsel %vm1694, %v1692, -inf
    %1696 = vmax.xlane.f32.xlu0 %v1695
    %v1697 = vpop.xlane.xlu0 %1696
    %v1698 = vsel %vm1694, %v1693, -inf
    %1699 = vmax.xlane.f32.xlu0 %v1698
    %v1700 = vpop.xlane.xlu0 %1699
    %v1701 = vsub.f32 %v1692, %v1697
    %v1702 = vsub.f32 %v1693, %v1700
    %v1703 = vmul.f32 %v1701, 1.442695
    %v1704 = vpow.pop %v1703
    %v1705 = vmul.f32 %v1702, 1.442695
    %v1706 = vpow.pop %v1705
    %v1707 = vsel %vm1694, %v1704, 0.0
    %1708 = vadd.xlane.f32.xlu0 %v1707
    %v1709 = vpop.xlane.xlu0 %1708
    %v1710 = vsel %vm1694, %v1706, 0.0
    %1711 = vadd.xlane.f32.xlu0 %v1710
    %v1712 = vpop.xlane.xlu0 %1711
    %v1713 = vrcp.pop %v1709
    %v1714 = vrcp.pop %v1712
    %v1715 = vmul.f32 %v1704, %v1713
    %v1716 = vmul.f32 %v1706, %v1714
    %v1718 = vsel %vm1694, %v1715, 0
    %v1721 = vsel %vm1694, %v1716, 0
    %1723 = vmatprep.subr.mxu0 0.0
    %1724 = vmatpush1.msra.mxu0 %v1411
    %1725 = vmatprep.subr.mxu0 0.0
    %1726 = vmatpush1.msra.mxu0 %v1417
    %1727 = vmatprep.subr.mxu0 0.0
    %1728 = vmatpush1.msra.mxu0 0.0
    %1729 = vmatprep.subr.mxu0 0.0
    %1730 = vmatpush1.msra.mxu0 0.0
    %1731 = vmatprep.subr.mxu0 0.0
    %1732 = vmatpush1.msra.mxu0 0.0
    %1733 = vmatprep.subr.mxu0 0.0
    %1734 = vmatpush1.msra.mxu0 0.0
    %1735 = vmatprep.subr.mxu0 0.0
    %1736 = vmatpush1.msra.mxu0 0.0
    %1737 = vmatprep.subr.mxu0 0.0
    %1738 = vmatpush1.msra.mxu0 0.0
    %1739 = vmatprep.subr.mxu0 0.0
    %1740 = vmatpush1.msra.mxu0 0.0
    %1741 = vmatprep.subr.mxu0 0.0
    %1742 = vmatpush1.msra.mxu0 0.0
    %1743 = vmatprep.subr.mxu0 0.0
    %1744 = vmatpush1.msra.mxu0 0.0
    %1745 = vmatprep.subr.mxu0 0.0
    %1746 = vmatpush1.msra.mxu0 0.0
    %1747 = vmatprep.subr.mxu0 0.0
    %1748 = vmatpush1.msra.mxu0 0.0
    %1749 = vmatprep.subr.mxu0 0.0
    %1750 = vmatpush1.msra.mxu0 0.0
    %1751 = vmatprep.subr.mxu0 0.0
    %1752 = vmatpush1.msra.mxu0 0.0
    %1753 = vmatprep.subr.mxu0 0.0
    %1754 = vmatpush1.msra.mxu0 0.0
    %1755 = vmatprep.subr.mxu0 0.0
    %1756 = vmatpush1.msra.mxu0 0.0
    %1757 = vmatprep.subr.mxu0 0.0
    %1758 = vmatpush1.msra.mxu0 0.0
    %1759 = vmatprep.subr.mxu0 0.0
    %1760 = vmatpush1.msra.mxu0 0.0
    %1761 = vmatprep.subr.mxu0 0.0
    %1762 = vmatpush1.msra.mxu0 0.0
    %1763 = vmatprep.subr.mxu0 0.0
    %1764 = vmatpush1.msra.mxu0 0.0
    %1765 = vmatprep.subr.mxu0 0.0
    %1766 = vmatpush1.msra.mxu0 0.0
    %1767 = vmatprep.subr.mxu0 0.0
    %1768 = vmatpush1.msra.mxu0 0.0
    %1769 = vmatprep.subr.mxu0 0.0
    %1770 = vmatpush1.msra.mxu0 0.0
    %1771 = vmatprep.subr.mxu0 0.0
    %1772 = vmatpush1.msra.mxu0 0.0
    %1773 = vmatprep.subr.mxu0 0.0
    %1774 = vmatpush1.msra.mxu0 0.0
    %1775 = vmatprep.subr.mxu0 0.0
    %1776 = vmatpush1.msra.mxu0 0.0
    %1777 = vmatprep.subr.mxu0 0.0
    %1778 = vmatpush1.msra.mxu0 0.0
    %1779 = vmatprep.subr.mxu0 0.0
    %1780 = vmatpush1.msra.mxu0 0.0
    %1781 = vmatprep.subr.mxu0 0.0
    %1782 = vmatpush1.msra.mxu0 0.0
    %1783 = vmatprep.subr.mxu0 0.0
    %1784 = vmatpush1.msra.mxu0 0.0
    %1785 = vmatprep.subr.mxu0 0.0
    %1786 = vmatpush1.msra.mxu0 0.0
    %1787 = vmatprep.mubr.f32.mxu0 0.0
    %1788 = vmatmul.mubr.f32.gmra.mrb[0].mxu0 %v1718
    %v1789 = vpop.f32.mrb[0].mxu0
    %v1790 = vadd.f32 0.0, %v1789
    %v1791 = vpop.f32.mrb[0].mxu0
    %1792 = vmatprep.mubr.f32.mxu0 0.0
    %1793 = vmatmul.mubr.f32.gmra.mrb[0].mxu0 %v1721
    %v1794 = vpop.f32.mrb[0].mxu0
    %v1795 = vadd.f32 0.0, %v1794
    %v1796 = vpop.f32.mrb[0].mxu0
    %1797 = vdwg.mxu0
    %vm1798 = vcmp.gt.f32.partialorder %v1790, 0.0
    %vm1799 = vcmp.gt.f32.partialorder %v1795, 0.0
    %v1800 = vmin.f32 %v1790, 0.0
    %v1801 = vmin.f32 %v1795, 0.0
    %v1802 = vmul.f32 %v1800, 1.442695
    %v1803 = vpow.pop %v1802
    %v1804 = vmul.f32 %v1801, 1.442695
    %v1805 = vpow.pop %v1804
    %v1806 = vsub.f32 %v1803, 1.0
    %v1807 = vsub.f32 %v1805, 1.0
    %v1808 = vsel %vm1798, %v1790, %v1806
    %v1809 = vsel %vm1799, %v1795, %v1807
    %1810 = vset.pattern.permute.xlu0 1
    %1811 = vperm.xlu0 %1810, %v1520
    %v1812 = vpop.permute.xlu0 %1811
    %1814 = vset.pattern.permute.xlu0 1
    %1815 = vperm.xlu0 %1814, %v1525
    %v1816 = vpop.permute.xlu0 %1815
    %v1818 = vlaneseq
    %v1819 = vshrl.u32 %v1818, 7
    %v1820 = vsub.s32 1, %v1819
    %v1821 = vrot.slane %v1607, %v1820
    %v1822 = vadd.f32 %v1812, %v1821
    %v1823 = vadd.f32 %v1816, %v1821
    %v1824 = vmax.f32 %v1822, 0.0
    %v1825 = vmax.f32 %v1823, 0.0
    %v1826 = vadd.f32 %v1824, %v166
    %v1827 = vadd.f32 %v1825, %v167
    %v1828 = vsel %vm1694, %v1826, -inf
    %1829 = vmax.xlane.f32.xlu0 %v1828
    %v1830 = vpop.xlane.xlu0 %1829
    %v1831 = vsel %vm1694, %v1827, -inf
    %1832 = vmax.xlane.f32.xlu0 %v1831
    %v1833 = vpop.xlane.xlu0 %1832
    %v1834 = vsub.f32 %v1826, %v1830
    %v1835 = vsub.f32 %v1827, %v1833
    %v1836 = vmul.f32 %v1834, 1.442695
    %v1837 = vpow.pop %v1836
    %v1838 = vmul.f32 %v1835, 1.442695
    %v1839 = vpow.pop %v1838
    %v1840 = vsel %vm1694, %v1837, 0.0
    %1841 = vadd.xlane.f32.xlu0 %v1840
    %v1842 = vpop.xlane.xlu0 %1841
    %v1843 = vsel %vm1694, %v1839, 0.0
    %1844 = vadd.xlane.f32.xlu0 %v1843
    %v1845 = vpop.xlane.xlu0 %1844
    %v1846 = vrcp.pop %v1842
    %v1847 = vrcp.pop %v1845
    %v1848 = vmul.f32 %v1837, %v1846
    %v1849 = vmul.f32 %v1839, %v1847
    %v1851 = vsel %vm1694, %v1848, 0
    %v1854 = vsel %vm1694, %v1849, 0
    %1856 = vmatprep.subr.mxu0 0.0
    %1857 = vmatpush1.msra.mxu0 %v1413
    %1858 = vmatprep.subr.mxu0 0.0
    %1859 = vmatpush1.msra.mxu0 %v1419
    %1860 = vmatprep.subr.mxu0 0.0
    %1861 = vmatpush1.msra.mxu0 0.0
    %1862 = vmatprep.subr.mxu0 0.0
    %1863 = vmatpush1.msra.mxu0 0.0
    %1864 = vmatprep.subr.mxu0 0.0
    %1865 = vmatpush1.msra.mxu0 0.0
    %1866 = vmatprep.subr.mxu0 0.0
    %1867 = vmatpush1.msra.mxu0 0.0
    %1868 = vmatprep.subr.mxu0 0.0
    %1869 = vmatpush1.msra.mxu0 0.0
    %1870 = vmatprep.subr.mxu0 0.0
    %1871 = vmatpush1.msra.mxu0 0.0
    %1872 = vmatprep.subr.mxu0 0.0
    %1873 = vmatpush1.msra.mxu0 0.0
    %1874 = vmatprep.subr.mxu0 0.0
    %1875 = vmatpush1.msra.mxu0 0.0
    %1876 = vmatprep.subr.mxu0 0.0
    %1877 = vmatpush1.msra.mxu0 0.0
    %1878 = vmatprep.subr.mxu0 0.0
    %1879 = vmatpush1.msra.mxu0 0.0
    %1880 = vmatprep.subr.mxu0 0.0
    %1881 = vmatpush1.msra.mxu0 0.0
    %1882 = vmatprep.subr.mxu0 0.0
    %1883 = vmatpush1.msra.mxu0 0.0
    %1884 = vmatprep.subr.mxu0 0.0
    %1885 = vmatpush1.msra.mxu0 0.0
    %1886 = vmatprep.subr.mxu0 0.0
    %1887 = vmatpush1.msra.mxu0 0.0
    %1888 = vmatprep.subr.mxu0 0.0
    %1889 = vmatpush1.msra.mxu0 0.0
    %1890 = vmatprep.subr.mxu0 0.0
    %1891 = vmatpush1.msra.mxu0 0.0
    %1892 = vmatprep.subr.mxu0 0.0
    %1893 = vmatpush1.msra.mxu0 0.0
    %1894 = vmatprep.subr.mxu0 0.0
    %1895 = vmatpush1.msra.mxu0 0.0
    %1896 = vmatprep.subr.mxu0 0.0
    %1897 = vmatpush1.msra.mxu0 0.0
    %1898 = vmatprep.subr.mxu0 0.0
    %1899 = vmatpush1.msra.mxu0 0.0
    %1900 = vmatprep.subr.mxu0 0.0
    %1901 = vmatpush1.msra.mxu0 0.0
    %1902 = vmatprep.subr.mxu0 0.0
    %1903 = vmatpush1.msra.mxu0 0.0
    %1904 = vmatprep.subr.mxu0 0.0
    %1905 = vmatpush1.msra.mxu0 0.0
    %1906 = vmatprep.subr.mxu0 0.0
    %1907 = vmatpush1.msra.mxu0 0.0
    %1908 = vmatprep.subr.mxu0 0.0
    %1909 = vmatpush1.msra.mxu0 0.0
    %1910 = vmatprep.subr.mxu0 0.0
    %1911 = vmatpush1.msra.mxu0 0.0
    %1912 = vmatprep.subr.mxu0 0.0
    %1913 = vmatpush1.msra.mxu0 0.0
    %1914 = vmatprep.subr.mxu0 0.0
    %1915 = vmatpush1.msra.mxu0 0.0
    %1916 = vmatprep.subr.mxu0 0.0
    %1917 = vmatpush1.msra.mxu0 0.0
    %1918 = vmatprep.subr.mxu0 0.0
    %1919 = vmatpush1.msra.mxu0 0.0
    %1920 = vmatprep.mubr.f32.mxu0 0.0
    %1921 = vmatmul.mubr.f32.gmra.mrb[0].mxu0 %v1851
    %v1922 = vpop.f32.mrb[0].mxu0
    %v1923 = vadd.f32 0.0, %v1922
    %v1924 = vpop.f32.mrb[0].mxu0
    %1925 = vmatprep.mubr.f32.mxu0 0.0
    %1926 = vmatmul.mubr.f32.gmra.mrb[0].mxu0 %v1854
    %v1927 = vpop.f32.mrb[0].mxu0
    %v1928 = vadd.f32 0.0, %v1927
    %v1929 = vpop.f32.mrb[0].mxu0
    %1930 = vdwg.mxu0
    %vm1931 = vcmp.gt.f32.partialorder %v1923, 0.0
    %vm1932 = vcmp.gt.f32.partialorder %v1928, 0.0
    %v1933 = vmin.f32 %v1923, 0.0
    %v1934 = vmin.f32 %v1928, 0.0
    %v1935 = vmul.f32 %v1933, 1.442695
    %v1936 = vpow.pop %v1935
    %v1937 = vmul.f32 %v1934, 1.442695
    %v1938 = vpow.pop %v1937
    %v1939 = vsub.f32 %v1936, 1.0
    %v1940 = vsub.f32 %v1938, 1.0
    %v1941 = vsel %vm1931, %v1923, %v1939
    %v1942 = vsel %vm1932, %v1928, %v1940
    %1943 = vmatprep.subr.mxu0 0.0
    %1944 = vmatpush1.msra.mxu0 %v1658
    %1945 = vmatprep.subr.mxu0 0.0
    %1946 = vmatpush1.msra.mxu0 %v1659
    %1947 = vmatprep.subr.mxu0 0.0
    %1948 = vmatpush1.msra.mxu0 %v1660
    %1949 = vmatprep.subr.mxu0 0.0
    %1950 = vmatpush1.msra.mxu0 %v1661
    %1951 = vmatprep.subr.mxu0 0.0
    %1952 = vmatpush1.msra.mxu0 %v1662
    %1953 = vmatprep.subr.mxu0 0.0
    %1954 = vmatpush1.msra.mxu0 %v1663
    %1955 = vmatprep.subr.mxu0 0.0
    %1956 = vmatpush1.msra.mxu0 %v1664
    %1957 = vmatprep.subr.mxu0 0.0
    %1958 = vmatpush1.msra.mxu0 %v1665
    %1959 = vmatprep.subr.mxu0 0.0
    %1960 = vmatpush1.msra.mxu0 %v1666
    %1961 = vmatprep.subr.mxu0 0.0
    %1962 = vmatpush1.msra.mxu0 %v1667
    %1963 = vmatprep.subr.mxu0 0.0
    %1964 = vmatpush1.msra.mxu0 %v1668
    %1965 = vmatprep.subr.mxu0 0.0
    %1966 = vmatpush1.msra.mxu0 %v1669
    %1967 = vmatprep.subr.mxu0 0.0
    %1968 = vmatpush1.msra.mxu0 %v1670
    %1969 = vmatprep.subr.mxu0 0.0
    %1970 = vmatpush1.msra.mxu0 %v1671
    %1971 = vmatprep.subr.mxu0 0.0
    %1972 = vmatpush1.msra.mxu0 %v1672
    %1973 = vmatprep.subr.mxu0 0.0
    %1974 = vmatpush1.msra.mxu0 %v1673
    %1975 = vmatprep.subr.mxu0 0.0
    %1976 = vmatpush1.msra.mxu0 0.0
    %1977 = vmatprep.subr.mxu0 0.0
    %1978 = vmatpush1.msra.mxu0 0.0
    %1979 = vmatprep.subr.mxu0 0.0
    %1980 = vmatpush1.msra.mxu0 0.0
    %1981 = vmatprep.subr.mxu0 0.0
    %1982 = vmatpush1.msra.mxu0 0.0
    %1983 = vmatprep.subr.mxu0 0.0
    %1984 = vmatpush1.msra.mxu0 0.0
    %1985 = vmatprep.subr.mxu0 0.0
    %1986 = vmatpush1.msra.mxu0 0.0
    %1987 = vmatprep.subr.mxu0 0.0
    %1988 = vmatpush1.msra.mxu0 0.0
    %1989 = vmatprep.subr.mxu0 0.0
    %1990 = vmatpush1.msra.mxu0 0.0
    %1991 = vmatprep.subr.mxu0 0.0
    %1992 = vmatpush1.msra.mxu0 0.0
    %1993 = vmatprep.subr.mxu0 0.0
    %1994 = vmatpush1.msra.mxu0 0.0
    %1995 = vmatprep.subr.mxu0 0.0
    %1996 = vmatpush1.msra.mxu0 0.0
    %1997 = vmatprep.subr.mxu0 0.0
    %1998 = vmatpush1.msra.mxu0 0.0
    %1999 = vmatprep.subr.mxu0 0.0
    %2000 = vmatpush1.msra.mxu0 0.0
    %2001 = vmatprep.subr.mxu0 0.0
    %2002 = vmatpush1.msra.mxu0 0.0
    %2003 = vmatprep.subr.mxu0 0.0
    %2004 = vmatpush1.msra.mxu0 0.0
    %2005 = vmatprep.subr.mxu0 0.0
    %2006 = vmatpush1.msra.mxu0 0.0
    %2007 = vmatprep.mubr.f32.mxu0 0.0
    %2008 = vmatmul.mubr.f32.gmra.mrb[0].mxu0 %v1941
    %v2009 = vpop.f32.mrb[0].mxu0
    %v2010 = vadd.f32 0.0, %v2009
    %v2011 = vpop.f32.mrb[0].mxu0
    %2012 = vmatprep.mubr.f32.mxu0 0.0
    %2013 = vmatmul.mubr.f32.gmra.mrb[0].mxu0 %v1942
    %v2014 = vpop.f32.mrb[0].mxu0
    %v2015 = vadd.f32 0.0, %v2014
    %v2016 = vpop.f32.mrb[0].mxu0
    %2017 = vdwg.mxu0
    %2018 = vmatprep.subr.mxu0 0.0
    %2019 = vmatpush1.msra.mxu0 %v1642
    %2020 = vmatprep.subr.mxu0 0.0
    %2021 = vmatpush1.msra.mxu0 %v1643
    %2022 = vmatprep.subr.mxu0 0.0
    %2023 = vmatpush1.msra.mxu0 %v1644
    %2024 = vmatprep.subr.mxu0 0.0
    %2025 = vmatpush1.msra.mxu0 %v1645
    %2026 = vmatprep.subr.mxu0 0.0
    %2027 = vmatpush1.msra.mxu0 %v1646
    %2028 = vmatprep.subr.mxu0 0.0
    %2029 = vmatpush1.msra.mxu0 %v1647
    %2030 = vmatprep.subr.mxu0 0.0
    %2031 = vmatpush1.msra.mxu0 %v1648
    %2032 = vmatprep.subr.mxu0 0.0
    %2033 = vmatpush1.msra.mxu0 %v1649
    %2034 = vmatprep.subr.mxu0 0.0
    %2035 = vmatpush1.msra.mxu0 %v1650
    %2036 = vmatprep.subr.mxu0 0.0
    %2037 = vmatpush1.msra.mxu0 %v1651
    %2038 = vmatprep.subr.mxu0 0.0
    %2039 = vmatpush1.msra.mxu0 %v1652
    %2040 = vmatprep.subr.mxu0 0.0
    %2041 = vmatpush1.msra.mxu0 %v1653
    %2042 = vmatprep.subr.mxu0 0.0
    %2043 = vmatpush1.msra.mxu0 %v1654
    %2044 = vmatprep.subr.mxu0 0.0
    %2045 = vmatpush1.msra.mxu0 %v1655
    %2046 = vmatprep.subr.mxu0 0.0
    %2047 = vmatpush1.msra.mxu0 %v1656
    %2048 = vmatprep.subr.mxu0 0.0
    %2049 = vmatpush1.msra.mxu0 %v1657
    %2050 = vmatprep.subr.mxu0 0.0
    %2051 = vmatpush1.msra.mxu0 0.0
    %2052 = vmatprep.subr.mxu0 0.0
    %2053 = vmatpush1.msra.mxu0 0.0
    %2054 = vmatprep.subr.mxu0 0.0
    %2055 = vmatpush1.msra.mxu0 0.0
    %2056 = vmatprep.subr.mxu0 0.0
    %2057 = vmatpush1.msra.mxu0 0.0
    %2058 = vmatprep.subr.mxu0 0.0
    %2059 = vmatpush1.msra.mxu0 0.0
    %2060 = vmatprep.subr.mxu0 0.0
    %2061 = vmatpush1.msra.mxu0 0.0
    %2062 = vmatprep.subr.mxu0 0.0
    %2063 = vmatpush1.msra.mxu0 0.0
    %2064 = vmatprep.subr.mxu0 0.0
    %2065 = vmatpush1.msra.mxu0 0.0
    %2066 = vmatprep.subr.mxu0 0.0
    %2067 = vmatpush1.msra.mxu0 0.0
    %2068 = vmatprep.subr.mxu0 0.0
    %2069 = vmatpush1.msra.mxu0 0.0
    %2070 = vmatprep.subr.mxu0 0.0
    %2071 = vmatpush1.msra.mxu0 0.0
    %2072 = vmatprep.subr.mxu0 0.0
    %2073 = vmatpush1.msra.mxu0 0.0
    %2074 = vmatprep.subr.mxu0 0.0
    %2075 = vmatpush1.msra.mxu0 0.0
    %2076 = vmatprep.subr.mxu0 0.0
    %2077 = vmatpush1.msra.mxu0 0.0
    %2078 = vmatprep.subr.mxu0 0.0
    %2079 = vmatpush1.msra.mxu0 0.0
    %2080 = vmatprep.subr.mxu0 0.0
    %2081 = vmatpush1.msra.mxu0 0.0
    %2082 = vmatprep.mubr.f32.mxu0 0.0
    %2083 = vmatmul.mubr.f32.gmra.mrb[0].mxu0 %v1808
    %v2084 = vpop.f32.mrb[0].mxu0
    %v2085 = vadd.f32 %v2010, %v2084
    %v2086 = vpop.f32.mrb[0].mxu0
    %2087 = vmatprep.mubr.f32.mxu0 0.0
    %2088 = vmatmul.mubr.f32.gmra.mrb[0].mxu0 %v1809
    %v2089 = vpop.f32.mrb[0].mxu0
    %v2090 = vadd.f32 %v2015, %v2089
    %v2091 = vpop.f32.mrb[0].mxu0
    %2092 = vdwg.mxu0
    %v2093 = vld [vmem:[%s13] sm:$0xff]
    %v2094 = vld [vmem:[%s13 + $0x8] sm:$0xff]
    %v2095 = vld [vmem:[%s13 + $0x10] sm:$0xff]
    %v2096 = vld [vmem:[%s13 + $0x18] sm:$0xff]
    %v2097 = vld [vmem:[%s13 + $0x20] sm:$0xff]
    %v2098 = vld [vmem:[%s13 + $0x28] sm:$0xff]
    %v2099 = vld [vmem:[%s13 + $0x30] sm:$0xff]
    %v2100 = vld [vmem:[%s13 + $0x38] sm:$0xff]
    %v2101 = vld [vmem:[%s13 + $0x40] sm:$0xff]
    %v2102 = vld [vmem:[%s13 + $0x48] sm:$0xff]
    %v2103 = vld [vmem:[%s13 + $0x50] sm:$0xff]
    %v2104 = vld [vmem:[%s13 + $0x58] sm:$0xff]
    %v2105 = vld [vmem:[%s13 + $0x60] sm:$0xff]
    %v2106 = vld [vmem:[%s13 + $0x68] sm:$0xff]
    %v2107 = vld [vmem:[%s13 + $0x70] sm:$0xff]
    %v2108 = vld [vmem:[%s13 + $0x78] sm:$0xff]
    %2109 = vmatprep.subr.mxu0 0.0
    %2110 = vmatpush1.msra.mxu0 %v2093
    %2111 = vmatprep.subr.mxu0 0.0
    %2112 = vmatpush1.msra.mxu0 %v2094
    %2113 = vmatprep.subr.mxu0 0.0
    %2114 = vmatpush1.msra.mxu0 %v2095
    %2115 = vmatprep.subr.mxu0 0.0
    %2116 = vmatpush1.msra.mxu0 %v2096
    %2117 = vmatprep.subr.mxu0 0.0
    %2118 = vmatpush1.msra.mxu0 %v2097
    %2119 = vmatprep.subr.mxu0 0.0
    %2120 = vmatpush1.msra.mxu0 %v2098
    %2121 = vmatprep.subr.mxu0 0.0
    %2122 = vmatpush1.msra.mxu0 %v2099
    %2123 = vmatprep.subr.mxu0 0.0
    %2124 = vmatpush1.msra.mxu0 %v2100
    %2125 = vmatprep.subr.mxu0 0.0
    %2126 = vmatpush1.msra.mxu0 %v2101
    %2127 = vmatprep.subr.mxu0 0.0
    %2128 = vmatpush1.msra.mxu0 %v2102
    %2129 = vmatprep.subr.mxu0 0.0
    %2130 = vmatpush1.msra.mxu0 %v2103
    %2131 = vmatprep.subr.mxu0 0.0
    %2132 = vmatpush1.msra.mxu0 %v2104
    %2133 = vmatprep.subr.mxu0 0.0
    %2134 = vmatpush1.msra.mxu0 %v2105
    %2135 = vmatprep.subr.mxu0 0.0
    %2136 = vmatpush1.msra.mxu0 %v2106
    %2137 = vmatprep.subr.mxu0 0.0
    %2138 = vmatpush1.msra.mxu0 %v2107
    %2139 = vmatprep.subr.mxu0 0.0
    %2140 = vmatpush1.msra.mxu0 %v2108
    %2141 = vmatprep.subr.mxu0 0.0
    %2142 = vmatpush1.msra.mxu0 0.0
    %2143 = vmatprep.subr.mxu0 0.0
    %2144 = vmatpush1.msra.mxu0 0.0
    %2145 = vmatprep.subr.mxu0 0.0
    %2146 = vmatpush1.msra.mxu0 0.0
    %2147 = vmatprep.subr.mxu0 0.0
    %2148 = vmatpush1.msra.mxu0 0.0
    %2149 = vmatprep.subr.mxu0 0.0
    %2150 = vmatpush1.msra.mxu0 0.0
    %2151 = vmatprep.subr.mxu0 0.0
    %2152 = vmatpush1.msra.mxu0 0.0
    %2153 = vmatprep.subr.mxu0 0.0
    %2154 = vmatpush1.msra.mxu0 0.0
    %2155 = vmatprep.subr.mxu0 0.0
    %2156 = vmatpush1.msra.mxu0 0.0
    %2157 = vmatprep.subr.mxu0 0.0
    %2158 = vmatpush1.msra.mxu0 0.0
    %2159 = vmatprep.subr.mxu0 0.0
    %2160 = vmatpush1.msra.mxu0 0.0
    %2161 = vmatprep.subr.mxu0 0.0
    %2162 = vmatpush1.msra.mxu0 0.0
    %2163 = vmatprep.subr.mxu0 0.0
    %2164 = vmatpush1.msra.mxu0 0.0
    %2165 = vmatprep.subr.mxu0 0.0
    %2166 = vmatpush1.msra.mxu0 0.0
    %2167 = vmatprep.subr.mxu0 0.0
    %2168 = vmatpush1.msra.mxu0 0.0
    %2169 = vmatprep.subr.mxu0 0.0
    %2170 = vmatpush1.msra.mxu0 0.0
    %2171 = vmatprep.subr.mxu0 0.0
    %2172 = vmatpush1.msra.mxu0 0.0
    %2173 = vmatprep.mubr.f32.mxu0 0.0
    %2174 = vmatmul.mubr.f32.gmra.mrb[0].mxu0 %v2085
    %v2175 = vpop.f32.mrb[0].mxu0
    %v2176 = vadd.f32 0.0, %v2175
    %v2177 = vpop.f32.mrb[0].mxu0
    %2178 = vmatprep.mubr.f32.mxu0 0.0
    %2179 = vmatmul.mubr.f32.gmra.mrb[0].mxu0 %v2090
    %v2180 = vpop.f32.mrb[0].mxu0
    %v2181 = vadd.f32 0.0, %v2180
    %v2182 = vpop.f32.mrb[0].mxu0
    %2183 = vdwg.mxu0
    %v2184 = vld [vmem:[%s14] sm:$0x1]
    %2185 = vmatprep.subr.mxu0 0.0
    %2186 = vmatpush1.xpose.msra.mxu0 %v2085
    %2187 = vmatprep.subr.mxu0 0.0
    %2188 = vmatpush1.xpose.msra.mxu0 %v2090
    %2189 = vmatprep.subr.mxu0 0.0
    %2190 = vmatpush1.xpose.msra.mxu0 0.0
    %2191 = vmatprep.subr.mxu0 0.0
    %2192 = vmatpush1.xpose.msra.mxu0 0.0
    %2193 = vmatprep.subr.mxu0 0.0
    %2194 = vmatpush1.xpose.msra.mxu0 0.0
    %2195 = vmatprep.subr.mxu0 0.0
    %2196 = vmatpush1.xpose.msra.mxu0 0.0
    %2197 = vmatprep.subr.mxu0 0.0
    %2198 = vmatpush1.xpose.msra.mxu0 0.0
    %2199 = vmatprep.subr.mxu0 0.0
    %2200 = vmatpush1.xpose.msra.mxu0 0.0
    %2201 = vmatprep.subr.mxu0 0.0
    %2202 = vmatpush1.xpose.msra.mxu0 0.0
    %2203 = vmatprep.subr.mxu0 0.0
    %2204 = vmatpush1.xpose.msra.mxu0 0.0
    %2205 = vmatprep.subr.mxu0 0.0
    %2206 = vmatpush1.xpose.msra.mxu0 0.0
    %2207 = vmatprep.subr.mxu0 0.0
    %2208 = vmatpush1.xpose.msra.mxu0 0.0
    %2209 = vmatprep.subr.mxu0 0.0
    %2210 = vmatpush1.xpose.msra.mxu0 0.0
    %2211 = vmatprep.subr.mxu0 0.0
    %2212 = vmatpush1.xpose.msra.mxu0 0.0
    %2213 = vmatprep.subr.mxu0 0.0
    %2214 = vmatpush1.xpose.msra.mxu0 0.0
    %2215 = vmatprep.subr.mxu0 0.0
    %2216 = vmatpush1.xpose.msra.mxu0 0.0
    %2217 = vmatprep.subr.mxu0 0.0
    %2218 = vmatpush1.xpose.msra.mxu0 0.0
    %2219 = vmatprep.subr.mxu0 0.0
    %2220 = vmatpush1.xpose.msra.mxu0 0.0
    %2221 = vmatprep.subr.mxu0 0.0
    %2222 = vmatpush1.xpose.msra.mxu0 0.0
    %2223 = vmatprep.subr.mxu0 0.0
    %2224 = vmatpush1.xpose.msra.mxu0 0.0
    %2225 = vmatprep.subr.mxu0 0.0
    %2226 = vmatpush1.xpose.msra.mxu0 0.0
    %2227 = vmatprep.subr.mxu0 0.0
    %2228 = vmatpush1.xpose.msra.mxu0 0.0
    %2229 = vmatprep.subr.mxu0 0.0
    %2230 = vmatpush1.xpose.msra.mxu0 0.0
    %2231 = vmatprep.subr.mxu0 0.0
    %2232 = vmatpush1.xpose.msra.mxu0 0.0
    %2233 = vmatprep.subr.mxu0 0.0
    %2234 = vmatpush1.xpose.msra.mxu0 0.0
    %2235 = vmatprep.subr.mxu0 0.0
    %2236 = vmatpush1.xpose.msra.mxu0 0.0
    %2237 = vmatprep.subr.mxu0 0.0
    %2238 = vmatpush1.xpose.msra.mxu0 0.0
    %2239 = vmatprep.subr.mxu0 0.0
    %2240 = vmatpush1.xpose.msra.mxu0 0.0
    %2241 = vmatprep.subr.mxu0 0.0
    %2242 = vmatpush1.xpose.msra.mxu0 0.0
    %2243 = vmatprep.subr.mxu0 0.0
    %2244 = vmatpush1.xpose.msra.mxu0 0.0
    %2245 = vmatprep.subr.mxu0 0.0
    %2246 = vmatpush1.xpose.msra.mxu0 0.0
    %2247 = vmatprep.subr.mxu0 0.0
    %2248 = vmatpush1.xpose.msra.mxu0 0.0
    %2249 = vmatprep.mubr.f32.mxu0 0.0
    %2250 = vmatmul.mubr.f32.gmra.mrb[0].mxu0 %v2184
    %v2251 = vpop.f32.mrb[0].mxu0
    %v2252 = vadd.f32 0.0, %v2251
    %v2253 = vpop.f32.mrb[0].mxu0
    %2254 = vdwg.mxu0
    %2256 = vset.pattern.permute.xlu0 0
    %2257 = vperm.xlu0 %2256, %v2176
    %v2258 = vpop.permute.xlu0 %2257
    %2261 = vset.pattern.permute.xlu0 0
    %2262 = vperm.xlu0 %2261, %v2181
    %v2263 = vpop.permute.xlu0 %2262
    %v2265 = vlaneseq
    %v2266 = vshrl.u32 %v2265, 7
    %v2267 = vsub.s32 0, %v2266
    %v2268 = vrot.slane %v2252, %v2267
    %v2269 = vadd.f32 %v2258, %v2268
    %v2270 = vadd.f32 %v2263, %v2268
    %v2271 = vmax.f32 %v2269, 0.0
    %v2272 = vmax.f32 %v2270, 0.0
    %v2273 = vadd.f32 %v2271, %v166
    %v2274 = vadd.f32 %v2272, %v167
    %v2275 = vsel %vm1694, %v2273, -inf
    %2276 = vmax.xlane.f32.xlu0 %v2275
    %v2277 = vpop.xlane.xlu0 %2276
    %v2278 = vsel %vm1694, %v2274, -inf
    %2279 = vmax.xlane.f32.xlu0 %v2278
    %v2280 = vpop.xlane.xlu0 %2279
    %v2281 = vsub.f32 %v2273, %v2277
    %v2282 = vsub.f32 %v2274, %v2280
    %v2283 = vmul.f32 %v2281, 1.442695
    %v2284 = vpow.pop %v2283
    %v2285 = vmul.f32 %v2282, 1.442695
    %v2286 = vpow.pop %v2285
    %v2287 = vsel %vm1694, %v2284, 0.0
    %2288 = vadd.xlane.f32.xlu0 %v2287
    %v2289 = vpop.xlane.xlu0 %2288
    %v2290 = vsel %vm1694, %v2286, 0.0
    %2291 = vadd.xlane.f32.xlu0 %v2290
    %v2292 = vpop.xlane.xlu0 %2291
    %v2293 = vrcp.pop %v2289
    %v2294 = vrcp.pop %v2292
    %v2295 = vmul.f32 %v2284, %v2293
    %v2296 = vmul.f32 %v2286, %v2294
    %v2298 = vsel %vm1694, %v2295, 0
    %v2301 = vsel %vm1694, %v2296, 0
    %2303 = vmatprep.subr.mxu0 0.0
    %2304 = vmatpush1.msra.mxu0 %v2085
    %2305 = vmatprep.subr.mxu0 0.0
    %2306 = vmatpush1.msra.mxu0 %v2090
    %2307 = vmatprep.subr.mxu0 0.0
    %2308 = vmatpush1.msra.mxu0 0.0
    %2309 = vmatprep.subr.mxu0 0.0
    %2310 = vmatpush1.msra.mxu0 0.0
    %2311 = vmatprep.subr.mxu0 0.0
    %2312 = vmatpush1.msra.mxu0 0.0
    %2313 = vmatprep.subr.mxu0 0.0
    %2314 = vmatpush1.msra.mxu0 0.0
    %2315 = vmatprep.subr.mxu0 0.0
    %2316 = vmatpush1.msra.mxu0 0.0
    %2317 = vmatprep.subr.mxu0 0.0
    %2318 = vmatpush1.msra.mxu0 0.0
    %2319 = vmatprep.subr.mxu0 0.0
    %2320 = vmatpush1.msra.mxu0 0.0
    %2321 = vmatprep.subr.mxu0 0.0
    %2322 = vmatpush1.msra.mxu0 0.0
    %2323 = vmatprep.subr.mxu0 0.0
    %2324 = vmatpush1.msra.mxu0 0.0
    %2325 = vmatprep.subr.mxu0 0.0
    %2326 = vmatpush1.msra.mxu0 0.0
    %2327 = vmatprep.subr.mxu0 0.0
    %2328 = vmatpush1.msra.mxu0 0.0
    %2329 = vmatprep.subr.mxu0 0.0
    %2330 = vmatpush1.msra.mxu0 0.0
    %2331 = vmatprep.subr.mxu0 0.0
    %2332 = vmatpush1.msra.mxu0 0.0
    %2333 = vmatprep.subr.mxu0 0.0
    %2334 = vmatpush1.msra.mxu0 0.0
    %2335 = vmatprep.subr.mxu0 0.0
    %2336 = vmatpush1.msra.mxu0 0.0
    %2337 = vmatprep.subr.mxu0 0.0
    %2338 = vmatpush1.msra.mxu0 0.0
    %2339 = vmatprep.subr.mxu0 0.0
    %2340 = vmatpush1.msra.mxu0 0.0
    %2341 = vmatprep.subr.mxu0 0.0
    %2342 = vmatpush1.msra.mxu0 0.0
    %2343 = vmatprep.subr.mxu0 0.0
    %2344 = vmatpush1.msra.mxu0 0.0
    %2345 = vmatprep.subr.mxu0 0.0
    %2346 = vmatpush1.msra.mxu0 0.0
    %2347 = vmatprep.subr.mxu0 0.0
    %2348 = vmatpush1.msra.mxu0 0.0
    %2349 = vmatprep.subr.mxu0 0.0
    %2350 = vmatpush1.msra.mxu0 0.0
    %2351 = vmatprep.subr.mxu0 0.0
    %2352 = vmatpush1.msra.mxu0 0.0
    %2353 = vmatprep.subr.mxu0 0.0
    %2354 = vmatpush1.msra.mxu0 0.0
    %2355 = vmatprep.subr.mxu0 0.0
    %2356 = vmatpush1.msra.mxu0 0.0
    %2357 = vmatprep.subr.mxu0 0.0
    %2358 = vmatpush1.msra.mxu0 0.0
    %2359 = vmatprep.subr.mxu0 0.0
    %2360 = vmatpush1.msra.mxu0 0.0
    %2361 = vmatprep.subr.mxu0 0.0
    %2362 = vmatpush1.msra.mxu0 0.0
    %2363 = vmatprep.subr.mxu0 0.0
    %2364 = vmatpush1.msra.mxu0 0.0
    %2365 = vmatprep.subr.mxu0 0.0
    %2366 = vmatpush1.msra.mxu0 0.0
    %2367 = vmatprep.mubr.f32.mxu0 0.0
    %2368 = vmatmul.mubr.f32.gmra.mrb[0].mxu0 %v2298
    %v2369 = vpop.f32.mrb[0].mxu0
    %v2370 = vadd.f32 0.0, %v2369
    %v2371 = vpop.f32.mrb[0].mxu0
    %2372 = vmatprep.mubr.f32.mxu0 0.0
    %2373 = vmatmul.mubr.f32.gmra.mrb[0].mxu0 %v2301
    %v2374 = vpop.f32.mrb[0].mxu0
    %v2375 = vadd.f32 0.0, %v2374
    %v2376 = vpop.f32.mrb[0].mxu0
    %2377 = vdwg.mxu0
    %vm2378 = vcmp.gt.f32.partialorder %v2370, 0.0
    %vm2379 = vcmp.gt.f32.partialorder %v2375, 0.0
    %v2380 = vmin.f32 %v2370, 0.0
    %v2381 = vmin.f32 %v2375, 0.0
    %v2382 = vmul.f32 %v2380, 1.442695
    %v2383 = vpow.pop %v2382
    %v2384 = vmul.f32 %v2381, 1.442695
    %v2385 = vpow.pop %v2384
    %v2386 = vsub.f32 %v2383, 1.0
    %v2387 = vsub.f32 %v2385, 1.0
    %v2388 = vsel %vm2378, %v2370, %v2386
    %v2389 = vsel %vm2379, %v2375, %v2387
    %v2391 = vsel %vm1694, %v162, 0
    %v2394 = vsel %vm1694, %v163, 0
    %2396 = vmatprep.subr.mxu0 0.0
    %2397 = vmatpush1.msra.mxu0 %v1294
    %2398 = vmatprep.subr.mxu0 0.0
    %2399 = vmatpush1.msra.mxu0 %v1295
    %2400 = vmatprep.subr.mxu0 0.0
    %2401 = vmatpush1.msra.mxu0 0.0
    %2402 = vmatprep.subr.mxu0 0.0
    %2403 = vmatpush1.msra.mxu0 0.0
    %2404 = vmatprep.subr.mxu0 0.0
    %2405 = vmatpush1.msra.mxu0 0.0
    %2406 = vmatprep.subr.mxu0 0.0
    %2407 = vmatpush1.msra.mxu0 0.0
    %2408 = vmatprep.subr.mxu0 0.0
    %2409 = vmatpush1.msra.mxu0 0.0
    %2410 = vmatprep.subr.mxu0 0.0
    %2411 = vmatpush1.msra.mxu0 0.0
    %2412 = vmatprep.subr.mxu0 0.0
    %2413 = vmatpush1.msra.mxu0 0.0
    %2414 = vmatprep.subr.mxu0 0.0
    %2415 = vmatpush1.msra.mxu0 0.0
    %2416 = vmatprep.subr.mxu0 0.0
    %2417 = vmatpush1.msra.mxu0 0.0
    %2418 = vmatprep.subr.mxu0 0.0
    %2419 = vmatpush1.msra.mxu0 0.0
    %2420 = vmatprep.subr.mxu0 0.0
    %2421 = vmatpush1.msra.mxu0 0.0
    %2422 = vmatprep.subr.mxu0 0.0
    %2423 = vmatpush1.msra.mxu0 0.0
    %2424 = vmatprep.subr.mxu0 0.0
    %2425 = vmatpush1.msra.mxu0 0.0
    %2426 = vmatprep.subr.mxu0 0.0
    %2427 = vmatpush1.msra.mxu0 0.0
    %2428 = vmatprep.subr.mxu0 0.0
    %2429 = vmatpush1.msra.mxu0 0.0
    %2430 = vmatprep.subr.mxu0 0.0
    %2431 = vmatpush1.msra.mxu0 0.0
    %2432 = vmatprep.subr.mxu0 0.0
    %2433 = vmatpush1.msra.mxu0 0.0
    %2434 = vmatprep.subr.mxu0 0.0
    %2435 = vmatpush1.msra.mxu0 0.0
    %2436 = vmatprep.subr.mxu0 0.0
    %2437 = vmatpush1.msra.mxu0 0.0
    %2438 = vmatprep.subr.mxu0 0.0
    %2439 = vmatpush1.msra.mxu0 0.0
    %2440 = vmatprep.subr.mxu0 0.0
    %2441 = vmatpush1.msra.mxu0 0.0
    %2442 = vmatprep.subr.mxu0 0.0
    %2443 = vmatpush1.msra.mxu0 0.0
    %2444 = vmatprep.subr.mxu0 0.0
    %2445 = vmatpush1.msra.mxu0 0.0
    %2446 = vmatprep.subr.mxu0 0.0
    %2447 = vmatpush1.msra.mxu0 0.0
    %2448 = vmatprep.subr.mxu0 0.0
    %2449 = vmatpush1.msra.mxu0 0.0
    %2450 = vmatprep.subr.mxu0 0.0
    %2451 = vmatpush1.msra.mxu0 0.0
    %2452 = vmatprep.subr.mxu0 0.0
    %2453 = vmatpush1.msra.mxu0 0.0
    %2454 = vmatprep.subr.mxu0 0.0
    %2455 = vmatpush1.msra.mxu0 0.0
    %2456 = vmatprep.subr.mxu0 0.0
    %2457 = vmatpush1.msra.mxu0 0.0
    %2458 = vmatprep.subr.mxu0 0.0
    %2459 = vmatpush1.msra.mxu0 0.0
    %2460 = vmatprep.mubr.f32.mxu0 0.0
    %2461 = vmatmul.mubr.f32.gmra.mrb[0].mxu0 %v2391
    %v2462 = vpop.f32.mrb[0].mxu0
    %v2463 = vadd.f32 0.0, %v2462
    %v2464 = vpop.f32.mrb[0].mxu0
    %2465 = vmatprep.mubr.f32.mxu0 0.0
    %2466 = vmatmul.mubr.f32.gmra.mrb[0].mxu0 %v2394
    %v2467 = vpop.f32.mrb[0].mxu0
    %v2468 = vadd.f32 0.0, %v2467
    %v2469 = vpop.f32.mrb[0].mxu0
    %2470 = vdwg.mxu0
    %v2471 = vmul.f32 %v2463, 0.9
    %v2472 = vmul.f32 %v2468, 0.9
    %v2473 = vmul.f32 %v1294, 0.1
    %v2474 = vmul.f32 %v1295, 0.1
    %v2475 = vadd.f32 %v2471, %v2473
    %v2476 = vadd.f32 %v2472, %v2474
    %v2477 = vld [vmem:[#allocation9] sm:$0xf]
    %v2478 = vld [vmem:[#allocation9 + $0x4] sm:$0xf]
    %v2479 = vld [vmem:[#allocation9 + $0x8] sm:$0xf]
    %v2480 = vld [vmem:[#allocation9 + $0xc] sm:$0xf]
    %v2481 = vld [vmem:[#allocation9 + $0x10] sm:$0xf]
    %v2482 = vld [vmem:[#allocation9 + $0x14] sm:$0xf]
    %v2483 = vld [vmem:[#allocation9 + $0x18] sm:$0xf]
    %v2484 = vld [vmem:[#allocation9 + $0x1c] sm:$0xf]
    %v2485 = vld [vmem:[#allocation9 + $0x20] sm:$0xf]
    %v2486 = vld [vmem:[#allocation9 + $0x24] sm:$0xf]
    %v2487 = vld [vmem:[#allocation9 + $0x28] sm:$0xf]
    %v2488 = vld [vmem:[#allocation9 + $0x2c] sm:$0xf]
    %v2489 = vld [vmem:[#allocation9 + $0x30] sm:$0xf]
    %v2490 = vld [vmem:[#allocation9 + $0x34] sm:$0xf]
    %v2491 = vld [vmem:[#allocation9 + $0x38] sm:$0xf]
    %v2492 = vld [vmem:[#allocation9 + $0x3c] sm:$0xf]
    %v2493 = vunpack.c.l.bf16 %v2477
    %v2494 = vunpack.c.l.bf16 %v2478
    %v2495 = vunpack.c.l.bf16 %v2479
    %v2496 = vunpack.c.l.bf16 %v2480
    %v2497 = vunpack.c.l.bf16 %v2481
    %v2498 = vunpack.c.l.bf16 %v2482
    %v2499 = vunpack.c.l.bf16 %v2483
    %v2500 = vunpack.c.l.bf16 %v2484
    %v2501 = vunpack.c.l.bf16 %v2485
    %v2502 = vunpack.c.l.bf16 %v2486
    %v2503 = vunpack.c.l.bf16 %v2487
    %v2504 = vunpack.c.l.bf16 %v2488
    %v2505 = vunpack.c.l.bf16 %v2489
    %v2506 = vunpack.c.l.bf16 %v2490
    %v2507 = vunpack.c.l.bf16 %v2491
    %v2508 = vunpack.c.l.bf16 %v2492
    %2509 = vmatprep.subr.mxu0 0.0
    %2510 = vmatpush1.msra.mxu0 %v2493
    %2511 = vmatprep.subr.mxu0 0.0
    %2512 = vmatpush1.msra.mxu0 %v2494
    %2513 = vmatprep.subr.mxu0 0.0
    %2514 = vmatpush1.msra.mxu0 %v2495
    %2515 = vmatprep.subr.mxu0 0.0
    %2516 = vmatpush1.msra.mxu0 %v2496
    %2517 = vmatprep.subr.mxu0 0.0
    %2518 = vmatpush1.msra.mxu0 %v2497
    %2519 = vmatprep.subr.mxu0 0.0
    %2520 = vmatpush1.msra.mxu0 %v2498
    %2521 = vmatprep.subr.mxu0 0.0
    %2522 = vmatpush1.msra.mxu0 %v2499
    %2523 = vmatprep.subr.mxu0 0.0
    %2524 = vmatpush1.msra.mxu0 %v2500
    %2525 = vmatprep.subr.mxu0 0.0
    %2526 = vmatpush1.msra.mxu0 %v2501
    %2527 = vmatprep.subr.mxu0 0.0
    %2528 = vmatpush1.msra.mxu0 %v2502
    %2529 = vmatprep.subr.mxu0 0.0
    %2530 = vmatpush1.msra.mxu0 %v2503
    %2531 = vmatprep.subr.mxu0 0.0
    %2532 = vmatpush1.msra.mxu0 %v2504
    %2533 = vmatprep.subr.mxu0 0.0
    %2534 = vmatpush1.msra.mxu0 %v2505
    %2535 = vmatprep.subr.mxu0 0.0
    %2536 = vmatpush1.msra.mxu0 %v2506
    %2537 = vmatprep.subr.mxu0 0.0
    %2538 = vmatpush1.msra.mxu0 %v2507
    %2539 = vmatprep.subr.mxu0 0.0
    %2540 = vmatpush1.msra.mxu0 %v2508
    %2541 = vmatprep.subr.mxu0 0.0
    %2542 = vmatpush1.msra.mxu0 0.0
    %2543 = vmatprep.subr.mxu0 0.0
    %2544 = vmatpush1.msra.mxu0 0.0
    %2545 = vmatprep.subr.mxu0 0.0
    %2546 = vmatpush1.msra.mxu0 0.0
    %2547 = vmatprep.subr.mxu0 0.0
    %2548 = vmatpush1.msra.mxu0 0.0
    %2549 = vmatprep.subr.mxu0 0.0
    %2550 = vmatpush1.msra.mxu0 0.0
    %2551 = vmatprep.subr.mxu0 0.0
    %2552 = vmatpush1.msra.mxu0 0.0
    %2553 = vmatprep.subr.mxu0 0.0
    %2554 = vmatpush1.msra.mxu0 0.0
    %2555 = vmatprep.subr.mxu0 0.0
    %2556 = vmatpush1.msra.mxu0 0.0
    %2557 = vmatprep.subr.mxu0 0.0
    %2558 = vmatpush1.msra.mxu0 0.0
    %2559 = vmatprep.subr.mxu0 0.0
    %2560 = vmatpush1.msra.mxu0 0.0
    %2561 = vmatprep.subr.mxu0 0.0
    %2562 = vmatpush1.msra.mxu0 0.0
    %2563 = vmatprep.subr.mxu0 0.0
    %2564 = vmatpush1.msra.mxu0 0.0
    %2565 = vmatprep.subr.mxu0 0.0
    %2566 = vmatpush1.msra.mxu0 0.0
    %2567 = vmatprep.subr.mxu0 0.0
    %2568 = vmatpush1.msra.mxu0 0.0
    %2569 = vmatprep.subr.mxu0 0.0
    %2570 = vmatpush1.msra.mxu0 0.0
    %2571 = vmatprep.subr.mxu0 0.0
    %2572 = vmatpush1.msra.mxu0 0.0
    %2573 = vmatprep.mubr.f32.mxu0 0.0
    %2574 = vmatmul.mubr.f32.gmra.mrb[0].mxu0 %v2475
    %v2575 = vpop.f32.mrb[0].mxu0
    %v2576 = vadd.f32 0.0, %v2575
    %v2577 = vpop.f32.mrb[0].mxu0
    %2578 = vmatprep.mubr.f32.mxu0 0.0
    %2579 = vmatmul.mubr.f32.gmra.mrb[0].mxu0 %v2476
    %v2580 = vpop.f32.mrb[0].mxu0
    %v2581 = vadd.f32 0.0, %v2580
    %v2582 = vpop.f32.mrb[0].mxu0
    %2583 = vdwg.mxu0
    %v2584 = vmul.f32 %v2576, 0.4054651
    %v2585 = vmul.f32 %v2581, 0.4054651
    %v2586 = vmul.f32 %v2475, 0.5945349
    %v2587 = vmul.f32 %v2476, 0.5945349
    %v2588 = vadd.f32 %v2584, %v2586
    %v2589 = vadd.f32 %v2585, %v2587
    %v2590 = vld [vmem:[#allocation10] sm:$0xf]
    %v2591 = vld [vmem:[#allocation10 + $0x4] sm:$0xf]
    %v2592 = vld [vmem:[#allocation10 + $0x8] sm:$0xf]
    %v2593 = vld [vmem:[#allocation10 + $0xc] sm:$0xf]
    %v2594 = vld [vmem:[#allocation10 + $0x10] sm:$0xf]
    %v2595 = vld [vmem:[#allocation10 + $0x14] sm:$0xf]
    %v2596 = vld [vmem:[#allocation10 + $0x18] sm:$0xf]
    %v2597 = vld [vmem:[#allocation10 + $0x1c] sm:$0xf]
    %v2598 = vld [vmem:[#allocation10 + $0x20] sm:$0xf]
    %v2599 = vld [vmem:[#allocation10 + $0x24] sm:$0xf]
    %v2600 = vld [vmem:[#allocation10 + $0x28] sm:$0xf]
    %v2601 = vld [vmem:[#allocation10 + $0x2c] sm:$0xf]
    %v2602 = vld [vmem:[#allocation10 + $0x30] sm:$0xf]
    %v2603 = vld [vmem:[#allocation10 + $0x34] sm:$0xf]
    %v2604 = vld [vmem:[#allocation10 + $0x38] sm:$0xf]
    %v2605 = vld [vmem:[#allocation10 + $0x3c] sm:$0xf]
    %v2606 = vld [vmem:[#allocation10 + $0x40] sm:$0xf]
    %v2607 = vld [vmem:[#allocation10 + $0x44] sm:$0xf]
    %v2608 = vld [vmem:[#allocation10 + $0x48] sm:$0xf]
    %v2609 = vld [vmem:[#allocation10 + $0x4c] sm:$0xf]
    %v2610 = vld [vmem:[#allocation10 + $0x50] sm:$0xf]
    %v2611 = vld [vmem:[#allocation10 + $0x54] sm:$0xf]
    %v2612 = vld [vmem:[#allocation10 + $0x58] sm:$0xf]
    %v2613 = vld [vmem:[#allocation10 + $0x5c] sm:$0xf]
    %v2614 = vld [vmem:[#allocation10 + $0x60] sm:$0xf]
    %v2615 = vld [vmem:[#allocation10 + $0x64] sm:$0xf]
    %v2616 = vld [vmem:[#allocation10 + $0x68] sm:$0xf]
    %v2617 = vld [vmem:[#allocation10 + $0x6c] sm:$0xf]
    %v2618 = vld [vmem:[#allocation10 + $0x70] sm:$0xf]
    %v2619 = vld [vmem:[#allocation10 + $0x74] sm:$0xf]
    %v2620 = vld [vmem:[#allocation10 + $0x78] sm:$0xf]
    %v2621 = vld [vmem:[#allocation10 + $0x7c] sm:$0xf]
    %v2622 = vunpack.c.l.bf16 %v2590
    %v2623 = vunpack.c.l.bf16 %v2591
    %v2624 = vunpack.c.l.bf16 %v2592
    %v2625 = vunpack.c.l.bf16 %v2593
    %v2626 = vunpack.c.l.bf16 %v2594
    %v2627 = vunpack.c.l.bf16 %v2595
    %v2628 = vunpack.c.l.bf16 %v2596
    %v2629 = vunpack.c.l.bf16 %v2597
    %v2630 = vunpack.c.l.bf16 %v2598
    %v2631 = vunpack.c.l.bf16 %v2599
    %v2632 = vunpack.c.l.bf16 %v2600
    %v2633 = vunpack.c.l.bf16 %v2601
    %v2634 = vunpack.c.l.bf16 %v2602
    %v2635 = vunpack.c.l.bf16 %v2603
    %v2636 = vunpack.c.l.bf16 %v2604
    %v2637 = vunpack.c.l.bf16 %v2605
    %v2638 = vunpack.c.l.bf16 %v2606
    %v2639 = vunpack.c.l.bf16 %v2607
    %v2640 = vunpack.c.l.bf16 %v2608
    %v2641 = vunpack.c.l.bf16 %v2609
    %v2642 = vunpack.c.l.bf16 %v2610
    %v2643 = vunpack.c.l.bf16 %v2611
    %v2644 = vunpack.c.l.bf16 %v2612
    %v2645 = vunpack.c.l.bf16 %v2613
    %v2646 = vunpack.c.l.bf16 %v2614
    %v2647 = vunpack.c.l.bf16 %v2615
    %v2648 = vunpack.c.l.bf16 %v2616
    %v2649 = vunpack.c.l.bf16 %v2617
    %v2650 = vunpack.c.l.bf16 %v2618
    %v2651 = vunpack.c.l.bf16 %v2619
    %v2652 = vunpack.c.l.bf16 %v2620
    %v2653 = vunpack.c.l.bf16 %v2621
    %2654 = vmatprep.subr.mxu0 0.0
    %2655 = vmatpush1.msra.mxu0 %v2638
    %2656 = vmatprep.subr.mxu0 0.0
    %2657 = vmatpush1.msra.mxu0 %v2639
    %2658 = vmatprep.subr.mxu0 0.0
    %2659 = vmatpush1.msra.mxu0 %v2640
    %2660 = vmatprep.subr.mxu0 0.0
    %2661 = vmatpush1.msra.mxu0 %v2641
    %2662 = vmatprep.subr.mxu0 0.0
    %2663 = vmatpush1.msra.mxu0 %v2642
    %2664 = vmatprep.subr.mxu0 0.0
    %2665 = vmatpush1.msra.mxu0 %v2643
    %2666 = vmatprep.subr.mxu0 0.0
    %2667 = vmatpush1.msra.mxu0 %v2644
    %2668 = vmatprep.subr.mxu0 0.0
    %2669 = vmatpush1.msra.mxu0 %v2645
    %2670 = vmatprep.subr.mxu0 0.0
    %2671 = vmatpush1.msra.mxu0 %v2646
    %2672 = vmatprep.subr.mxu0 0.0
    %2673 = vmatpush1.msra.mxu0 %v2647
    %2674 = vmatprep.subr.mxu0 0.0
    %2675 = vmatpush1.msra.mxu0 %v2648
    %2676 = vmatprep.subr.mxu0 0.0
    %2677 = vmatpush1.msra.mxu0 %v2649
    %2678 = vmatprep.subr.mxu0 0.0
    %2679 = vmatpush1.msra.mxu0 %v2650
    %2680 = vmatprep.subr.mxu0 0.0
    %2681 = vmatpush1.msra.mxu0 %v2651
    %2682 = vmatprep.subr.mxu0 0.0
    %2683 = vmatpush1.msra.mxu0 %v2652
    %2684 = vmatprep.subr.mxu0 0.0
    %2685 = vmatpush1.msra.mxu0 %v2653
    %2686 = vmatprep.subr.mxu0 0.0
    %2687 = vmatpush1.msra.mxu0 0.0
    %2688 = vmatprep.subr.mxu0 0.0
    %2689 = vmatpush1.msra.mxu0 0.0
    %2690 = vmatprep.subr.mxu0 0.0
    %2691 = vmatpush1.msra.mxu0 0.0
    %2692 = vmatprep.subr.mxu0 0.0
    %2693 = vmatpush1.msra.mxu0 0.0
    %2694 = vmatprep.subr.mxu0 0.0
    %2695 = vmatpush1.msra.mxu0 0.0
    %2696 = vmatprep.subr.mxu0 0.0
    %2697 = vmatpush1.msra.mxu0 0.0
    %2698 = vmatprep.subr.mxu0 0.0
    %2699 = vmatpush1.msra.mxu0 0.0
    %2700 = vmatprep.subr.mxu0 0.0
    %2701 = vmatpush1.msra.mxu0 0.0
    %2702 = vmatprep.subr.mxu0 0.0
    %2703 = vmatpush1.msra.mxu0 0.0
    %2704 = vmatprep.subr.mxu0 0.0
    %2705 = vmatpush1.msra.mxu0 0.0
    %2706 = vmatprep.subr.mxu0 0.0
    %2707 = vmatpush1.msra.mxu0 0.0
    %2708 = vmatprep.subr.mxu0 0.0
    %2709 = vmatpush1.msra.mxu0 0.0
    %2710 = vmatprep.subr.mxu0 0.0
    %2711 = vmatpush1.msra.mxu0 0.0
    %2712 = vmatprep.subr.mxu0 0.0
    %2713 = vmatpush1.msra.mxu0 0.0
    %2714 = vmatprep.subr.mxu0 0.0
    %2715 = vmatpush1.msra.mxu0 0.0
    %2716 = vmatprep.subr.mxu0 0.0
    %2717 = vmatpush1.msra.mxu0 0.0
    %2718 = vmatprep.mubr.f32.mxu0 0.0
    %2719 = vmatmul.mubr.f32.gmra.mrb[0].mxu0 %v2588
    %v2720 = vpop.f32.mrb[0].mxu0
    %v2721 = vadd.f32 0.0, %v2720
    %v2722 = vpop.f32.mrb[0].mxu0
    %2723 = vmatprep.mubr.f32.mxu0 0.0
    %2724 = vmatmul.mubr.f32.gmra.mrb[0].mxu0 %v2589
    %v2725 = vpop.f32.mrb[0].mxu0
    %v2726 = vadd.f32 0.0, %v2725
    %v2727 = vpop.f32.mrb[0].mxu0
    %2728 = vdwg.mxu0
    %2729 = vmatprep.subr.mxu0 0.0
    %2730 = vmatpush1.msra.mxu0 %v2622
    %2731 = vmatprep.subr.mxu0 0.0
    %2732 = vmatpush1.msra.mxu0 %v2623
    %2733 = vmatprep.subr.mxu0 0.0
    %2734 = vmatpush1.msra.mxu0 %v2624
    %2735 = vmatprep.subr.mxu0 0.0
    %2736 = vmatpush1.msra.mxu0 %v2625
    %2737 = vmatprep.subr.mxu0 0.0
    %2738 = vmatpush1.msra.mxu0 %v2626
    %2739 = vmatprep.subr.mxu0 0.0
    %2740 = vmatpush1.msra.mxu0 %v2627
    %2741 = vmatprep.subr.mxu0 0.0
    %2742 = vmatpush1.msra.mxu0 %v2628
    %2743 = vmatprep.subr.mxu0 0.0
    %2744 = vmatpush1.msra.mxu0 %v2629
    %2745 = vmatprep.subr.mxu0 0.0
    %2746 = vmatpush1.msra.mxu0 %v2630
    %2747 = vmatprep.subr.mxu0 0.0
    %2748 = vmatpush1.msra.mxu0 %v2631
    %2749 = vmatprep.subr.mxu0 0.0
    %2750 = vmatpush1.msra.mxu0 %v2632
    %2751 = vmatprep.subr.mxu0 0.0
    %2752 = vmatpush1.msra.mxu0 %v2633
    %2753 = vmatprep.subr.mxu0 0.0
    %2754 = vmatpush1.msra.mxu0 %v2634
    %2755 = vmatprep.subr.mxu0 0.0
    %2756 = vmatpush1.msra.mxu0 %v2635
    %2757 = vmatprep.subr.mxu0 0.0
    %2758 = vmatpush1.msra.mxu0 %v2636
    %2759 = vmatprep.subr.mxu0 0.0
    %2760 = vmatpush1.msra.mxu0 %v2637
    %2761 = vmatprep.subr.mxu0 0.0
    %2762 = vmatpush1.msra.mxu0 0.0
    %2763 = vmatprep.subr.mxu0 0.0
    %2764 = vmatpush1.msra.mxu0 0.0
    %2765 = vmatprep.subr.mxu0 0.0
    %2766 = vmatpush1.msra.mxu0 0.0
    %2767 = vmatprep.subr.mxu0 0.0
    %2768 = vmatpush1.msra.mxu0 0.0
    %2769 = vmatprep.subr.mxu0 0.0
    %2770 = vmatpush1.msra.mxu0 0.0
    %2771 = vmatprep.subr.mxu0 0.0
    %2772 = vmatpush1.msra.mxu0 0.0
    %2773 = vmatprep.subr.mxu0 0.0
    %2774 = vmatpush1.msra.mxu0 0.0
    %2775 = vmatprep.subr.mxu0 0.0
    %2776 = vmatpush1.msra.mxu0 0.0
    %2777 = vmatprep.subr.mxu0 0.0
    %2778 = vmatpush1.msra.mxu0 0.0
    %2779 = vmatprep.subr.mxu0 0.0
    %2780 = vmatpush1.msra.mxu0 0.0
    %2781 = vmatprep.subr.mxu0 0.0
    %2782 = vmatpush1.msra.mxu0 0.0
    %2783 = vmatprep.subr.mxu0 0.0
    %2784 = vmatpush1.msra.mxu0 0.0
    %2785 = vmatprep.subr.mxu0 0.0
    %2786 = vmatpush1.msra.mxu0 0.0
    %2787 = vmatprep.subr.mxu0 0.0
    %2788 = vmatpush1.msra.mxu0 0.0
    %2789 = vmatprep.subr.mxu0 0.0
    %2790 = vmatpush1.msra.mxu0 0.0
    %2791 = vmatprep.subr.mxu0 0.0
    %2792 = vmatpush1.msra.mxu0 0.0
    %2793 = vmatprep.mubr.f32.mxu0 0.0
    %2794 = vmatmul.mubr.f32.gmra.mrb[0].mxu0 %v2388
    %v2795 = vpop.f32.mrb[0].mxu0
    %v2796 = vadd.f32 %v2721, %v2795
    %v2797 = vpop.f32.mrb[0].mxu0
    %2798 = vmatprep.mubr.f32.mxu0 0.0
    %2799 = vmatmul.mubr.f32.gmra.mrb[0].mxu0 %v2389
    %v2800 = vpop.f32.mrb[0].mxu0
    %v2801 = vadd.f32 %v2726, %v2800
    %v2802 = vpop.f32.mrb[0].mxu0
    %2803 = vdwg.mxu0
    %v2804 = vld [vmem:[%s17] sm:$0x1]
    %v2806 = vlaneseq
    %v2807 = vshrl.u32 %v2806, 7
    %v2808 = vsub.s32 0, %v2807
    %v2809 = vrot.slane %v2804, %v2808
    %v2811 = vadd.f32 %v2796, %v2809
    %v2812 = vadd.f32 %v2801, %v2809
    %v2813 = vadd.f32 %v1294, %v2811
    %v2814 = vadd.f32 %v1295, %v2812
    %2815 = vadd.xlane.f32.xlu0 %v2813
    %v2816 = vpop.xlane.xlu0 %2815
    %2817 = vadd.xlane.f32.xlu0 %v2814
    %v2818 = vpop.xlane.xlu0 %2817
    %v2819 = vrcp.pop 128.0
    %v2820 = vmul.f32 %v2816, %v2819
    %v2821 = vmul.f32 %v2818, %v2819
    %v2822 = vsub.f32 %v2813, %v2820
    %v2823 = vsub.f32 %v2814, %v2821
    %v2824 = vmul.f32 %v2822, %v2822
    %v2825 = vmul.f32 %v2823, %v2823
    %2826 = vadd.xlane.f32.xlu0 %v2824
    %v2827 = vpop.xlane.xlu0 %2826
    %2828 = vadd.xlane.f32.xlu0 %v2825
    %v2829 = vpop.xlane.xlu0 %2828
    %v2830 = vmul.f32 %v2827, %v2819
    %v2831 = vmul.f32 %v2829, %v2819
    %v2832 = vadd.f32 %v2830, 1e-05
    %v2833 = vadd.f32 %v2831, 1e-05
    %v2834 = vrsqrt.pop %v2832
    %v2835 = vrsqrt.pop %v2833
    %v2836 = vmul.f32 %v2822, %v2834
    %v2837 = vmul.f32 %v2823, %v2835
    %v2838 = vld [vmem:[%s18] sm:$0x1]
    %v2840 = vlaneseq
    %v2841 = vshrl.u32 %v2840, 7
    %v2842 = vsub.s32 0, %v2841
    %v2843 = vrot.slane %v2838, %v2842
    %v2845 = vmul.f32 %v2836, %v2843
    %v2846 = vmul.f32 %v2837, %v2843
    %v2847 = vld [vmem:[%s19] sm:$0x1]
    %v2849 = vlaneseq
    %v2850 = vshrl.u32 %v2849, 7
    %v2851 = vsub.s32 0, %v2850
    %v2852 = vrot.slane %v2847, %v2851
    %v2854 = vadd.f32 %v2845, %v2852
    %v2855 = vadd.f32 %v2846, %v2852
    %v2856 = vmax.f32 %v2854, 0.0
    %v2857 = vmax.f32 %v2855, 0.0
    %s2858 = scalar_lea.vmem %s9, 128
    %v2859 = vld [vmem:[%s2858] sm:$0xff]
    %v2860 = vld [vmem:[%s2858 + $0x8] sm:$0xff]
    %v2861 = vld [vmem:[%s2858 + $0x10] sm:$0xff]
    %v2862 = vld [vmem:[%s2858 + $0x18] sm:$0xff]
    %v2863 = vld [vmem:[%s2858 + $0x20] sm:$0xff]
    %v2864 = vld [vmem:[%s2858 + $0x28] sm:$0xff]
    %v2865 = vld [vmem:[%s2858 + $0x30] sm:$0xff]
    %v2866 = vld [vmem:[%s2858 + $0x38] sm:$0xff]
    %v2867 = vld [vmem:[%s2858 + $0x40] sm:$0xff]
    %v2868 = vld [vmem:[%s2858 + $0x48] sm:$0xff]
    %v2869 = vld [vmem:[%s2858 + $0x50] sm:$0xff]
    %v2870 = vld [vmem:[%s2858 + $0x58] sm:$0xff]
    %v2871 = vld [vmem:[%s2858 + $0x60] sm:$0xff]
    %v2872 = vld [vmem:[%s2858 + $0x68] sm:$0xff]
    %v2873 = vld [vmem:[%s2858 + $0x70] sm:$0xff]
    %v2874 = vld [vmem:[%s2858 + $0x78] sm:$0xff]
    %v2875 = vunpack.c.l.bf16 %v2859
    %v2876 = vunpack.c.h.bf16 %v2859
    %v2877 = vunpack.c.l.bf16 %v2860
    %v2878 = vunpack.c.h.bf16 %v2860
    %v2879 = vunpack.c.l.bf16 %v2861
    %v2880 = vunpack.c.h.bf16 %v2861
    %v2881 = vunpack.c.l.bf16 %v2862
    %v2882 = vunpack.c.h.bf16 %v2862
    %v2883 = vunpack.c.l.bf16 %v2863
    %v2884 = vunpack.c.h.bf16 %v2863
    %v2885 = vunpack.c.l.bf16 %v2864
    %v2886 = vunpack.c.h.bf16 %v2864
    %v2887 = vunpack.c.l.bf16 %v2865
    %v2888 = vunpack.c.h.bf16 %v2865
    %v2889 = vunpack.c.l.bf16 %v2866
    %v2890 = vunpack.c.h.bf16 %v2866
    %v2891 = vunpack.c.l.bf16 %v2867
    %v2892 = vunpack.c.h.bf16 %v2867
    %v2893 = vunpack.c.l.bf16 %v2868
    %v2894 = vunpack.c.h.bf16 %v2868
    %v2895 = vunpack.c.l.bf16 %v2869
    %v2896 = vunpack.c.h.bf16 %v2869
    %v2897 = vunpack.c.l.bf16 %v2870
    %v2898 = vunpack.c.h.bf16 %v2870
    %v2899 = vunpack.c.l.bf16 %v2871
    %v2900 = vunpack.c.h.bf16 %v2871
    %v2901 = vunpack.c.l.bf16 %v2872
    %v2902 = vunpack.c.h.bf16 %v2872
    %v2903 = vunpack.c.l.bf16 %v2873
    %v2904 = vunpack.c.h.bf16 %v2873
    %v2905 = vunpack.c.l.bf16 %v2874
    %v2906 = vunpack.c.h.bf16 %v2874
    %2907 = vmatprep.subr.mxu0 %v2876
    %2908 = vmatpush1.msra.mxu0 %v2875
    %2909 = vmatprep.subr.mxu0 %v2878
    %2910 = vmatpush1.msra.mxu0 %v2877
    %2911 = vmatprep.subr.mxu0 %v2880
    %2912 = vmatpush1.msra.mxu0 %v2879
    %2913 = vmatprep.subr.mxu0 %v2882
    %2914 = vmatpush1.msra.mxu0 %v2881
    %2915 = vmatprep.subr.mxu0 %v2884
    %2916 = vmatpush1.msra.mxu0 %v2883
    %2917 = vmatprep.subr.mxu0 %v2886
    %2918 = vmatpush1.msra.mxu0 %v2885
    %2919 = vmatprep.subr.mxu0 %v2888
    %2920 = vmatpush1.msra.mxu0 %v2887
    %2921 = vmatprep.subr.mxu0 %v2890
    %2922 = vmatpush1.msra.mxu0 %v2889
    %2923 = vmatprep.subr.mxu0 %v2892
    %2924 = vmatpush1.msra.mxu0 %v2891
    %2925 = vmatprep.subr.mxu0 %v2894
    %2926 = vmatpush1.msra.mxu0 %v2893
    %2927 = vmatprep.subr.mxu0 %v2896
    %2928 = vmatpush1.msra.mxu0 %v2895
    %2929 = vmatprep.subr.mxu0 %v2898
    %2930 = vmatpush1.msra.mxu0 %v2897
    %2931 = vmatprep.subr.mxu0 %v2900
    %2932 = vmatpush1.msra.mxu0 %v2899
    %2933 = vmatprep.subr.mxu0 %v2902
    %2934 = vmatpush1.msra.mxu0 %v2901
    %2935 = vmatprep.subr.mxu0 %v2904
    %2936 = vmatpush1.msra.mxu0 %v2903
    %2937 = vmatprep.subr.mxu0 %v2906
    %2938 = vmatpush1.msra.mxu0 %v2905
    %2939 = vmatprep.subr.mxu0 0.0
    %2940 = vmatpush1.msra.mxu0 0.0
    %2941 = vmatprep.subr.mxu0 0.0
    %2942 = vmatpush1.msra.mxu0 0.0
    %2943 = vmatprep.subr.mxu0 0.0
    %2944 = vmatpush1.msra.mxu0 0.0
    %2945 = vmatprep.subr.mxu0 0.0
    %2946 = vmatpush1.msra.mxu0 0.0
    %2947 = vmatprep.subr.mxu0 0.0
    %2948 = vmatpush1.msra.mxu0 0.0
    %2949 = vmatprep.subr.mxu0 0.0
    %2950 = vmatpush1.msra.mxu0 0.0
    %2951 = vmatprep.subr.mxu0 0.0
    %2952 = vmatpush1.msra.mxu0 0.0
    %2953 = vmatprep.subr.mxu0 0.0
    %2954 = vmatpush1.msra.mxu0 0.0
    %2955 = vmatprep.subr.mxu0 0.0
    %2956 = vmatpush1.msra.mxu0 0.0
    %2957 = vmatprep.subr.mxu0 0.0
    %2958 = vmatpush1.msra.mxu0 0.0
    %2959 = vmatprep.subr.mxu0 0.0
    %2960 = vmatpush1.msra.mxu0 0.0
    %2961 = vmatprep.subr.mxu0 0.0
    %2962 = vmatpush1.msra.mxu0 0.0
    %2963 = vmatprep.subr.mxu0 0.0
    %2964 = vmatpush1.msra.mxu0 0.0
    %2965 = vmatprep.subr.mxu0 0.0
    %2966 = vmatpush1.msra.mxu0 0.0
    %2967 = vmatprep.subr.mxu0 0.0
    %2968 = vmatpush1.msra.mxu0 0.0
    %2969 = vmatprep.subr.mxu0 0.0
    %2970 = vmatpush1.msra.mxu0 0.0
    %2971 = vmatprep.mubr.f32.mxu0 0.0
    %2972 = vmatmul.mubr.f32.gmra.mrb[0].mxu0 %v2856
    %v2973 = vpop.f32.mrb[0].mxu0
    %v2974 = vadd.f32 0.0, %v2973
    %v2975 = vpop.f32.mrb[0].mxu0
    %v2976 = vadd.f32 0.0, %v2975
    %2977 = vmatprep.mubr.f32.mxu0 0.0
    %2978 = vmatmul.mubr.f32.gmra.mrb[0].mxu0 %v2857
    %v2979 = vpop.f32.mrb[0].mxu0
    %v2980 = vadd.f32 0.0, %v2979
    %v2981 = vpop.f32.mrb[0].mxu0
    %v2982 = vadd.f32 0.0, %v2981
    %2983 = vdwg.mxu0
    %s2984 = scalar_lea.vmem %s10, 256
    %v2985 = vld [vmem:[%s2984] sm:$0xff]
    %v2986 = vld [vmem:[%s2984 + $0x8] sm:$0xff]
    %v2987 = vld [vmem:[%s2984 + $0x10] sm:$0xff]
    %v2988 = vld [vmem:[%s2984 + $0x18] sm:$0xff]
    %v2989 = vld [vmem:[%s2984 + $0x20] sm:$0xff]
    %v2990 = vld [vmem:[%s2984 + $0x28] sm:$0xff]
    %v2991 = vld [vmem:[%s2984 + $0x30] sm:$0xff]
    %v2992 = vld [vmem:[%s2984 + $0x38] sm:$0xff]
    %v2993 = vld [vmem:[%s2984 + $0x40] sm:$0xff]
    %v2994 = vld [vmem:[%s2984 + $0x48] sm:$0xff]
    %v2995 = vld [vmem:[%s2984 + $0x50] sm:$0xff]
    %v2996 = vld [vmem:[%s2984 + $0x58] sm:$0xff]
    %v2997 = vld [vmem:[%s2984 + $0x60] sm:$0xff]
    %v2998 = vld [vmem:[%s2984 + $0x68] sm:$0xff]
    %v2999 = vld [vmem:[%s2984 + $0x70] sm:$0xff]
    %v3000 = vld [vmem:[%s2984 + $0x78] sm:$0xff]
    %v3001 = vld [vmem:[%s2984 + $0x80] sm:$0xff]
    %v3002 = vld [vmem:[%s2984 + $0x88] sm:$0xff]
    %v3003 = vld [vmem:[%s2984 + $0x90] sm:$0xff]
    %v3004 = vld [vmem:[%s2984 + $0x98] sm:$0xff]
    %v3005 = vld [vmem:[%s2984 + $0xa0] sm:$0xff]
    %v3006 = vld [vmem:[%s2984 + $0xa8] sm:$0xff]
    %v3007 = vld [vmem:[%s2984 + $0xb0] sm:$0xff]
    %v3008 = vld [vmem:[%s2984 + $0xb8] sm:$0xff]
    %v3009 = vld [vmem:[%s2984 + $0xc0] sm:$0xff]
    %v3010 = vld [vmem:[%s2984 + $0xc8] sm:$0xff]
    %v3011 = vld [vmem:[%s2984 + $0xd0] sm:$0xff]
    %v3012 = vld [vmem:[%s2984 + $0xd8] sm:$0xff]
    %v3013 = vld [vmem:[%s2984 + $0xe0] sm:$0xff]
    %v3014 = vld [vmem:[%s2984 + $0xe8] sm:$0xff]
    %v3015 = vld [vmem:[%s2984 + $0xf0] sm:$0xff]
    %v3016 = vld [vmem:[%s2984 + $0xf8] sm:$0xff]
    %3017 = vmatprep.subr.mxu0 0.0
    %3018 = vmatpush1.msra.mxu0 %v2985
    %3019 = vmatprep.subr.mxu0 0.0
    %3020 = vmatpush1.msra.mxu0 %v2986
    %3021 = vmatprep.subr.mxu0 0.0
    %3022 = vmatpush1.msra.mxu0 %v2987
    %3023 = vmatprep.subr.mxu0 0.0
    %3024 = vmatpush1.msra.mxu0 %v2988
    %3025 = vmatprep.subr.mxu0 0.0
    %3026 = vmatpush1.msra.mxu0 %v2989
    %3027 = vmatprep.subr.mxu0 0.0
    %3028 = vmatpush1.msra.mxu0 %v2990
    %3029 = vmatprep.subr.mxu0 0.0
    %3030 = vmatpush1.msra.mxu0 %v2991
    %3031 = vmatprep.subr.mxu0 0.0
    %3032 = vmatpush1.msra.mxu0 %v2992
    %3033 = vmatprep.subr.mxu0 0.0
    %3034 = vmatpush1.msra.mxu0 %v2993
    %3035 = vmatprep.subr.mxu0 0.0
    %3036 = vmatpush1.msra.mxu0 %v2994
    %3037 = vmatprep.subr.mxu0 0.0
    %3038 = vmatpush1.msra.mxu0 %v2995
    %3039 = vmatprep.subr.mxu0 0.0
    %3040 = vmatpush1.msra.mxu0 %v2996
    %3041 = vmatprep.subr.mxu0 0.0
    %3042 = vmatpush1.msra.mxu0 %v2997
    %3043 = vmatprep.subr.mxu0 0.0
    %3044 = vmatpush1.msra.mxu0 %v2998
    %3045 = vmatprep.subr.mxu0 0.0
    %3046 = vmatpush1.msra.mxu0 %v2999
    %3047 = vmatprep.subr.mxu0 0.0
    %3048 = vmatpush1.msra.mxu0 %v3000
    %3049 = vmatprep.subr.mxu0 0.0
    %3050 = vmatpush1.msra.mxu0 %v3001
    %3051 = vmatprep.subr.mxu0 0.0
    %3052 = vmatpush1.msra.mxu0 %v3002
    %3053 = vmatprep.subr.mxu0 0.0
    %3054 = vmatpush1.msra.mxu0 %v3003
    %3055 = vmatprep.subr.mxu0 0.0
    %3056 = vmatpush1.msra.mxu0 %v3004
    %3057 = vmatprep.subr.mxu0 0.0
    %3058 = vmatpush1.msra.mxu0 %v3005
    %3059 = vmatprep.subr.mxu0 0.0
    %3060 = vmatpush1.msra.mxu0 %v3006
    %3061 = vmatprep.subr.mxu0 0.0
    %3062 = vmatpush1.msra.mxu0 %v3007
    %3063 = vmatprep.subr.mxu0 0.0
    %3064 = vmatpush1.msra.mxu0 %v3008
    %3065 = vmatprep.subr.mxu0 0.0
    %3066 = vmatpush1.msra.mxu0 %v3009
    %3067 = vmatprep.subr.mxu0 0.0
    %3068 = vmatpush1.msra.mxu0 %v3010
    %3069 = vmatprep.subr.mxu0 0.0
    %3070 = vmatpush1.msra.mxu0 %v3011
    %3071 = vmatprep.subr.mxu0 0.0
    %3072 = vmatpush1.msra.mxu0 %v3012
    %3073 = vmatprep.subr.mxu0 0.0
    %3074 = vmatpush1.msra.mxu0 %v3013
    %3075 = vmatprep.subr.mxu0 0.0
    %3076 = vmatpush1.msra.mxu0 %v3014
    %3077 = vmatprep.subr.mxu0 0.0
    %3078 = vmatpush1.msra.mxu0 %v3015
    %3079 = vmatprep.subr.mxu0 0.0
    %3080 = vmatpush1.msra.mxu0 %v3016
    %3081 = vmatprep.mubr.f32.mxu0 %v2976
    %3082 = vmatmul.mubr.f32.gmra.mrb[0].mxu0 %v2974
    %v3083 = vpop.f32.mrb[0].mxu0
    %v3084 = vadd.f32 0.0, %v3083
    %v3085 = vpop.f32.mrb[0].mxu0
    %3086 = vmatprep.mubr.f32.mxu0 %v2982
    %3087 = vmatmul.mubr.f32.gmra.mrb[0].mxu0 %v2980
    %v3088 = vpop.f32.mrb[0].mxu0
    %v3089 = vadd.f32 0.0, %v3088
    %v3090 = vpop.f32.mrb[0].mxu0
    %3091 = vdwg.mxu0
    %s3092 = scalar_lea.vmem [#allocation7], 4
    %v3093 = vld [vmem:[%s3092] sm:$0xf]
    %v3096 = vunpack.c.l.s4 1983009808
    %v3097 = vunpack.c.0.s8 %v3096
    %v3098 = vlaneseq
    %v3099 = vshrl.u32 %v3098, 7
    %v3100 = vsub.s32 %v3097, %v3099
    %v3101 = vrot.slane %v3093, %v3100
    %v3102 = vcombine.high %v3101, %v3101
    %3105 = vmatprep.subr.mxu0 %v2976
    %3106 = vmatpush1.xpose.msra.mxu0 %v2974
    %3107 = vmatprep.subr.mxu0 %v2982
    %3108 = vmatpush1.xpose.msra.mxu0 %v2980
    %3109 = vmatprep.subr.mxu0 0.0
    %3110 = vmatpush1.xpose.msra.mxu0 0.0
    %3111 = vmatprep.subr.mxu0 0.0
    %3112 = vmatpush1.xpose.msra.mxu0 0.0
    %3113 = vmatprep.subr.mxu0 0.0
    %3114 = vmatpush1.xpose.msra.mxu0 0.0
    %3115 = vmatprep.subr.mxu0 0.0
    %3116 = vmatpush1.xpose.msra.mxu0 0.0
    %3117 = vmatprep.subr.mxu0 0.0
    %3118 = vmatpush1.xpose.msra.mxu0 0.0
    %3119 = vmatprep.subr.mxu0 0.0
    %3120 = vmatpush1.xpose.msra.mxu0 0.0
    %3121 = vmatprep.subr.mxu0 0.0
    %3122 = vmatpush1.xpose.msra.mxu0 0.0
    %3123 = vmatprep.subr.mxu0 0.0
    %3124 = vmatpush1.xpose.msra.mxu0 0.0
    %3125 = vmatprep.subr.mxu0 0.0
    %3126 = vmatpush1.xpose.msra.mxu0 0.0
    %3127 = vmatprep.subr.mxu0 0.0
    %3128 = vmatpush1.xpose.msra.mxu0 0.0
    %3129 = vmatprep.subr.mxu0 0.0
    %3130 = vmatpush1.xpose.msra.mxu0 0.0
    %3131 = vmatprep.subr.mxu0 0.0
    %3132 = vmatpush1.xpose.msra.mxu0 0.0
    %3133 = vmatprep.subr.mxu0 0.0
    %3134 = vmatpush1.xpose.msra.mxu0 0.0
    %3135 = vmatprep.subr.mxu0 0.0
    %3136 = vmatpush1.xpose.msra.mxu0 0.0
    %3137 = vmatprep.subr.mxu0 0.0
    %3138 = vmatpush1.xpose.msra.mxu0 0.0
    %3139 = vmatprep.subr.mxu0 0.0
    %3140 = vmatpush1.xpose.msra.mxu0 0.0
    %3141 = vmatprep.subr.mxu0 0.0
    %3142 = vmatpush1.xpose.msra.mxu0 0.0
    %3143 = vmatprep.subr.mxu0 0.0
    %3144 = vmatpush1.xpose.msra.mxu0 0.0
    %3145 = vmatprep.subr.mxu0 0.0
    %3146 = vmatpush1.xpose.msra.mxu0 0.0
    %3147 = vmatprep.subr.mxu0 0.0
    %3148 = vmatpush1.xpose.msra.mxu0 0.0
    %3149 = vmatprep.subr.mxu0 0.0
    %3150 = vmatpush1.xpose.msra.mxu0 0.0
    %3151 = vmatprep.subr.mxu0 0.0
    %3152 = vmatpush1.xpose.msra.mxu0 0.0
    %3153 = vmatprep.subr.mxu0 0.0
    %3154 = vmatpush1.xpose.msra.mxu0 0.0
    %3155 = vmatprep.subr.mxu0 0.0
    %3156 = vmatpush1.xpose.msra.mxu0 0.0
    %3157 = vmatprep.subr.mxu0 0.0
    %3158 = vmatpush1.xpose.msra.mxu0 0.0
    %3159 = vmatprep.subr.mxu0 0.0
    %3160 = vmatpush1.xpose.msra.mxu0 0.0
    %3161 = vmatprep.subr.mxu0 0.0
    %3162 = vmatpush1.xpose.msra.mxu0 0.0
    %3163 = vmatprep.subr.mxu0 0.0
    %3164 = vmatpush1.xpose.msra.mxu0 0.0
    %3165 = vmatprep.subr.mxu0 0.0
    %3166 = vmatpush1.xpose.msra.mxu0 0.0
    %3167 = vmatprep.subr.mxu0 0.0
    %3168 = vmatpush1.xpose.msra.mxu0 0.0
    %3169 = vmatprep.mubr.f32.mxu0 %v3102
    %3170 = vmatmul.mubr.f32.gmra.mrb[0].mxu0 %v3101
    %v3171 = vpop.f32.mrb[0].mxu0
    %v3172 = vadd.f32 0.0, %v3171
    %v3173 = vpop.f32.mrb[0].mxu0
    %3174 = vdwg.mxu0
    %s3175 = scalar_lea.vmem %s12, 128
    %v3176 = vld [vmem:[%s3175] sm:$0xf]
    %v3177 = vld [vmem:[%s3175 + $0x4] sm:$0xf]
    %v3178 = vld [vmem:[%s3175 + $0x8] sm:$0xf]
    %v3179 = vld [vmem:[%s3175 + $0xc] sm:$0xf]
    %v3180 = vld [vmem:[%s3175 + $0x10] sm:$0xf]
    %v3181 = vld [vmem:[%s3175 + $0x14] sm:$0xf]
    %v3182 = vld [vmem:[%s3175 + $0x18] sm:$0xf]
    %v3183 = vld [vmem:[%s3175 + $0x1c] sm:$0xf]
    %v3184 = vld [vmem:[%s3175 + $0x20] sm:$0xf]
    %v3185 = vld [vmem:[%s3175 + $0x24] sm:$0xf]
    %v3186 = vld [vmem:[%s3175 + $0x28] sm:$0xf]
    %v3187 = vld [vmem:[%s3175 + $0x2c] sm:$0xf]
    %v3188 = vld [vmem:[%s3175 + $0x30] sm:$0xf]
    %v3189 = vld [vmem:[%s3175 + $0x34] sm:$0xf]
    %v3190 = vld [vmem:[%s3175 + $0x38] sm:$0xf]
    %v3191 = vld [vmem:[%s3175 + $0x3c] sm:$0xf]
    %v3192 = vld [vmem:[%s3175 + $0x40] sm:$0xf]
    %v3193 = vld [vmem:[%s3175 + $0x44] sm:$0xf]
    %v3194 = vld [vmem:[%s3175 + $0x48] sm:$0xf]
    %v3195 = vld [vmem:[%s3175 + $0x4c] sm:$0xf]
    %v3196 = vld [vmem:[%s3175 + $0x50] sm:$0xf]
    %v3197 = vld [vmem:[%s3175 + $0x54] sm:$0xf]
    %v3198 = vld [vmem:[%s3175 + $0x58] sm:$0xf]
    %v3199 = vld [vmem:[%s3175 + $0x5c] sm:$0xf]
    %v3200 = vld [vmem:[%s3175 + $0x60] sm:$0xf]
    %v3201 = vld [vmem:[%s3175 + $0x64] sm:$0xf]
    %v3202 = vld [vmem:[%s3175 + $0x68] sm:$0xf]
    %v3203 = vld [vmem:[%s3175 + $0x6c] sm:$0xf]
    %v3204 = vld [vmem:[%s3175 + $0x70] sm:$0xf]
    %v3205 = vld [vmem:[%s3175 + $0x74] sm:$0xf]
    %v3206 = vld [vmem:[%s3175 + $0x78] sm:$0xf]
    %v3207 = vld [vmem:[%s3175 + $0x7c] sm:$0xf]
    %v3208 = vunpack.c.l.bf16 %v3176
    %v3209 = vunpack.c.l.bf16 %v3177
    %v3210 = vunpack.c.l.bf16 %v3178
    %v3211 = vunpack.c.l.bf16 %v3179
    %v3212 = vunpack.c.l.bf16 %v3180
    %v3213 = vunpack.c.l.bf16 %v3181
    %v3214 = vunpack.c.l.bf16 %v3182
    %v3215 = vunpack.c.l.bf16 %v3183
    %v3216 = vunpack.c.l.bf16 %v3184
    %v3217 = vunpack.c.l.bf16 %v3185
    %v3218 = vunpack.c.l.bf16 %v3186
    %v3219 = vunpack.c.l.bf16 %v3187
    %v3220 = vunpack.c.l.bf16 %v3188
    %v3221 = vunpack.c.l.bf16 %v3189
    %v3222 = vunpack.c.l.bf16 %v3190
    %v3223 = vunpack.c.l.bf16 %v3191
    %v3224 = vunpack.c.l.bf16 %v3192
    %v3225 = vunpack.c.l.bf16 %v3193
    %v3226 = vunpack.c.l.bf16 %v3194
    %v3227 = vunpack.c.l.bf16 %v3195
    %v3228 = vunpack.c.l.bf16 %v3196
    %v3229 = vunpack.c.l.bf16 %v3197
    %v3230 = vunpack.c.l.bf16 %v3198
    %v3231 = vunpack.c.l.bf16 %v3199
    %v3232 = vunpack.c.l.bf16 %v3200
    %v3233 = vunpack.c.l.bf16 %v3201
    %v3234 = vunpack.c.l.bf16 %v3202
    %v3235 = vunpack.c.l.bf16 %v3203
    %v3236 = vunpack.c.l.bf16 %v3204
    %v3237 = vunpack.c.l.bf16 %v3205
    %v3238 = vunpack.c.l.bf16 %v3206
    %v3239 = vunpack.c.l.bf16 %v3207
    %3241 = vset.pattern.permute.xlu0 0
    %3242 = vperm.xlu0 %3241, %v3084
    %v3243 = vpop.permute.xlu0 %3242
    %3246 = vset.pattern.permute.xlu0 0
    %3247 = vperm.xlu0 %3246, %v3089
    %v3248 = vpop.permute.xlu0 %3247
    %v3250 = vlaneseq
    %v3251 = vshrl.u32 %v3250, 7
    %v3252 = vsub.s32 0, %v3251
    %v3253 = vrot.slane %v3172, %v3252
    %v3254 = vadd.f32 %v3243, %v3253
    %v3255 = vadd.f32 %v3248, %v3253
    %v3256 = vmax.f32 %v3254, 0.0
    %v3257 = vmax.f32 %v3255, 0.0
    %v3258 = vadd.f32 %v3256, %v166
    %v3259 = vadd.f32 %v3257, %v167
    %v3260 = vsel %vm1694, %v3258, -inf
    %3261 = vmax.xlane.f32.xlu0 %v3260
    %v3262 = vpop.xlane.xlu0 %3261
    %v3263 = vsel %vm1694, %v3259, -inf
    %3264 = vmax.xlane.f32.xlu0 %v3263
    %v3265 = vpop.xlane.xlu0 %3264
    %v3266 = vsub.f32 %v3258, %v3262
    %v3267 = vsub.f32 %v3259, %v3265
    %v3268 = vmul.f32 %v3266, 1.442695
    %v3269 = vpow.pop %v3268
    %v3270 = vmul.f32 %v3267, 1.442695
    %v3271 = vpow.pop %v3270
    %v3272 = vsel %vm1694, %v3269, 0.0
    %3273 = vadd.xlane.f32.xlu0 %v3272
    %v3274 = vpop.xlane.xlu0 %3273
    %v3275 = vsel %vm1694, %v3271, 0.0
    %3276 = vadd.xlane.f32.xlu0 %v3275
    %v3277 = vpop.xlane.xlu0 %3276
    %v3278 = vrcp.pop %v3274
    %v3279 = vrcp.pop %v3277
    %v3280 = vmul.f32 %v3269, %v3278
    %v3281 = vmul.f32 %v3271, %v3279
    %v3283 = vsel %vm1694, %v3280, 0
    %v3286 = vsel %vm1694, %v3281, 0
    %3288 = vmatprep.subr.mxu0 0.0
    %3289 = vmatpush1.msra.mxu0 %v2974
    %3290 = vmatprep.subr.mxu0 0.0
    %3291 = vmatpush1.msra.mxu0 %v2980
    %3292 = vmatprep.subr.mxu0 0.0
    %3293 = vmatpush1.msra.mxu0 0.0
    %3294 = vmatprep.subr.mxu0 0.0
    %3295 = vmatpush1.msra.mxu0 0.0
    %3296 = vmatprep.subr.mxu0 0.0
    %3297 = vmatpush1.msra.mxu0 0.0
    %3298 = vmatprep.subr.mxu0 0.0
    %3299 = vmatpush1.msra.mxu0 0.0
    %3300 = vmatprep.subr.mxu0 0.0
    %3301 = vmatpush1.msra.mxu0 0.0
    %3302 = vmatprep.subr.mxu0 0.0
    %3303 = vmatpush1.msra.mxu0 0.0
    %3304 = vmatprep.subr.mxu0 0.0
    %3305 = vmatpush1.msra.mxu0 0.0
    %3306 = vmatprep.subr.mxu0 0.0
    %3307 = vmatpush1.msra.mxu0 0.0
    %3308 = vmatprep.subr.mxu0 0.0
    %3309 = vmatpush1.msra.mxu0 0.0
    %3310 = vmatprep.subr.mxu0 0.0
    %3311 = vmatpush1.msra.mxu0 0.0
    %3312 = vmatprep.subr.mxu0 0.0
    %3313 = vmatpush1.msra.mxu0 0.0
    %3314 = vmatprep.subr.mxu0 0.0
    %3315 = vmatpush1.msra.mxu0 0.0
    %3316 = vmatprep.subr.mxu0 0.0
    %3317 = vmatpush1.msra.mxu0 0.0
    %3318 = vmatprep.subr.mxu0 0.0
    %3319 = vmatpush1.msra.mxu0 0.0
    %3320 = vmatprep.subr.mxu0 0.0
    %3321 = vmatpush1.msra.mxu0 0.0
    %3322 = vmatprep.subr.mxu0 0.0
    %3323 = vmatpush1.msra.mxu0 0.0
    %3324 = vmatprep.subr.mxu0 0.0
    %3325 = vmatpush1.msra.mxu0 0.0
    %3326 = vmatprep.subr.mxu0 0.0
    %3327 = vmatpush1.msra.mxu0 0.0
    %3328 = vmatprep.subr.mxu0 0.0
    %3329 = vmatpush1.msra.mxu0 0.0
    %3330 = vmatprep.subr.mxu0 0.0
    %3331 = vmatpush1.msra.mxu0 0.0
    %3332 = vmatprep.subr.mxu0 0.0
    %3333 = vmatpush1.msra.mxu0 0.0
    %3334 = vmatprep.subr.mxu0 0.0
    %3335 = vmatpush1.msra.mxu0 0.0
    %3336 = vmatprep.subr.mxu0 0.0
    %3337 = vmatpush1.msra.mxu0 0.0
    %3338 = vmatprep.subr.mxu0 0.0
    %3339 = vmatpush1.msra.mxu0 0.0
    %3340 = vmatprep.subr.mxu0 0.0
    %3341 = vmatpush1.msra.mxu0 0.0
    %3342 = vmatprep.subr.mxu0 0.0
    %3343 = vmatpush1.msra.mxu0 0.0
    %3344 = vmatprep.subr.mxu0 0.0
    %3345 = vmatpush1.msra.mxu0 0.0
    %3346 = vmatprep.subr.mxu0 0.0
    %3347 = vmatpush1.msra.mxu0 0.0
    %3348 = vmatprep.subr.mxu0 0.0
    %3349 = vmatpush1.msra.mxu0 0.0
    %3350 = vmatprep.subr.mxu0 0.0
    %3351 = vmatpush1.msra.mxu0 0.0
    %3352 = vmatprep.mubr.f32.mxu0 0.0
    %3353 = vmatmul.mubr.f32.gmra.mrb[0].mxu0 %v3283
    %v3354 = vpop.f32.mrb[0].mxu0
    %v3355 = vadd.f32 0.0, %v3354
    %v3356 = vpop.f32.mrb[0].mxu0
    %3357 = vmatprep.mubr.f32.mxu0 0.0
    %3358 = vmatmul.mubr.f32.gmra.mrb[0].mxu0 %v3286
    %v3359 = vpop.f32.mrb[0].mxu0
    %v3360 = vadd.f32 0.0, %v3359
    %v3361 = vpop.f32.mrb[0].mxu0
    %3362 = vdwg.mxu0
    %vm3363 = vcmp.gt.f32.partialorder %v3355, 0.0
    %vm3364 = vcmp.gt.f32.partialorder %v3360, 0.0
    %v3365 = vmin.f32 %v3355, 0.0
    %v3366 = vmin.f32 %v3360, 0.0
    %v3367 = vmul.f32 %v3365, 1.442695
    %v3368 = vpow.pop %v3367
    %v3369 = vmul.f32 %v3366, 1.442695
    %v3370 = vpow.pop %v3369
    %v3371 = vsub.f32 %v3368, 1.0
    %v3372 = vsub.f32 %v3370, 1.0
    %v3373 = vsel %vm3363, %v3355, %v3371
    %v3374 = vsel %vm3364, %v3360, %v3372
    %3375 = vset.pattern.permute.xlu0 1
    %3376 = vperm.xlu0 %3375, %v3084
    %v3377 = vpop.permute.xlu0 %3376
    %3379 = vset.pattern.permute.xlu0 1
    %3380 = vperm.xlu0 %3379, %v3089
    %v3381 = vpop.permute.xlu0 %3380
    %v3383 = vlaneseq
    %v3384 = vshrl.u32 %v3383, 7
    %v3385 = vsub.s32 1, %v3384
    %v3386 = vrot.slane %v3172, %v3385
    %v3387 = vadd.f32 %v3377, %v3386
    %v3388 = vadd.f32 %v3381, %v3386
    %v3389 = vmax.f32 %v3387, 0.0
    %v3390 = vmax.f32 %v3388, 0.0
    %v3391 = vadd.f32 %v3389, %v166
    %v3392 = vadd.f32 %v3390, %v167
    %v3393 = vsel %vm1694, %v3391, -inf
    %3394 = vmax.xlane.f32.xlu0 %v3393
    %v3395 = vpop.xlane.xlu0 %3394
    %v3396 = vsel %vm1694, %v3392, -inf
    %3397 = vmax.xlane.f32.xlu0 %v3396
    %v3398 = vpop.xlane.xlu0 %3397
    %v3399 = vsub.f32 %v3391, %v3395
    %v3400 = vsub.f32 %v3392, %v3398
    %v3401 = vmul.f32 %v3399, 1.442695
    %v3402 = vpow.pop %v3401
    %v3403 = vmul.f32 %v3400, 1.442695
    %v3404 = vpow.pop %v3403
    %v3405 = vsel %vm1694, %v3402, 0.0
    %3406 = vadd.xlane.f32.xlu0 %v3405
    %v3407 = vpop.xlane.xlu0 %3406
    %v3408 = vsel %vm1694, %v3404, 0.0
    %3409 = vadd.xlane.f32.xlu0 %v3408
    %v3410 = vpop.xlane.xlu0 %3409
    %v3411 = vrcp.pop %v3407
    %v3412 = vrcp.pop %v3410
    %v3413 = vmul.f32 %v3402, %v3411
    %v3414 = vmul.f32 %v3404, %v3412
    %v3416 = vsel %vm1694, %v3413, 0
    %v3419 = vsel %vm1694, %v3414, 0
    %3421 = vmatprep.subr.mxu0 0.0
    %3422 = vmatpush1.msra.mxu0 %v2976
    %3423 = vmatprep.subr.mxu0 0.0
    %3424 = vmatpush1.msra.mxu0 %v2982
    %3425 = vmatprep.subr.mxu0 0.0
    %3426 = vmatpush1.msra.mxu0 0.0
    %3427 = vmatprep.subr.mxu0 0.0
    %3428 = vmatpush1.msra.mxu0 0.0
    %3429 = vmatprep.subr.mxu0 0.0
    %3430 = vmatpush1.msra.mxu0 0.0
    %3431 = vmatprep.subr.mxu0 0.0
    %3432 = vmatpush1.msra.mxu0 0.0
    %3433 = vmatprep.subr.mxu0 0.0
    %3434 = vmatpush1.msra.mxu0 0.0
    %3435 = vmatprep.subr.mxu0 0.0
    %3436 = vmatpush1.msra.mxu0 0.0
    %3437 = vmatprep.subr.mxu0 0.0
    %3438 = vmatpush1.msra.mxu0 0.0
    %3439 = vmatprep.subr.mxu0 0.0
    %3440 = vmatpush1.msra.mxu0 0.0
    %3441 = vmatprep.subr.mxu0 0.0
    %3442 = vmatpush1.msra.mxu0 0.0
    %3443 = vmatprep.subr.mxu0 0.0
    %3444 = vmatpush1.msra.mxu0 0.0
    %3445 = vmatprep.subr.mxu0 0.0
    %3446 = vmatpush1.msra.mxu0 0.0
    %3447 = vmatprep.subr.mxu0 0.0
    %3448 = vmatpush1.msra.mxu0 0.0
    %3449 = vmatprep.subr.mxu0 0.0
    %3450 = vmatpush1.msra.mxu0 0.0
    %3451 = vmatprep.subr.mxu0 0.0
    %3452 = vmatpush1.msra.mxu0 0.0
    %3453 = vmatprep.subr.mxu0 0.0
    %3454 = vmatpush1.msra.mxu0 0.0
    %3455 = vmatprep.subr.mxu0 0.0
    %3456 = vmatpush1.msra.mxu0 0.0
    %3457 = vmatprep.subr.mxu0 0.0
    %3458 = vmatpush1.msra.mxu0 0.0
    %3459 = vmatprep.subr.mxu0 0.0
    %3460 = vmatpush1.msra.mxu0 0.0
    %3461 = vmatprep.subr.mxu0 0.0
    %3462 = vmatpush1.msra.mxu0 0.0
    %3463 = vmatprep.subr.mxu0 0.0
    %3464 = vmatpush1.msra.mxu0 0.0
    %3465 = vmatprep.subr.mxu0 0.0
    %3466 = vmatpush1.msra.mxu0 0.0
    %3467 = vmatprep.subr.mxu0 0.0
    %3468 = vmatpush1.msra.mxu0 0.0
    %3469 = vmatprep.subr.mxu0 0.0
    %3470 = vmatpush1.msra.mxu0 0.0
    %3471 = vmatprep.subr.mxu0 0.0
    %3472 = vmatpush1.msra.mxu0 0.0
    %3473 = vmatprep.subr.mxu0 0.0
    %3474 = vmatpush1.msra.mxu0 0.0
    %3475 = vmatprep.subr.mxu0 0.0
    %3476 = vmatpush1.msra.mxu0 0.0
    %3477 = vmatprep.subr.mxu0 0.0
    %3478 = vmatpush1.msra.mxu0 0.0
    %3479 = vmatprep.subr.mxu0 0.0
    %3480 = vmatpush1.msra.mxu0 0.0
    %3481 = vmatprep.subr.mxu0 0.0
    %3482 = vmatpush1.msra.mxu0 0.0
    %3483 = vmatprep.subr.mxu0 0.0
    %3484 = vmatpush1.msra.mxu0 0.0
    %3485 = vmatprep.mubr.f32.mxu0 0.0
    %3486 = vmatmul.mubr.f32.gmra.mrb[0].mxu0 %v3416
    %v3487 = vpop.f32.mrb[0].mxu0
    %v3488 = vadd.f32 0.0, %v3487
    %v3489 = vpop.f32.mrb[0].mxu0
    %3490 = vmatprep.mubr.f32.mxu0 0.0
    %3491 = vmatmul.mubr.f32.gmra.mrb[0].mxu0 %v3419
    %v3492 = vpop.f32.mrb[0].mxu0
    %v3493 = vadd.f32 0.0, %v3492
    %v3494 = vpop.f32.mrb[0].mxu0
    %3495 = vdwg.mxu0
    %vm3496 = vcmp.gt.f32.partialorder %v3488, 0.0
    %vm3497 = vcmp.gt.f32.partialorder %v3493, 0.0
    %v3498 = vmin.f32 %v3488, 0.0
    %v3499 = vmin.f32 %v3493, 0.0
    %v3500 = vmul.f32 %v3498, 1.442695
    %v3501 = vpow.pop %v3500
    %v3502 = vmul.f32 %v3499, 1.442695
    %v3503 = vpow.pop %v3502
    %v3504 = vsub.f32 %v3501, 1.0
    %v3505 = vsub.f32 %v3503, 1.0
    %v3506 = vsel %vm3496, %v3488, %v3504
    %v3507 = vsel %vm3497, %v3493, %v3505
    %3508 = vmatprep.subr.mxu0 0.0
    %3509 = vmatpush1.msra.mxu0 %v3224
    %3510 = vmatprep.subr.mxu0 0.0
    %3511 = vmatpush1.msra.mxu0 %v3225
    %3512 = vmatprep.subr.mxu0 0.0
    %3513 = vmatpush1.msra.mxu0 %v3226
    %3514 = vmatprep.subr.mxu0 0.0
    %3515 = vmatpush1.msra.mxu0 %v3227
    %3516 = vmatprep.subr.mxu0 0.0
    %3517 = vmatpush1.msra.mxu0 %v3228
    %3518 = vmatprep.subr.mxu0 0.0
    %3519 = vmatpush1.msra.mxu0 %v3229
    %3520 = vmatprep.subr.mxu0 0.0
    %3521 = vmatpush1.msra.mxu0 %v3230
    %3522 = vmatprep.subr.mxu0 0.0
    %3523 = vmatpush1.msra.mxu0 %v3231
    %3524 = vmatprep.subr.mxu0 0.0
    %3525 = vmatpush1.msra.mxu0 %v3232
    %3526 = vmatprep.subr.mxu0 0.0
    %3527 = vmatpush1.msra.mxu0 %v3233
    %3528 = vmatprep.subr.mxu0 0.0
    %3529 = vmatpush1.msra.mxu0 %v3234
    %3530 = vmatprep.subr.mxu0 0.0
    %3531 = vmatpush1.msra.mxu0 %v3235
    %3532 = vmatprep.subr.mxu0 0.0
    %3533 = vmatpush1.msra.mxu0 %v3236
    %3534 = vmatprep.subr.mxu0 0.0
    %3535 = vmatpush1.msra.mxu0 %v3237
    %3536 = vmatprep.subr.mxu0 0.0
    %3537 = vmatpush1.msra.mxu0 %v3238
    %3538 = vmatprep.subr.mxu0 0.0
    %3539 = vmatpush1.msra.mxu0 %v3239
    %3540 = vmatprep.subr.mxu0 0.0
    %3541 = vmatpush1.msra.mxu0 0.0
    %3542 = vmatprep.subr.mxu0 0.0
    %3543 = vmatpush1.msra.mxu0 0.0
    %3544 = vmatprep.subr.mxu0 0.0
    %3545 = vmatpush1.msra.mxu0 0.0
    %3546 = vmatprep.subr.mxu0 0.0
    %3547 = vmatpush1.msra.mxu0 0.0
    %3548 = vmatprep.subr.mxu0 0.0
    %3549 = vmatpush1.msra.mxu0 0.0
    %3550 = vmatprep.subr.mxu0 0.0
    %3551 = vmatpush1.msra.mxu0 0.0
    %3552 = vmatprep.subr.mxu0 0.0
    %3553 = vmatpush1.msra.mxu0 0.0
    %3554 = vmatprep.subr.mxu0 0.0
    %3555 = vmatpush1.msra.mxu0 0.0
    %3556 = vmatprep.subr.mxu0 0.0
    %3557 = vmatpush1.msra.mxu0 0.0
    %3558 = vmatprep.subr.mxu0 0.0
    %3559 = vmatpush1.msra.mxu0 0.0
    %3560 = vmatprep.subr.mxu0 0.0
    %3561 = vmatpush1.msra.mxu0 0.0
    %3562 = vmatprep.subr.mxu0 0.0
    %3563 = vmatpush1.msra.mxu0 0.0
    %3564 = vmatprep.subr.mxu0 0.0
    %3565 = vmatpush1.msra.mxu0 0.0
    %3566 = vmatprep.subr.mxu0 0.0
    %3567 = vmatpush1.msra.mxu0 0.0
    %3568 = vmatprep.subr.mxu0 0.0
    %3569 = vmatpush1.msra.mxu0 0.0
    %3570 = vmatprep.subr.mxu0 0.0
    %3571 = vmatpush1.msra.mxu0 0.0
    %3572 = vmatprep.mubr.f32.mxu0 0.0
    %3573 = vmatmul.mubr.f32.gmra.mrb[0].mxu0 %v3506
    %v3574 = vpop.f32.mrb[0].mxu0
    %v3575 = vadd.f32 0.0, %v3574
    %v3576 = vpop.f32.mrb[0].mxu0
    %3577 = vmatprep.mubr.f32.mxu0 0.0
    %3578 = vmatmul.mubr.f32.gmra.mrb[0].mxu0 %v3507
    %v3579 = vpop.f32.mrb[0].mxu0
    %v3580 = vadd.f32 0.0, %v3579
    %v3581 = vpop.f32.mrb[0].mxu0
    %3582 = vdwg.mxu0
    %3583 = vmatprep.subr.mxu0 0.0
    %3584 = vmatpush1.msra.mxu0 %v3208
    %3585 = vmatprep.subr.mxu0 0.0
    %3586 = vmatpush1.msra.mxu0 %v3209
    %3587 = vmatprep.subr.mxu0 0.0
    %3588 = vmatpush1.msra.mxu0 %v3210
    %3589 = vmatprep.subr.mxu0 0.0
    %3590 = vmatpush1.msra.mxu0 %v3211
    %3591 = vmatprep.subr.mxu0 0.0
    %3592 = vmatpush1.msra.mxu0 %v3212
    %3593 = vmatprep.subr.mxu0 0.0
    %3594 = vmatpush1.msra.mxu0 %v3213
    %3595 = vmatprep.subr.mxu0 0.0
    %3596 = vmatpush1.msra.mxu0 %v3214
    %3597 = vmatprep.subr.mxu0 0.0
    %3598 = vmatpush1.msra.mxu0 %v3215
    %3599 = vmatprep.subr.mxu0 0.0
    %3600 = vmatpush1.msra.mxu0 %v3216
    %3601 = vmatprep.subr.mxu0 0.0
    %3602 = vmatpush1.msra.mxu0 %v3217
    %3603 = vmatprep.subr.mxu0 0.0
    %3604 = vmatpush1.msra.mxu0 %v3218
    %3605 = vmatprep.subr.mxu0 0.0
    %3606 = vmatpush1.msra.mxu0 %v3219
    %3607 = vmatprep.subr.mxu0 0.0
    %3608 = vmatpush1.msra.mxu0 %v3220
    %3609 = vmatprep.subr.mxu0 0.0
    %3610 = vmatpush1.msra.mxu0 %v3221
    %3611 = vmatprep.subr.mxu0 0.0
    %3612 = vmatpush1.msra.mxu0 %v3222
    %3613 = vmatprep.subr.mxu0 0.0
    %3614 = vmatpush1.msra.mxu0 %v3223
    %3615 = vmatprep.subr.mxu0 0.0
    %3616 = vmatpush1.msra.mxu0 0.0
    %3617 = vmatprep.subr.mxu0 0.0
    %3618 = vmatpush1.msra.mxu0 0.0
    %3619 = vmatprep.subr.mxu0 0.0
    %3620 = vmatpush1.msra.mxu0 0.0
    %3621 = vmatprep.subr.mxu0 0.0
    %3622 = vmatpush1.msra.mxu0 0.0
    %3623 = vmatprep.subr.mxu0 0.0
    %3624 = vmatpush1.msra.mxu0 0.0
    %3625 = vmatprep.subr.mxu0 0.0
    %3626 = vmatpush1.msra.mxu0 0.0
    %3627 = vmatprep.subr.mxu0 0.0
    %3628 = vmatpush1.msra.mxu0 0.0
    %3629 = vmatprep.subr.mxu0 0.0
    %3630 = vmatpush1.msra.mxu0 0.0
    %3631 = vmatprep.subr.mxu0 0.0
    %3632 = vmatpush1.msra.mxu0 0.0
    %3633 = vmatprep.subr.mxu0 0.0
    %3634 = vmatpush1.msra.mxu0 0.0
    %3635 = vmatprep.subr.mxu0 0.0
    %3636 = vmatpush1.msra.mxu0 0.0
    %3637 = vmatprep.subr.mxu0 0.0
    %3638 = vmatpush1.msra.mxu0 0.0
    %3639 = vmatprep.subr.mxu0 0.0
    %3640 = vmatpush1.msra.mxu0 0.0
    %3641 = vmatprep.subr.mxu0 0.0
    %3642 = vmatpush1.msra.mxu0 0.0
    %3643 = vmatprep.subr.mxu0 0.0
    %3644 = vmatpush1.msra.mxu0 0.0
    %3645 = vmatprep.subr.mxu0 0.0
    %3646 = vmatpush1.msra.mxu0 0.0
    %3647 = vmatprep.mubr.f32.mxu0 0.0
    %3648 = vmatmul.mubr.f32.gmra.mrb[0].mxu0 %v3373
    %v3649 = vpop.f32.mrb[0].mxu0
    %v3650 = vadd.f32 %v3575, %v3649
    %v3651 = vpop.f32.mrb[0].mxu0
    %3652 = vmatprep.mubr.f32.mxu0 0.0
    %3653 = vmatmul.mubr.f32.gmra.mrb[0].mxu0 %v3374
    %v3654 = vpop.f32.mrb[0].mxu0
    %v3655 = vadd.f32 %v3580, %v3654
    %v3656 = vpop.f32.mrb[0].mxu0
    %3657 = vdwg.mxu0
    %s3658 = scalar_lea.vmem %s13, 128
    %v3659 = vld [vmem:[%s3658] sm:$0xff]
    %v3660 = vld [vmem:[%s3658 + $0x8] sm:$0xff]
    %v3661 = vld [vmem:[%s3658 + $0x10] sm:$0xff]
    %v3662 = vld [vmem:[%s3658 + $0x18] sm:$0xff]
    %v3663 = vld [vmem:[%s3658 + $0x20] sm:$0xff]
    %v3664 = vld [vmem:[%s3658 + $0x28] sm:$0xff]
    %v3665 = vld [vmem:[%s3658 + $0x30] sm:$0xff]
    %v3666 = vld [vmem:[%s3658 + $0x38] sm:$0xff]
    %v3667 = vld [vmem:[%s3658 + $0x40] sm:$0xff]
    %v3668 = vld [vmem:[%s3658 + $0x48] sm:$0xff]
    %v3669 = vld [vmem:[%s3658 + $0x50] sm:$0xff]
    %v3670 = vld [vmem:[%s3658 + $0x58] sm:$0xff]
    %v3671 = vld [vmem:[%s3658 + $0x60] sm:$0xff]
    %v3672 = vld [vmem:[%s3658 + $0x68] sm:$0xff]
    %v3673 = vld [vmem:[%s3658 + $0x70] sm:$0xff]
    %v3674 = vld [vmem:[%s3658 + $0x78] sm:$0xff]
    %3675 = vmatprep.subr.mxu0 0.0
    %3676 = vmatpush1.msra.mxu0 %v3659
    %3677 = vmatprep.subr.mxu0 0.0
    %3678 = vmatpush1.msra.mxu0 %v3660
    %3679 = vmatprep.subr.mxu0 0.0
    %3680 = vmatpush1.msra.mxu0 %v3661
    %3681 = vmatprep.subr.mxu0 0.0
    %3682 = vmatpush1.msra.mxu0 %v3662
    %3683 = vmatprep.subr.mxu0 0.0
    %3684 = vmatpush1.msra.mxu0 %v3663
    %3685 = vmatprep.subr.mxu0 0.0
    %3686 = vmatpush1.msra.mxu0 %v3664
    %3687 = vmatprep.subr.mxu0 0.0
    %3688 = vmatpush1.msra.mxu0 %v3665
    %3689 = vmatprep.subr.mxu0 0.0
    %3690 = vmatpush1.msra.mxu0 %v3666
    %3691 = vmatprep.subr.mxu0 0.0
    %3692 = vmatpush1.msra.mxu0 %v3667
    %3693 = vmatprep.subr.mxu0 0.0
    %3694 = vmatpush1.msra.mxu0 %v3668
    %3695 = vmatprep.subr.mxu0 0.0
    %3696 = vmatpush1.msra.mxu0 %v3669
    %3697 = vmatprep.subr.mxu0 0.0
    %3698 = vmatpush1.msra.mxu0 %v3670
    %3699 = vmatprep.subr.mxu0 0.0
    %3700 = vmatpush1.msra.mxu0 %v3671
    %3701 = vmatprep.subr.mxu0 0.0
    %3702 = vmatpush1.msra.mxu0 %v3672
    %3703 = vmatprep.subr.mxu0 0.0
    %3704 = vmatpush1.msra.mxu0 %v3673
    %3705 = vmatprep.subr.mxu0 0.0
    %3706 = vmatpush1.msra.mxu0 %v3674
    %3707 = vmatprep.subr.mxu0 0.0
    %3708 = vmatpush1.msra.mxu0 0.0
    %3709 = vmatprep.subr.mxu0 0.0
    %3710 = vmatpush1.msra.mxu0 0.0
    %3711 = vmatprep.subr.mxu0 0.0
    %3712 = vmatpush1.msra.mxu0 0.0
    %3713 = vmatprep.subr.mxu0 0.0
    %3714 = vmatpush1.msra.mxu0 0.0
    %3715 = vmatprep.subr.mxu0 0.0
    %3716 = vmatpush1.msra.mxu0 0.0
    %3717 = vmatprep.subr.mxu0 0.0
    %3718 = vmatpush1.msra.mxu0 0.0
    %3719 = vmatprep.subr.mxu0 0.0
    %3720 = vmatpush1.msra.mxu0 0.0
    %3721 = vmatprep.subr.mxu0 0.0
    %3722 = vmatpush1.msra.mxu0 0.0
    %3723 = vmatprep.subr.mxu0 0.0
    %3724 = vmatpush1.msra.mxu0 0.0
    %3725 = vmatprep.subr.mxu0 0.0
    %3726 = vmatpush1.msra.mxu0 0.0
    %3727 = vmatprep.subr.mxu0 0.0
    %3728 = vmatpush1.msra.mxu0 0.0
    %3729 = vmatprep.subr.mxu0 0.0
    %3730 = vmatpush1.msra.mxu0 0.0
    %3731 = vmatprep.subr.mxu0 0.0
    %3732 = vmatpush1.msra.mxu0 0.0
    %3733 = vmatprep.subr.mxu0 0.0
    %3734 = vmatpush1.msra.mxu0 0.0
    %3735 = vmatprep.subr.mxu0 0.0
    %3736 = vmatpush1.msra.mxu0 0.0
    %3737 = vmatprep.subr.mxu0 0.0
    %3738 = vmatpush1.msra.mxu0 0.0
    %3739 = vmatprep.mubr.f32.mxu0 0.0
    %3740 = vmatmul.mubr.f32.gmra.mrb[0].mxu0 %v3650
    %v3741 = vpop.f32.mrb[0].mxu0
    %v3742 = vadd.f32 0.0, %v3741
    %v3743 = vpop.f32.mrb[0].mxu0
    %3744 = vmatprep.mubr.f32.mxu0 0.0
    %3745 = vmatmul.mubr.f32.gmra.mrb[0].mxu0 %v3655
    %v3746 = vpop.f32.mrb[0].mxu0
    %v3747 = vadd.f32 0.0, %v3746
    %v3748 = vpop.f32.mrb[0].mxu0
    %3749 = vdwg.mxu0
    %s3750 = scalar_lea.vmem %s14, 1
    %v3751 = vld [vmem:[%s3750] sm:$0x1]
    %3752 = vmatprep.subr.mxu0 0.0
    %3753 = vmatpush1.xpose.msra.mxu0 %v3650
    %3754 = vmatprep.subr.mxu0 0.0
    %3755 = vmatpush1.xpose.msra.mxu0 %v3655
    %3756 = vmatprep.subr.mxu0 0.0
    %3757 = vmatpush1.xpose.msra.mxu0 0.0
    %3758 = vmatprep.subr.mxu0 0.0
    %3759 = vmatpush1.xpose.msra.mxu0 0.0
    %3760 = vmatprep.subr.mxu0 0.0
    %3761 = vmatpush1.xpose.msra.mxu0 0.0
    %3762 = vmatprep.subr.mxu0 0.0
    %3763 = vmatpush1.xpose.msra.mxu0 0.0
    %3764 = vmatprep.subr.mxu0 0.0
    %3765 = vmatpush1.xpose.msra.mxu0 0.0
    %3766 = vmatprep.subr.mxu0 0.0
    %3767 = vmatpush1.xpose.msra.mxu0 0.0
    %3768 = vmatprep.subr.mxu0 0.0
    %3769 = vmatpush1.xpose.msra.mxu0 0.0
    %3770 = vmatprep.subr.mxu0 0.0
    %3771 = vmatpush1.xpose.msra.mxu0 0.0
    %3772 = vmatprep.subr.mxu0 0.0
    %3773 = vmatpush1.xpose.msra.mxu0 0.0
    %3774 = vmatprep.subr.mxu0 0.0
    %3775 = vmatpush1.xpose.msra.mxu0 0.0
    %3776 = vmatprep.subr.mxu0 0.0
    %3777 = vmatpush1.xpose.msra.mxu0 0.0
    %3778 = vmatprep.subr.mxu0 0.0
    %3779 = vmatpush1.xpose.msra.mxu0 0.0
    %3780 = vmatprep.subr.mxu0 0.0
    %3781 = vmatpush1.xpose.msra.mxu0 0.0
    %3782 = vmatprep.subr.mxu0 0.0
    %3783 = vmatpush1.xpose.msra.mxu0 0.0
    %3784 = vmatprep.subr.mxu0 0.0
    %3785 = vmatpush1.xpose.msra.mxu0 0.0
    %3786 = vmatprep.subr.mxu0 0.0
    %3787 = vmatpush1.xpose.msra.mxu0 0.0
    %3788 = vmatprep.subr.mxu0 0.0
    %3789 = vmatpush1.xpose.msra.mxu0 0.0
    %3790 = vmatprep.subr.mxu0 0.0
    %3791 = vmatpush1.xpose.msra.mxu0 0.0
    %3792 = vmatprep.subr.mxu0 0.0
    %3793 = vmatpush1.xpose.msra.mxu0 0.0
    %3794 = vmatprep.subr.mxu0 0.0
    %3795 = vmatpush1.xpose.msra.mxu0 0.0
    %3796 = vmatprep.subr.mxu0 0.0
    %3797 = vmatpush1.xpose.msra.mxu0 0.0
    %3798 = vmatprep.subr.mxu0 0.0
    %3799 = vmatpush1.xpose.msra.mxu0 0.0
    %3800 = vmatprep.subr.mxu0 0.0
    %3801 = vmatpush1.xpose.msra.mxu0 0.0
    %3802 = vmatprep.subr.mxu0 0.0
    %3803 = vmatpush1.xpose.msra.mxu0 0.0
    %3804 = vmatprep.subr.mxu0 0.0
    %3805 = vmatpush1.xpose.msra.mxu0 0.0
    %3806 = vmatprep.subr.mxu0 0.0
    %3807 = vmatpush1.xpose.msra.mxu0 0.0
    %3808 = vmatprep.subr.mxu0 0.0
    %3809 = vmatpush1.xpose.msra.mxu0 0.0
    %3810 = vmatprep.subr.mxu0 0.0
    %3811 = vmatpush1.xpose.msra.mxu0 0.0
    %3812 = vmatprep.subr.mxu0 0.0
    %3813 = vmatpush1.xpose.msra.mxu0 0.0
    %3814 = vmatprep.subr.mxu0 0.0
    %3815 = vmatpush1.xpose.msra.mxu0 0.0
    %3816 = vmatprep.mubr.f32.mxu0 0.0
    %3817 = vmatmul.mubr.f32.gmra.mrb[0].mxu0 %v3751
    %v3818 = vpop.f32.mrb[0].mxu0
    %v3819 = vadd.f32 0.0, %v3818
    %v3820 = vpop.f32.mrb[0].mxu0
    %3821 = vdwg.mxu0
    %3823 = vset.pattern.permute.xlu0 0
    %3824 = vperm.xlu0 %3823, %v3742
    %v3825 = vpop.permute.xlu0 %3824
    %3828 = vset.pattern.permute.xlu0 0
    %3829 = vperm.xlu0 %3828, %v3747
    %v3830 = vpop.permute.xlu0 %3829
    %v3832 = vlaneseq
    %v3833 = vshrl.u32 %v3832, 7
    %v3834 = vsub.s32 0, %v3833
    %v3835 = vrot.slane %v3819, %v3834
    %v3836 = vadd.f32 %v3825, %v3835
    %v3837 = vadd.f32 %v3830, %v3835
    %v3838 = vmax.f32 %v3836, 0.0
    %v3839 = vmax.f32 %v3837, 0.0
    %v3840 = vadd.f32 %v3838, %v166
    %v3841 = vadd.f32 %v3839, %v167
    %v3842 = vsel %vm1694, %v3840, -inf
    %3843 = vmax.xlane.f32.xlu0 %v3842
    %v3844 = vpop.xlane.xlu0 %3843
    %v3845 = vsel %vm1694, %v3841, -inf
    %3846 = vmax.xlane.f32.xlu0 %v3845
    %v3847 = vpop.xlane.xlu0 %3846
    %v3848 = vsub.f32 %v3840, %v3844
    %v3849 = vsub.f32 %v3841, %v3847
    %v3850 = vmul.f32 %v3848, 1.442695
    %v3851 = vpow.pop %v3850
    %v3852 = vmul.f32 %v3849, 1.442695
    %v3853 = vpow.pop %v3852
    %v3854 = vsel %vm1694, %v3851, 0.0
    %3855 = vadd.xlane.f32.xlu0 %v3854
    %v3856 = vpop.xlane.xlu0 %3855
    %v3857 = vsel %vm1694, %v3853, 0.0
    %3858 = vadd.xlane.f32.xlu0 %v3857
    %v3859 = vpop.xlane.xlu0 %3858
    %v3860 = vrcp.pop %v3856
    %v3861 = vrcp.pop %v3859
    %v3862 = vmul.f32 %v3851, %v3860
    %v3863 = vmul.f32 %v3853, %v3861
    %v3865 = vsel %vm1694, %v3862, 0
    %v3868 = vsel %vm1694, %v3863, 0
    %3870 = vmatprep.subr.mxu0 0.0
    %3871 = vmatpush1.msra.mxu0 %v3650
    %3872 = vmatprep.subr.mxu0 0.0
    %3873 = vmatpush1.msra.mxu0 %v3655
    %3874 = vmatprep.subr.mxu0 0.0
    %3875 = vmatpush1.msra.mxu0 0.0
    %3876 = vmatprep.subr.mxu0 0.0
    %3877 = vmatpush1.msra.mxu0 0.0
    %3878 = vmatprep.subr.mxu0 0.0
    %3879 = vmatpush1.msra.mxu0 0.0
    %3880 = vmatprep.subr.mxu0 0.0
    %3881 = vmatpush1.msra.mxu0 0.0
    %3882 = vmatprep.subr.mxu0 0.0
    %3883 = vmatpush1.msra.mxu0 0.0
    %3884 = vmatprep.subr.mxu0 0.0
    %3885 = vmatpush1.msra.mxu0 0.0
    %3886 = vmatprep.subr.mxu0 0.0
    %3887 = vmatpush1.msra.mxu0 0.0
    %3888 = vmatprep.subr.mxu0 0.0
    %3889 = vmatpush1.msra.mxu0 0.0
    %3890 = vmatprep.subr.mxu0 0.0
    %3891 = vmatpush1.msra.mxu0 0.0
    %3892 = vmatprep.subr.mxu0 0.0
    %3893 = vmatpush1.msra.mxu0 0.0
    %3894 = vmatprep.subr.mxu0 0.0
    %3895 = vmatpush1.msra.mxu0 0.0
    %3896 = vmatprep.subr.mxu0 0.0
    %3897 = vmatpush1.msra.mxu0 0.0
    %3898 = vmatprep.subr.mxu0 0.0
    %3899 = vmatpush1.msra.mxu0 0.0
    %3900 = vmatprep.subr.mxu0 0.0
    %3901 = vmatpush1.msra.mxu0 0.0
    %3902 = vmatprep.subr.mxu0 0.0
    %3903 = vmatpush1.msra.mxu0 0.0
    %3904 = vmatprep.subr.mxu0 0.0
    %3905 = vmatpush1.msra.mxu0 0.0
    %3906 = vmatprep.subr.mxu0 0.0
    %3907 = vmatpush1.msra.mxu0 0.0
    %3908 = vmatprep.subr.mxu0 0.0
    %3909 = vmatpush1.msra.mxu0 0.0
    %3910 = vmatprep.subr.mxu0 0.0
    %3911 = vmatpush1.msra.mxu0 0.0
    %3912 = vmatprep.subr.mxu0 0.0
    %3913 = vmatpush1.msra.mxu0 0.0
    %3914 = vmatprep.subr.mxu0 0.0
    %3915 = vmatpush1.msra.mxu0 0.0
    %3916 = vmatprep.subr.mxu0 0.0
    %3917 = vmatpush1.msra.mxu0 0.0
    %3918 = vmatprep.subr.mxu0 0.0
    %3919 = vmatpush1.msra.mxu0 0.0
    %3920 = vmatprep.subr.mxu0 0.0
    %3921 = vmatpush1.msra.mxu0 0.0
    %3922 = vmatprep.subr.mxu0 0.0
    %3923 = vmatpush1.msra.mxu0 0.0
    %3924 = vmatprep.subr.mxu0 0.0
    %3925 = vmatpush1.msra.mxu0 0.0
    %3926 = vmatprep.subr.mxu0 0.0
    %3927 = vmatpush1.msra.mxu0 0.0
    %3928 = vmatprep.subr.mxu0 0.0
    %3929 = vmatpush1.msra.mxu0 0.0
    %3930 = vmatprep.subr.mxu0 0.0
    %3931 = vmatpush1.msra.mxu0 0.0
    %3932 = vmatprep.subr.mxu0 0.0
    %3933 = vmatpush1.msra.mxu0 0.0
    %3934 = vmatprep.mubr.f32.mxu0 0.0
    %3935 = vmatmul.mubr.f32.gmra.mrb[0].mxu0 %v3865
    %v3936 = vpop.f32.mrb[0].mxu0
    %v3937 = vadd.f32 0.0, %v3936
    %v3938 = vpop.f32.mrb[0].mxu0
    %3939 = vmatprep.mubr.f32.mxu0 0.0
    %3940 = vmatmul.mubr.f32.gmra.mrb[0].mxu0 %v3868
    %v3941 = vpop.f32.mrb[0].mxu0
    %v3942 = vadd.f32 0.0, %v3941
    %v3943 = vpop.f32.mrb[0].mxu0
    %3944 = vdwg.mxu0
    %vm3945 = vcmp.gt.f32.partialorder %v3937, 0.0
    %vm3946 = vcmp.gt.f32.partialorder %v3942, 0.0
    %v3947 = vmin.f32 %v3937, 0.0
    %v3948 = vmin.f32 %v3942, 0.0
    %v3949 = vmul.f32 %v3947, 1.442695
    %v3950 = vpow.pop %v3949
    %v3951 = vmul.f32 %v3948, 1.442695
    %v3952 = vpow.pop %v3951
    %v3953 = vsub.f32 %v3950, 1.0
    %v3954 = vsub.f32 %v3952, 1.0
    %v3955 = vsel %vm3945, %v3937, %v3953
    %v3956 = vsel %vm3946, %v3942, %v3954
    %3957 = vmatprep.subr.mxu0 0.0
    %3958 = vmatpush1.msra.mxu0 %v2856
    %3959 = vmatprep.subr.mxu0 0.0
    %3960 = vmatpush1.msra.mxu0 %v2857
    %3961 = vmatprep.subr.mxu0 0.0
    %3962 = vmatpush1.msra.mxu0 0.0
    %3963 = vmatprep.subr.mxu0 0.0
    %3964 = vmatpush1.msra.mxu0 0.0
    %3965 = vmatprep.subr.mxu0 0.0
    %3966 = vmatpush1.msra.mxu0 0.0
    %3967 = vmatprep.subr.mxu0 0.0
    %3968 = vmatpush1.msra.mxu0 0.0
    %3969 = vmatprep.subr.mxu0 0.0
    %3970 = vmatpush1.msra.mxu0 0.0
    %3971 = vmatprep.subr.mxu0 0.0
    %3972 = vmatpush1.msra.mxu0 0.0
    %3973 = vmatprep.subr.mxu0 0.0
    %3974 = vmatpush1.msra.mxu0 0.0
    %3975 = vmatprep.subr.mxu0 0.0
    %3976 = vmatpush1.msra.mxu0 0.0
    %3977 = vmatprep.subr.mxu0 0.0
    %3978 = vmatpush1.msra.mxu0 0.0
    %3979 = vmatprep.subr.mxu0 0.0
    %3980 = vmatpush1.msra.mxu0 0.0
    %3981 = vmatprep.subr.mxu0 0.0
    %3982 = vmatpush1.msra.mxu0 0.0
    %3983 = vmatprep.subr.mxu0 0.0
    %3984 = vmatpush1.msra.mxu0 0.0
    %3985 = vmatprep.subr.mxu0 0.0
    %3986 = vmatpush1.msra.mxu0 0.0
    %3987 = vmatprep.subr.mxu0 0.0
    %3988 = vmatpush1.msra.mxu0 0.0
    %3989 = vmatprep.subr.mxu0 0.0
    %3990 = vmatpush1.msra.mxu0 0.0
    %3991 = vmatprep.subr.mxu0 0.0
    %3992 = vmatpush1.msra.mxu0 0.0
    %3993 = vmatprep.subr.mxu0 0.0
    %3994 = vmatpush1.msra.mxu0 0.0
    %3995 = vmatprep.subr.mxu0 0.0
    %3996 = vmatpush1.msra.mxu0 0.0
    %3997 = vmatprep.subr.mxu0 0.0
    %3998 = vmatpush1.msra.mxu0 0.0
    %3999 = vmatprep.subr.mxu0 0.0
    %4000 = vmatpush1.msra.mxu0 0.0
    %4001 = vmatprep.subr.mxu0 0.0
    %4002 = vmatpush1.msra.mxu0 0.0
    %4003 = vmatprep.subr.mxu0 0.0
    %4004 = vmatpush1.msra.mxu0 0.0
    %4005 = vmatprep.subr.mxu0 0.0
    %4006 = vmatpush1.msra.mxu0 0.0
    %4007 = vmatprep.subr.mxu0 0.0
    %4008 = vmatpush1.msra.mxu0 0.0
    %4009 = vmatprep.subr.mxu0 0.0
    %4010 = vmatpush1.msra.mxu0 0.0
    %4011 = vmatprep.subr.mxu0 0.0
    %4012 = vmatpush1.msra.mxu0 0.0
    %4013 = vmatprep.subr.mxu0 0.0
    %4014 = vmatpush1.msra.mxu0 0.0
    %4015 = vmatprep.subr.mxu0 0.0
    %4016 = vmatpush1.msra.mxu0 0.0
    %4017 = vmatprep.subr.mxu0 0.0
    %4018 = vmatpush1.msra.mxu0 0.0
    %4019 = vmatprep.subr.mxu0 0.0
    %4020 = vmatpush1.msra.mxu0 0.0
    %4021 = vmatprep.mubr.f32.mxu0 0.0
    %4022 = vmatmul.mubr.f32.gmra.mrb[0].mxu0 %v2391
    %v4023 = vpop.f32.mrb[0].mxu0
    %v4024 = vadd.f32 0.0, %v4023
    %v4025 = vpop.f32.mrb[0].mxu0
    %4026 = vmatprep.mubr.f32.mxu0 0.0
    %4027 = vmatmul.mubr.f32.gmra.mrb[0].mxu0 %v2394
    %v4028 = vpop.f32.mrb[0].mxu0
    %v4029 = vadd.f32 0.0, %v4028
    %v4030 = vpop.f32.mrb[0].mxu0
    %4031 = vdwg.mxu0
    %v4032 = vmul.f32 %v4024, 0.9
    %v4033 = vmul.f32 %v4029, 0.9
    %v4034 = vadd.f32 %v4032, %v2473
    %v4035 = vadd.f32 %v4033, %v2474
    %s4036 = scalar_lea.vmem [#allocation9], 64
    %v4037 = vld [vmem:[%s4036] sm:$0xf]
    %v4038 = vld [vmem:[%s4036 + $0x4] sm:$0xf]
    %v4039 = vld [vmem:[%s4036 + $0x8] sm:$0xf]
    %v4040 = vld [vmem:[%s4036 + $0xc] sm:$0xf]
    %v4041 = vld [vmem:[%s4036 + $0x10] sm:$0xf]
    %v4042 = vld [vmem:[%s4036 + $0x14] sm:$0xf]
    %v4043 = vld [vmem:[%s4036 + $0x18] sm:$0xf]
    %v4044 = vld [vmem:[%s4036 + $0x1c] sm:$0xf]
    %v4045 = vld [vmem:[%s4036 + $0x20] sm:$0xf]
    %v4046 = vld [vmem:[%s4036 + $0x24] sm:$0xf]
    %v4047 = vld [vmem:[%s4036 + $0x28] sm:$0xf]
    %v4048 = vld [vmem:[%s4036 + $0x2c] sm:$0xf]
    %v4049 = vld [vmem:[%s4036 + $0x30] sm:$0xf]
    %v4050 = vld [vmem:[%s4036 + $0x34] sm:$0xf]
    %v4051 = vld [vmem:[%s4036 + $0x38] sm:$0xf]
    %v4052 = vld [vmem:[%s4036 + $0x3c] sm:$0xf]
    %v4053 = vunpack.c.l.bf16 %v4037
    %v4054 = vunpack.c.l.bf16 %v4038
    %v4055 = vunpack.c.l.bf16 %v4039
    %v4056 = vunpack.c.l.bf16 %v4040
    %v4057 = vunpack.c.l.bf16 %v4041
    %v4058 = vunpack.c.l.bf16 %v4042
    %v4059 = vunpack.c.l.bf16 %v4043
    %v4060 = vunpack.c.l.bf16 %v4044
    %v4061 = vunpack.c.l.bf16 %v4045
    %v4062 = vunpack.c.l.bf16 %v4046
    %v4063 = vunpack.c.l.bf16 %v4047
    %v4064 = vunpack.c.l.bf16 %v4048
    %v4065 = vunpack.c.l.bf16 %v4049
    %v4066 = vunpack.c.l.bf16 %v4050
    %v4067 = vunpack.c.l.bf16 %v4051
    %v4068 = vunpack.c.l.bf16 %v4052
    %4069 = vmatprep.subr.mxu0 0.0
    %4070 = vmatpush1.msra.mxu0 %v4053
    %4071 = vmatprep.subr.mxu0 0.0
    %4072 = vmatpush1.msra.mxu0 %v4054
    %4073 = vmatprep.subr.mxu0 0.0
    %4074 = vmatpush1.msra.mxu0 %v4055
    %4075 = vmatprep.subr.mxu0 0.0
    %4076 = vmatpush1.msra.mxu0 %v4056
    %4077 = vmatprep.subr.mxu0 0.0
    %4078 = vmatpush1.msra.mxu0 %v4057
    %4079 = vmatprep.subr.mxu0 0.0
    %4080 = vmatpush1.msra.mxu0 %v4058
    %4081 = vmatprep.subr.mxu0 0.0
    %4082 = vmatpush1.msra.mxu0 %v4059
    %4083 = vmatprep.subr.mxu0 0.0
    %4084 = vmatpush1.msra.mxu0 %v4060
    %4085 = vmatprep.subr.mxu0 0.0
    %4086 = vmatpush1.msra.mxu0 %v4061
    %4087 = vmatprep.subr.mxu0 0.0
    %4088 = vmatpush1.msra.mxu0 %v4062
    %4089 = vmatprep.subr.mxu0 0.0
    %4090 = vmatpush1.msra.mxu0 %v4063
    %4091 = vmatprep.subr.mxu0 0.0
    %4092 = vmatpush1.msra.mxu0 %v4064
    %4093 = vmatprep.subr.mxu0 0.0
    %4094 = vmatpush1.msra.mxu0 %v4065
    %4095 = vmatprep.subr.mxu0 0.0
    %4096 = vmatpush1.msra.mxu0 %v4066
    %4097 = vmatprep.subr.mxu0 0.0
    %4098 = vmatpush1.msra.mxu0 %v4067
    %4099 = vmatprep.subr.mxu0 0.0
    %4100 = vmatpush1.msra.mxu0 %v4068
    %4101 = vmatprep.subr.mxu0 0.0
    %4102 = vmatpush1.msra.mxu0 0.0
    %4103 = vmatprep.subr.mxu0 0.0
    %4104 = vmatpush1.msra.mxu0 0.0
    %4105 = vmatprep.subr.mxu0 0.0
    %4106 = vmatpush1.msra.mxu0 0.0
    %4107 = vmatprep.subr.mxu0 0.0
    %4108 = vmatpush1.msra.mxu0 0.0
    %4109 = vmatprep.subr.mxu0 0.0
    %4110 = vmatpush1.msra.mxu0 0.0
    %4111 = vmatprep.subr.mxu0 0.0
    %4112 = vmatpush1.msra.mxu0 0.0
    %4113 = vmatprep.subr.mxu0 0.0
    %4114 = vmatpush1.msra.mxu0 0.0
    %4115 = vmatprep.subr.mxu0 0.0
    %4116 = vmatpush1.msra.mxu0 0.0
    %4117 = vmatprep.subr.mxu0 0.0
    %4118 = vmatpush1.msra.mxu0 0.0
    %4119 = vmatprep.subr.mxu0 0.0
    %4120 = vmatpush1.msra.mxu0 0.0
    %4121 = vmatprep.subr.mxu0 0.0
    %4122 = vmatpush1.msra.mxu0 0.0
    %4123 = vmatprep.subr.mxu0 0.0
    %4124 = vmatpush1.msra.mxu0 0.0
    %4125 = vmatprep.subr.mxu0 0.0
    %4126 = vmatpush1.msra.mxu0 0.0
    %4127 = vmatprep.subr.mxu0 0.0
    %4128 = vmatpush1.msra.mxu0 0.0
    %4129 = vmatprep.subr.mxu0 0.0
    %4130 = vmatpush1.msra.mxu0 0.0
    %4131 = vmatprep.subr.mxu0 0.0
    %4132 = vmatpush1.msra.mxu0 0.0
    %4133 = vmatprep.mubr.f32.mxu0 0.0
    %4134 = vmatmul.mubr.f32.gmra.mrb[0].mxu0 %v4034
    %v4135 = vpop.f32.mrb[0].mxu0
    %v4136 = vadd.f32 0.0, %v4135
    %v4137 = vpop.f32.mrb[0].mxu0
    %4138 = vmatprep.mubr.f32.mxu0 0.0
    %4139 = vmatmul.mubr.f32.gmra.mrb[0].mxu0 %v4035
    %v4140 = vpop.f32.mrb[0].mxu0
    %v4141 = vadd.f32 0.0, %v4140
    %v4142 = vpop.f32.mrb[0].mxu0
    %4143 = vdwg.mxu0
    %v4144 = vmul.f32 %v4136, 0.22314355
    %v4145 = vmul.f32 %v4141, 0.22314355
    %v4146 = vmul.f32 %v4034, 0.7768564
    %v4147 = vmul.f32 %v4035, 0.7768564
    %v4148 = vadd.f32 %v4144, %v4146
    %v4149 = vadd.f32 %v4145, %v4147
    %s4150 = scalar_lea.vmem [#allocation10], 128
    %v4151 = vld [vmem:[%s4150] sm:$0xf]
    %v4152 = vld [vmem:[%s4150 + $0x4] sm:$0xf]
    %v4153 = vld [vmem:[%s4150 + $0x8] sm:$0xf]
    %v4154 = vld [vmem:[%s4150 + $0xc] sm:$0xf]
    %v4155 = vld [vmem:[%s4150 + $0x10] sm:$0xf]
    %v4156 = vld [vmem:[%s4150 + $0x14] sm:$0xf]
    %v4157 = vld [vmem:[%s4150 + $0x18] sm:$0xf]
    %v4158 = vld [vmem:[%s4150 + $0x1c] sm:$0xf]
    %v4159 = vld [vmem:[%s4150 + $0x20] sm:$0xf]
    %v4160 = vld [vmem:[%s4150 + $0x24] sm:$0xf]
    %v4161 = vld [vmem:[%s4150 + $0x28] sm:$0xf]
    %v4162 = vld [vmem:[%s4150 + $0x2c] sm:$0xf]
    %v4163 = vld [vmem:[%s4150 + $0x30] sm:$0xf]
    %v4164 = vld [vmem:[%s4150 + $0x34] sm:$0xf]
    %v4165 = vld [vmem:[%s4150 + $0x38] sm:$0xf]
    %v4166 = vld [vmem:[%s4150 + $0x3c] sm:$0xf]
    %v4167 = vld [vmem:[%s4150 + $0x40] sm:$0xf]
    %v4168 = vld [vmem:[%s4150 + $0x44] sm:$0xf]
    %v4169 = vld [vmem:[%s4150 + $0x48] sm:$0xf]
    %v4170 = vld [vmem:[%s4150 + $0x4c] sm:$0xf]
    %v4171 = vld [vmem:[%s4150 + $0x50] sm:$0xf]
    %v4172 = vld [vmem:[%s4150 + $0x54] sm:$0xf]
    %v4173 = vld [vmem:[%s4150 + $0x58] sm:$0xf]
    %v4174 = vld [vmem:[%s4150 + $0x5c] sm:$0xf]
    %v4175 = vld [vmem:[%s4150 + $0x60] sm:$0xf]
    %v4176 = vld [vmem:[%s4150 + $0x64] sm:$0xf]
    %v4177 = vld [vmem:[%s4150 + $0x68] sm:$0xf]
    %v4178 = vld [vmem:[%s4150 + $0x6c] sm:$0xf]
    %v4179 = vld [vmem:[%s4150 + $0x70] sm:$0xf]
    %v4180 = vld [vmem:[%s4150 + $0x74] sm:$0xf]
    %v4181 = vld [vmem:[%s4150 + $0x78] sm:$0xf]
    %v4182 = vld [vmem:[%s4150 + $0x7c] sm:$0xf]
    %v4183 = vunpack.c.l.bf16 %v4151
    %v4184 = vunpack.c.l.bf16 %v4152
    %v4185 = vunpack.c.l.bf16 %v4153
    %v4186 = vunpack.c.l.bf16 %v4154
    %v4187 = vunpack.c.l.bf16 %v4155
    %v4188 = vunpack.c.l.bf16 %v4156
    %v4189 = vunpack.c.l.bf16 %v4157
    %v4190 = vunpack.c.l.bf16 %v4158
    %v4191 = vunpack.c.l.bf16 %v4159
    %v4192 = vunpack.c.l.bf16 %v4160
    %v4193 = vunpack.c.l.bf16 %v4161
    %v4194 = vunpack.c.l.bf16 %v4162
    %v4195 = vunpack.c.l.bf16 %v4163
    %v4196 = vunpack.c.l.bf16 %v4164
    %v4197 = vunpack.c.l.bf16 %v4165
    %v4198 = vunpack.c.l.bf16 %v4166
    %v4199 = vunpack.c.l.bf16 %v4167
    %v4200 = vunpack.c.l.bf16 %v4168
    %v4201 = vunpack.c.l.bf16 %v4169
    %v4202 = vunpack.c.l.bf16 %v4170
    %v4203 = vunpack.c.l.bf16 %v4171
    %v4204 = vunpack.c.l.bf16 %v4172
    %v4205 = vunpack.c.l.bf16 %v4173
    %v4206 = vunpack.c.l.bf16 %v4174
    %v4207 = vunpack.c.l.bf16 %v4175
    %v4208 = vunpack.c.l.bf16 %v4176
    %v4209 = vunpack.c.l.bf16 %v4177
    %v4210 = vunpack.c.l.bf16 %v4178
    %v4211 = vunpack.c.l.bf16 %v4179
    %v4212 = vunpack.c.l.bf16 %v4180
    %v4213 = vunpack.c.l.bf16 %v4181
    %v4214 = vunpack.c.l.bf16 %v4182
    %4215 = vmatprep.subr.mxu0 0.0
    %4216 = vmatpush1.msra.mxu0 %v4199
    %4217 = vmatprep.subr.mxu0 0.0
    %4218 = vmatpush1.msra.mxu0 %v4200
    %4219 = vmatprep.subr.mxu0 0.0
    %4220 = vmatpush1.msra.mxu0 %v4201
    %4221 = vmatprep.subr.mxu0 0.0
    %4222 = vmatpush1.msra.mxu0 %v4202
    %4223 = vmatprep.subr.mxu0 0.0
    %4224 = vmatpush1.msra.mxu0 %v4203
    %4225 = vmatprep.subr.mxu0 0.0
    %4226 = vmatpush1.msra.mxu0 %v4204
    %4227 = vmatprep.subr.mxu0 0.0
    %4228 = vmatpush1.msra.mxu0 %v4205
    %4229 = vmatprep.subr.mxu0 0.0
    %4230 = vmatpush1.msra.mxu0 %v4206
    %4231 = vmatprep.subr.mxu0 0.0
    %4232 = vmatpush1.msra.mxu0 %v4207
    %4233 = vmatprep.subr.mxu0 0.0
    %4234 = vmatpush1.msra.mxu0 %v4208
    %4235 = vmatprep.subr.mxu0 0.0
    %4236 = vmatpush1.msra.mxu0 %v4209
    %4237 = vmatprep.subr.mxu0 0.0
    %4238 = vmatpush1.msra.mxu0 %v4210
    %4239 = vmatprep.subr.mxu0 0.0
    %4240 = vmatpush1.msra.mxu0 %v4211
    %4241 = vmatprep.subr.mxu0 0.0
    %4242 = vmatpush1.msra.mxu0 %v4212
    %4243 = vmatprep.subr.mxu0 0.0
    %4244 = vmatpush1.msra.mxu0 %v4213
    %4245 = vmatprep.subr.mxu0 0.0
    %4246 = vmatpush1.msra.mxu0 %v4214
    %4247 = vmatprep.subr.mxu0 0.0
    %4248 = vmatpush1.msra.mxu0 0.0
    %4249 = vmatprep.subr.mxu0 0.0
    %4250 = vmatpush1.msra.mxu0 0.0
    %4251 = vmatprep.subr.mxu0 0.0
    %4252 = vmatpush1.msra.mxu0 0.0
    %4253 = vmatprep.subr.mxu0 0.0
    %4254 = vmatpush1.msra.mxu0 0.0
    %4255 = vmatprep.subr.mxu0 0.0
    %4256 = vmatpush1.msra.mxu0 0.0
    %4257 = vmatprep.subr.mxu0 0.0
    %4258 = vmatpush1.msra.mxu0 0.0
    %4259 = vmatprep.subr.mxu0 0.0
    %4260 = vmatpush1.msra.mxu0 0.0
    %4261 = vmatprep.subr.mxu0 0.0
    %4262 = vmatpush1.msra.mxu0 0.0
    %4263 = vmatprep.subr.mxu0 0.0
    %4264 = vmatpush1.msra.mxu0 0.0
    %4265 = vmatprep.subr.mxu0 0.0
    %4266 = vmatpush1.msra.mxu0 0.0
    %4267 = vmatprep.subr.mxu0 0.0
    %4268 = vmatpush1.msra.mxu0 0.0
    %4269 = vmatprep.subr.mxu0 0.0
    %4270 = vmatpush1.msra.mxu0 0.0
    %4271 = vmatprep.subr.mxu0 0.0
    %4272 = vmatpush1.msra.mxu0 0.0
    %4273 = vmatprep.subr.mxu0 0.0
    %4274 = vmatpush1.msra.mxu0 0.0
    %4275 = vmatprep.subr.mxu0 0.0
    %4276 = vmatpush1.msra.mxu0 0.0
    %4277 = vmatprep.subr.mxu0 0.0
    %4278 = vmatpush1.msra.mxu0 0.0
    %4279 = vmatprep.mubr.f32.mxu0 0.0
    %4280 = vmatmul.mubr.f32.gmra.mrb[0].mxu0 %v4148
    %v4281 = vpop.f32.mrb[0].mxu0
    %v4282 = vadd.f32 0.0, %v4281
    %v4283 = vpop.f32.mrb[0].mxu0
    %4284 = vmatprep.mubr.f32.mxu0 0.0
    %4285 = vmatmul.mubr.f32.gmra.mrb[0].mxu0 %v4149
    %v4286 = vpop.f32.mrb[0].mxu0
    %v4287 = vadd.f32 0.0, %v4286
    %v4288 = vpop.f32.mrb[0].mxu0
    %4289 = vdwg.mxu0
    %4290 = vmatprep.subr.mxu0 0.0
    %4291 = vmatpush1.msra.mxu0 %v4183
    %4292 = vmatprep.subr.mxu0 0.0
    %4293 = vmatpush1.msra.mxu0 %v4184
    %4294 = vmatprep.subr.mxu0 0.0
    %4295 = vmatpush1.msra.mxu0 %v4185
    %4296 = vmatprep.subr.mxu0 0.0
    %4297 = vmatpush1.msra.mxu0 %v4186
    %4298 = vmatprep.subr.mxu0 0.0
    %4299 = vmatpush1.msra.mxu0 %v4187
    %4300 = vmatprep.subr.mxu0 0.0
    %4301 = vmatpush1.msra.mxu0 %v4188
    %4302 = vmatprep.subr.mxu0 0.0
    %4303 = vmatpush1.msra.mxu0 %v4189
    %4304 = vmatprep.subr.mxu0 0.0
    %4305 = vmatpush1.msra.mxu0 %v4190
    %4306 = vmatprep.subr.mxu0 0.0
    %4307 = vmatpush1.msra.mxu0 %v4191
    %4308 = vmatprep.subr.mxu0 0.0
    %4309 = vmatpush1.msra.mxu0 %v4192
    %4310 = vmatprep.subr.mxu0 0.0
    %4311 = vmatpush1.msra.mxu0 %v4193
    %4312 = vmatprep.subr.mxu0 0.0
    %4313 = vmatpush1.msra.mxu0 %v4194
    %4314 = vmatprep.subr.mxu0 0.0
    %4315 = vmatpush1.msra.mxu0 %v4195
    %4316 = vmatprep.subr.mxu0 0.0
    %4317 = vmatpush1.msra.mxu0 %v4196
    %4318 = vmatprep.subr.mxu0 0.0
    %4319 = vmatpush1.msra.mxu0 %v4197
    %4320 = vmatprep.subr.mxu0 0.0
    %4321 = vmatpush1.msra.mxu0 %v4198
    %4322 = vmatprep.subr.mxu0 0.0
    %4323 = vmatpush1.msra.mxu0 0.0
    %4324 = vmatprep.subr.mxu0 0.0
    %4325 = vmatpush1.msra.mxu0 0.0
    %4326 = vmatprep.subr.mxu0 0.0
    %4327 = vmatpush1.msra.mxu0 0.0
    %4328 = vmatprep.subr.mxu0 0.0
    %4329 = vmatpush1.msra.mxu0 0.0
    %4330 = vmatprep.subr.mxu0 0.0
    %4331 = vmatpush1.msra.mxu0 0.0
    %4332 = vmatprep.subr.mxu0 0.0
    %4333 = vmatpush1.msra.mxu0 0.0
    %4334 = vmatprep.subr.mxu0 0.0
    %4335 = vmatpush1.msra.mxu0 0.0
    %4336 = vmatprep.subr.mxu0 0.0
    %4337 = vmatpush1.msra.mxu0 0.0
    %4338 = vmatprep.subr.mxu0 0.0
    %4339 = vmatpush1.msra.mxu0 0.0
    %4340 = vmatprep.subr.mxu0 0.0
    %4341 = vmatpush1.msra.mxu0 0.0
    %4342 = vmatprep.subr.mxu0 0.0
    %4343 = vmatpush1.msra.mxu0 0.0
    %4344 = vmatprep.subr.mxu0 0.0
    %4345 = vmatpush1.msra.mxu0 0.0
    %4346 = vmatprep.subr.mxu0 0.0
    %4347 = vmatpush1.msra.mxu0 0.0
    %4348 = vmatprep.subr.mxu0 0.0
    %4349 = vmatpush1.msra.mxu0 0.0
    %4350 = vmatprep.subr.mxu0 0.0
    %4351 = vmatpush1.msra.mxu0 0.0
    %4352 = vmatprep.subr.mxu0 0.0
    %4353 = vmatpush1.msra.mxu0 0.0
    %4354 = vmatprep.mubr.f32.mxu0 0.0
    %4355 = vmatmul.mubr.f32.gmra.mrb[0].mxu0 %v3955
    %v4356 = vpop.f32.mrb[0].mxu0
    %v4357 = vadd.f32 %v4282, %v4356
    %v4358 = vpop.f32.mrb[0].mxu0
    %4359 = vmatprep.mubr.f32.mxu0 0.0
    %4360 = vmatmul.mubr.f32.gmra.mrb[0].mxu0 %v3956
    %v4361 = vpop.f32.mrb[0].mxu0
    %v4362 = vadd.f32 %v4287, %v4361
    %v4363 = vpop.f32.mrb[0].mxu0
    %4364 = vdwg.mxu0
    %s4365 = scalar_lea.vmem %s17, 1
    %v4366 = vld [vmem:[%s4365] sm:$0x1]
    %v4368 = vlaneseq
    %v4369 = vshrl.u32 %v4368, 7
    %v4370 = vsub.s32 0, %v4369
    %v4371 = vrot.slane %v4366, %v4370
    %v4373 = vadd.f32 %v4357, %v4371
    %v4374 = vadd.f32 %v4362, %v4371
    %v4375 = vadd.f32 %v2856, %v4373
    %v4376 = vadd.f32 %v2857, %v4374
    %4377 = vadd.xlane.f32.xlu0 %v4375
    %v4378 = vpop.xlane.xlu0 %4377
    %4379 = vadd.xlane.f32.xlu0 %v4376
    %v4380 = vpop.xlane.xlu0 %4379
    %v4381 = vmul.f32 %v4378, %v2819
    %v4382 = vmul.f32 %v4380, %v2819
    %v4383 = vsub.f32 %v4375, %v4381
    %v4384 = vsub.f32 %v4376, %v4382
    %v4385 = vmul.f32 %v4383, %v4383
    %v4386 = vmul.f32 %v4384, %v4384
    %4387 = vadd.xlane.f32.xlu0 %v4385
    %v4388 = vpop.xlane.xlu0 %4387
    %4389 = vadd.xlane.f32.xlu0 %v4386
    %v4390 = vpop.xlane.xlu0 %4389
    %v4391 = vmul.f32 %v4388, %v2819
    %v4392 = vmul.f32 %v4390, %v2819
    %v4393 = vadd.f32 %v4391, 1e-05
    %v4394 = vadd.f32 %v4392, 1e-05
    %v4395 = vrsqrt.pop %v4393
    %v4396 = vrsqrt.pop %v4394
    %v4397 = vmul.f32 %v4383, %v4395
    %v4398 = vmul.f32 %v4384, %v4396
    %v4399 = vmul.f32 %v4397, %v2843
    %v4400 = vmul.f32 %v4398, %v2843
    %v4401 = vadd.f32 %v4399, %v2852
    %v4402 = vadd.f32 %v4400, %v2852
    %v4403 = vmax.f32 %v4401, 0.0
    %v4404 = vmax.f32 %v4402, 0.0
    %v4405 = vld [vmem:[%s20] sm:$0xff]
    %v4406 = vld [vmem:[%s20 + $0x8] sm:$0xff]
    %v4407 = vld [vmem:[%s20 + $0x10] sm:$0xff]
    %v4408 = vld [vmem:[%s20 + $0x18] sm:$0xff]
    %v4409 = vld [vmem:[%s20 + $0x20] sm:$0xff]
    %v4410 = vld [vmem:[%s20 + $0x28] sm:$0xff]
    %v4411 = vld [vmem:[%s20 + $0x30] sm:$0xff]
    %v4412 = vld [vmem:[%s20 + $0x38] sm:$0xff]
    %v4413 = vld [vmem:[%s20 + $0x40] sm:$0xff]
    %v4414 = vld [vmem:[%s20 + $0x48] sm:$0xff]
    %v4415 = vld [vmem:[%s20 + $0x50] sm:$0xff]
    %v4416 = vld [vmem:[%s20 + $0x58] sm:$0xff]
    %v4417 = vld [vmem:[%s20 + $0x60] sm:$0xff]
    %v4418 = vld [vmem:[%s20 + $0x68] sm:$0xff]
    %v4419 = vld [vmem:[%s20 + $0x70] sm:$0xff]
    %v4420 = vld [vmem:[%s20 + $0x78] sm:$0xff]
    %v4421 = vld [vmem:[#allocation12] sm:$0x1]
    %v4423 = vlaneseq
    %v4424 = vshrl.u32 %v4423, 7
    %v4425 = vsub.s32 0, %v4424
    %v4426 = vrot.slane %v4421, %v4425
    %4428 = vmatprep.subr.mxu0 0.0
    %4429 = vmatpush1.msra.mxu0 %v4405
    %4430 = vmatprep.subr.mxu0 0.0
    %4431 = vmatpush1.msra.mxu0 %v4406
    %4432 = vmatprep.subr.mxu0 0.0
    %4433 = vmatpush1.msra.mxu0 %v4407
    %4434 = vmatprep.subr.mxu0 0.0
    %4435 = vmatpush1.msra.mxu0 %v4408
    %4436 = vmatprep.subr.mxu0 0.0
    %4437 = vmatpush1.msra.mxu0 %v4409
    %4438 = vmatprep.subr.mxu0 0.0
    %4439 = vmatpush1.msra.mxu0 %v4410
    %4440 = vmatprep.subr.mxu0 0.0
    %4441 = vmatpush1.msra.mxu0 %v4411
    %4442 = vmatprep.subr.mxu0 0.0
    %4443 = vmatpush1.msra.mxu0 %v4412
    %4444 = vmatprep.subr.mxu0 0.0
    %4445 = vmatpush1.msra.mxu0 %v4413
    %4446 = vmatprep.subr.mxu0 0.0
    %4447 = vmatpush1.msra.mxu0 %v4414
    %4448 = vmatprep.subr.mxu0 0.0
    %4449 = vmatpush1.msra.mxu0 %v4415
    %4450 = vmatprep.subr.mxu0 0.0
    %4451 = vmatpush1.msra.mxu0 %v4416
    %4452 = vmatprep.subr.mxu0 0.0
    %4453 = vmatpush1.msra.mxu0 %v4417
    %4454 = vmatprep.subr.mxu0 0.0
    %4455 = vmatpush1.msra.mxu0 %v4418
    %4456 = vmatprep.subr.mxu0 0.0
    %4457 = vmatpush1.msra.mxu0 %v4419
    %4458 = vmatprep.subr.mxu0 0.0
    %4459 = vmatpush1.msra.mxu0 %v4420
    %4460 = vmatprep.subr.mxu0 0.0
    %4461 = vmatpush1.msra.mxu0 0.0
    %4462 = vmatprep.subr.mxu0 0.0
    %4463 = vmatpush1.msra.mxu0 0.0
    %4464 = vmatprep.subr.mxu0 0.0
    %4465 = vmatpush1.msra.mxu0 0.0
    %4466 = vmatprep.subr.mxu0 0.0
    %4467 = vmatpush1.msra.mxu0 0.0
    %4468 = vmatprep.subr.mxu0 0.0
    %4469 = vmatpush1.msra.mxu0 0.0
    %4470 = vmatprep.subr.mxu0 0.0
    %4471 = vmatpush1.msra.mxu0 0.0
    %4472 = vmatprep.subr.mxu0 0.0
    %4473 = vmatpush1.msra.mxu0 0.0
    %4474 = vmatprep.subr.mxu0 0.0
    %4475 = vmatpush1.msra.mxu0 0.0
    %4476 = vmatprep.subr.mxu0 0.0
    %4477 = vmatpush1.msra.mxu0 0.0
    %4478 = vmatprep.subr.mxu0 0.0
    %4479 = vmatpush1.msra.mxu0 0.0
    %4480 = vmatprep.subr.mxu0 0.0
    %4481 = vmatpush1.msra.mxu0 0.0
    %4482 = vmatprep.subr.mxu0 0.0
    %4483 = vmatpush1.msra.mxu0 0.0
    %4484 = vmatprep.subr.mxu0 0.0
    %4485 = vmatpush1.msra.mxu0 0.0
    %4486 = vmatprep.subr.mxu0 0.0
    %4487 = vmatpush1.msra.mxu0 0.0
    %4488 = vmatprep.subr.mxu0 0.0
    %4489 = vmatpush1.msra.mxu0 0.0
    %4490 = vmatprep.subr.mxu0 0.0
    %4491 = vmatpush1.msra.mxu0 0.0
    %4492 = vmatprep.mubr.f32.mxu0 0.0
    %4493 = vmatmul.mubr.f32.gmra.mrb[0].mxu0 %v4403
    %v4494 = vpop.f32.mrb[0].mxu0
    %v4495 = vadd.f32 %v4426, %v4494
    %v4496 = vpop.f32.mrb[0].mxu0
    %4497 = vmatprep.mubr.f32.mxu0 0.0
    %4498 = vmatmul.mubr.f32.gmra.mrb[0].mxu0 %v4404
    %v4499 = vpop.f32.mrb[0].mxu0
    %v4500 = vadd.f32 %v4426, %v4499
    %v4501 = vpop.f32.mrb[0].mxu0
    %4502 = vdwg.mxu0
    %vm4503 = vcmask 64512
    %4504 = vst.msk [vmem:[%s22] sm:$0xff] %vm4503, %v4495
    %4505 = vst.msk [vmem:[%s22 + $0x8] sm:$0xff] %vm4503, %v4500
    // Predicated region
    $region118: #{deep_gcn_forward.1} parent=1 // pred_check
      _
    $region119: #{deep_gcn_forward.1} parent=1 // pred_check_branch
      %4507 = sbr.rel (0) target = $region121
    $region120: #{deep_gcn_forward.1} parent=1 // pred_region
      _
    $region121: #{deep_gcn_forward.1} parent=1 // pred_fallthru
      _
    // Predicated region
    $region122: #{deep_gcn_forward.1} parent=1 // pred_check
      _
    $region123: #{deep_gcn_forward.1} parent=1 // pred_check_branch
      %4509 = sbr.rel (0) target = $region125
    $region124: #{deep_gcn_forward.1} parent=1 // pred_region
      _
    $region125: #{deep_gcn_forward.1} parent=1 // pred_fallthru
      _
    %4510 = vsyncpa [#allocation3], 1
    %4511 = vsyncpa [#allocation5], 1
    %4512 = vsyncpa [#allocation8], 1
    %4513 = vsyncpa [#allocation11], 1

</llo_original>
